<compile_context>
chip_gen: v6e
topology: v6e:2x2x1
jax: 0.10.0
libtpu: 0.0.40
codegen_flags: <defaults>
</compile_context>

<pallas_src>
import functools
import math

import jax
import jax.numpy as jnp
from jax.experimental import pallas as pl
from jax.experimental.pallas import tpu as pltpu


def _critic_resblock_kernel(x_ref, w1_ref, b1_ref, w2_ref, b2_ref, wr_ref, br_ref,
                            o_ref, pad_ref, hs_ref, *, use_taps):
    _, H, W, Cin = x_ref.shape
    Cout = o_ref.shape[3]
    H2, W2 = H // 2, W // 2
    inv_sqrt2 = 1.0 / math.sqrt(2.0)

    # Keep the 1-px zero border of the conv pad buffer valid.  Written every grid step
    # (4 thin stores); do NOT guard with program_id(0)==0 — with the batch axis marked
    # "parallel" that is not megacore-safe (core 1 never sees grid index 0 on v7x).
    pad_ref[0:1, :, :] = jnp.zeros((1, W + 2, Cin), pad_ref.dtype)
    pad_ref[H + 1:H + 2, :, :] = jnp.zeros((1, W + 2, Cin), pad_ref.dtype)
    pad_ref[:, 0:1, :] = jnp.zeros((H + 2, 1, Cin), pad_ref.dtype)
    pad_ref[:, W + 1:W + 2, :] = jnp.zeros((H + 2, 1, Cin), pad_ref.dtype)

    x = x_ref[0]                                   # (H, W, Cin), compute dtype

    def leaky(v):
        return jnp.where(v >= 0, v, 0.2 * v)

    def conv3x3(src, w_ref, b_ref):
        """3x3 conv, stride 1, zero pad 1, on the MXU.  Returns (H*W, cout) f32."""
        cout = b_ref.shape[-1]
        # Interior of the pad scratch lives in the MXU compute dtype (bf16 by default).
        pad_ref[1:H + 1, 1:W + 1, :] = src.astype(pad_ref.dtype)
        if use_taps:
            # 9 accumulated per-tap matmuls (K = Cin): no (H*W, 9*Cin) im2col buffer,
            # no lane-repacking concat.  Used when Cin alone fills the MXU K dim or the
            # patch buffer would be large.
            acc = jnp.zeros((H * W, cout), jnp.float32)
            for dy in range(3):
                for dx in range(3):
                    t = dy * 3 + dx
                    lhs = pad_ref[dy:dy + H, dx:dx + W, :].reshape(H * W, Cin)
                    acc = acc + jnp.dot(lhs, w_ref[t * Cin:(t + 1) * Cin, :],
                                        preferred_element_type=jnp.float32)
            return acc + b_ref[...]
        # Small-Cin path: one im2col matmul (K = 9*Cin); patches are built directly in
        # the compute dtype so the repack buffer is half the old f32 size.
        patches = jnp.concatenate(
            [pad_ref[dy:dy + H, dx:dx + W, :] for dy in range(3) for dx in range(3)],
            axis=-1)                                             # (H, W, 9*Cin)
        out = jnp.dot(patches.reshape(H * W, 9 * Cin), w_ref[...],
                      preferred_element_type=jnp.float32)
        return out + b_ref[...]

    def blur_downsample(v):
        """Depthwise [1,2,1]x[1,2,1]/16 blur (reflect pad) + 2x2 mean pool, fused as a
        separable [1,3,3,1]/8 stride-2 filter.  v: (H, W, Cout) f32 -> (H2, W2, Cout)."""
        C = v.shape[-1]
        # Vertical pass (leading axis): pure full-width value ops, stride-2 via reshape.
        vp = jnp.concatenate([v[1:2], v, v[H - 2:H - 1]], axis=0)   # (H+2, W, C) reflect
        e = vp[0:H].reshape(H2, 2, W, C)          # e[:,0]=vp[2i],   e[:,1]=vp[2i+1]
        f = vp[2:H + 2].reshape(H2, 2, W, C)      # f[:,0]=vp[2i+2], f[:,1]=vp[2i+3]
        vert = e[:, 0, :, :] + 3.0 * e[:, 1, :, :] + 3.0 * f[:, 0, :, :] + f[:, 1, :, :]
        # Horizontal pass (sublane axis): reflect-pad into the shared scratch, then 4
        # stride-2 sublane reads.
        hs_ref[:, 1:W + 1, :] = vert
        hs_ref[:, 0:1, :] = vert[:, 1:2, :]
        hs_ref[:, W + 1:W + 2, :] = vert[:, W - 2:W - 1, :]
        g0 = hs_ref[:, pl.ds(0, W2, 2), :]
        g1 = hs_ref[:, pl.ds(1, W2, 2), :]
        g2 = hs_ref[:, pl.ds(2, W2, 2), :]
        g3 = hs_ref[:, pl.ds(3, W2, 2), :]
        return (g0 + 3.0 * g1 + 3.0 * g2 + g3) * (1.0 / 64.0)      # (H2, W2, C)

    # ---- conv path: 3x3 -> lrelu -> 3x3 -> lrelu -> blur+pool ----
    y = leaky(conv3x3(x, w1_ref, b1_ref))                          # (H*W, Cin)  f32
    y = leaky(conv3x3(y.reshape(H, W, Cin), w2_ref, b2_ref))       # (H*W, Cout) f32
    conv_out = blur_downsample(y.reshape(H, W, Cout))

    # ---- residual path: 1x1 conv (single matmul) -> blur+pool ----
    # hs_ref is shared with the conv-path blur above; ref effect ordering guarantees the
    # conv-path loads complete before the residual-path stores.
    r = jnp.dot(x.reshape(H * W, Cin), wr_ref[...],
                preferred_element_type=jnp.float32) + br_ref[...]
    res_out = blur_downsample(r.reshape(H, W, Cout))

    o_ref[0] = ((conv_out + res_out) * inv_sqrt2).astype(o_ref.dtype)


def _prep_conv_w(w_oihw, dtype):
    """OIHW torch-style weight -> equalized-lr scaled (kh*kw*ci, co) matmul operand."""
    co, ci, kh, kw = w_oihw.shape
    scale = 1.0 / math.sqrt(ci * kh * kw)
    w = jnp.transpose(w_oihw.astype(jnp.float32) * scale, (2, 3, 1, 0))  # (kh, kw, ci, co)
    return w.reshape(kh * kw * ci, co).astype(dtype)


def _vmem_limit_bytes():
    # ~75% of physical per-core VMEM: leaves headroom for the pipeline's double buffers
    # and Mosaic internal scratch (~48 MiB on v7x, ~96 MiB on v5e/v6e).
    try:
        cap = int(pltpu.get_tpu_info().vmem_capacity_bytes)
    except Exception:
        cap = 64 * 1024 * 1024
    return max(32 * 1024 * 1024, min(100 * 1024 * 1024, (cap * 3) // 4))


def critic_residual_block_pallas_nhwc(x_nhwc, params, compute_dtype=jnp.bfloat16,
                                      out_dtype=jnp.float32):
    N, H, W, Cin = x_nhwc.shape
    Cout = params["w2"].shape[0]
    H2, W2 = H // 2, W // 2
    assert H % 2 == 0 and W % 2 == 0 and H >= 2 and W >= 2, (
        "CriticResidualBlock kernel requires even H and W (>= 2)")

    x_in = x_nhwc.astype(compute_dtype)
    w1 = _prep_conv_w(params["w1"], compute_dtype)           # (9*Cin, Cin)
    b1 = params["b1"].reshape(1, Cin).astype(jnp.float32)
    w2 = _prep_conv_w(params["w2"], compute_dtype)           # (9*Cin, Cout)
    b2 = params["b2"].reshape(1, Cout).astype(jnp.float32)
    wr = _prep_conv_w(params["wr"], compute_dtype)           # (Cin, Cout)
    br = params["br"].reshape(1, Cout).astype(jnp.float32)

    # Per-tap accumulation vs. single im2col matmul: taps whenever Cin already fills the
    # MXU K dim, or whenever the im2col patch buffer would be large.
    patch_bytes = H * W * 9 * Cin * jnp.dtype(compute_dtype).itemsize
    use_taps = (Cin >= 128) or (patch_bytes > 8 * 1024 * 1024)

    kernel = functools.partial(_critic_resblock_kernel, use_taps=use_taps)

    return pl.pallas_call(
        kernel,
        out_shape=jax.ShapeDtypeStruct((N, H2, W2, Cout), out_dtype),
        grid_spec=pltpu.PrefetchScalarGridSpec(
            num_scalar_prefetch=0,
            grid=(N,),
            in_specs=[
                pl.BlockSpec((1, H, W, Cin), lambda n: (n, 0, 0, 0)),
                pl.BlockSpec((9 * Cin, Cin), lambda n: (0, 0)),
                pl.BlockSpec((1, Cin), lambda n: (0, 0)),
                pl.BlockSpec((9 * Cin, Cout), lambda n: (0, 0)),
                pl.BlockSpec((1, Cout), lambda n: (0, 0)),
                pl.BlockSpec((Cin, Cout), lambda n: (0, 0)),
                pl.BlockSpec((1, Cout), lambda n: (0, 0)),
            ],
            out_specs=pl.BlockSpec((1, H2, W2, Cout), lambda n: (n, 0, 0, 0)),
            scratch_shapes=[
                pltpu.VMEM((H + 2, W + 2, Cin), compute_dtype),   # zero-pad conv scratch
                pltpu.VMEM((H2, W + 2, Cout), jnp.float32),       # shared blur horiz pad
            ],
        ),
        compiler_params=pltpu.CompilerParams(
            dimension_semantics=("parallel",),
            vmem_limit_bytes=_vmem_limit_bytes(),
        ),
    )(x_in, w1, b1, w2, b2, wr, br)


def critic_residual_block_pallas(x_nchw, params, compute_dtype=jnp.bfloat16,
                                 out_dtype=jnp.float32):
    # NOTE: the two NCHW<->NHWC transposes are pure HBM layout plumbing around a
    # memory-bound kernel; keep the model in NHWC and call the _nhwc entry point
    # directly to avoid them.
    x_nhwc = jnp.transpose(x_nchw, (0, 2, 3, 1))
    out_nhwc = critic_residual_block_pallas_nhwc(x_nhwc, params, compute_dtype, out_dtype)
    return jnp.transpose(out_nhwc, (0, 3, 1, 2))               # back to NCHW


# ---------------- pure-JAX reference (same semantics + same dtype rounding) -------------
def critic_residual_block_ref(x, params, compute_dtype=jnp.float32):
    f32 = jnp.float32

    def rnd(a):
        return a.astype(compute_dtype).astype(f32)

    def eq_conv(x, w, b, pad):
        co, ci, kh, kw = w.shape
        scale = 1.0 / math.sqrt(ci * kh * kw)
        y = jax.lax.conv_general_dilated(
            x, rnd(w.astype(f32) * scale), window_strides=(1, 1),
            padding=[(pad, pad), (pad, pad)],
            dimension_numbers=("NCHW", "OIHW", "NCHW"),
            precision=jax.lax.Precision.HIGHEST)
        return y + b[None, :, None, None]

    def blur_downsample(x):
        n, c, h, w = x.shape
        xp = jnp.pad(x, ((0, 0), (0, 0), (1, 1), (1, 1)), mode="reflect")
        k1 = jnp.array([1.0, 2.0, 1.0], f32)
        k2 = (k1[:, None] * k1[None, :]) / 16.0
        wk = jnp.tile(k2[None, None], (c, 1, 1, 1))
        y = jax.lax.conv_general_dilated(
            xp, wk, (1, 1), "VALID", feature_group_count=c,
            dimension_numbers=("NCHW", "OIHW", "NCHW"),
            precision=jax.lax.Precision.HIGHEST)
        return y.reshape(n, c, h // 2, 2, w // 2, 2).mean(axis=(3, 5))

    def leaky(v):
        return jnp.where(v >= 0, v, 0.2 * v)

    xr = rnd(x.astype(f32))
    y = leaky(eq_conv(xr, params["w1"], params["b1"], 1))
    y = rnd(y)                      # kernel feeds conv2 compute-dtype-rounded activations
    y = leaky(eq_conv(y, params["w2"], params["b2"], 1))
    y = blur_downsample(y)
    r = blur_downsample(eq_conv(xr, params["wr"], params["br"], 0))
    return (y + r) * (1.0 / math.sqrt(2.0))


def init_params(key, cin, cout):
    ks = jax.random.split(key, 6)
    return dict(
        w1=jax.random.normal(ks[0], (cin, cin, 3, 3), jnp.float32),
        b1=0.1 * jax.random.normal(ks[1], (cin,), jnp.float32),
        w2=jax.random.normal(ks[2], (cout, cin, 3, 3), jnp.float32),
        b2=0.1 * jax.random.normal(ks[3], (cout,), jnp.float32),
        wr=jax.random.normal(ks[4], (cout, cin, 1, 1), jnp.float32),
        br=0.1 * jax.random.normal(ks[5], (cout,), jnp.float32),
    )


if __name__ == "__main__":
    key = jax.random.PRNGKey(0)

    def run_case(case_key, N, Cin, Cout, H, W, tol):
        kx, kp = jax.random.split(case_key)
        x = jax.random.normal(kx, (N, Cin, H, W), jnp.float32)
        params = init_params(kp, Cin, Cout)
        out = jax.block_until_ready(
            critic_residual_block_pallas(x, params, compute_dtype=jnp.bfloat16))
        assert out.shape == (N, Cout, H // 2, W // 2), out.shape
        ref = critic_residual_block_ref(x, params, compute_dtype=jnp.bfloat16)
        err = float(jnp.max(jnp.abs(out - ref)))
        if not bool(jnp.allclose(out, ref, atol=tol, rtol=tol)):
            raise AssertionError(
                f"mismatch (N={N},Cin={Cin},Cout={Cout},H={H},W={W}): max abs err={err}")

    k1, k2 = jax.random.split(key)
    # Small-channel config -> exercises the single im2col-matmul path.
    run_case(k1, N=2, Cin=4, Cout=8, H=16, W=16, tol=2e-3)
    # Wide-channel config -> exercises the 9-tap accumulated-matmul path (Cin >= 128).
    run_case(k2, N=1, Cin=128, Cout=128, H=16, W=16, tol=3e-3)

    print("KERNEL_OK")
</pallas_src>

<mosaic_0001>
module attributes {stable_mosaic.version = 11 : i64} {
  func.func @_critic_resblock_kernel(%arg0: i32, %arg1: memref<1x16x16x4xbf16, #tpu.memory_space<vmem>>, %arg2: memref<36x4xbf16, #tpu.memory_space<vmem>>, %arg3: memref<1x4xf32, #tpu.memory_space<vmem>>, %arg4: memref<36x8xbf16, #tpu.memory_space<vmem>>, %arg5: memref<1x8xf32, #tpu.memory_space<vmem>>, %arg6: memref<4x8xbf16, #tpu.memory_space<vmem>>, %arg7: memref<1x8xf32, #tpu.memory_space<vmem>>, %arg8: memref<1x8x8x8xf32, #tpu.memory_space<vmem>>, %arg9: memref<18x18x4xbf16, #tpu.memory_space<vmem>>, %arg10: memref<8x18x8xf32, #tpu.memory_space<vmem>>) attributes {dimension_semantics = [#tpu.dimension_semantics<parallel>], iteration_bounds = array<i64: 2>, scalar_prefetch = 0 : i64, scratch_operands = 2 : i64, tpu.core_type = #tpu.core_type<tc>, window_params = [{transform_indices = @transform_0, window_bounds = array<i64: 1, 16, 16, 4>}, {pipeline_mode = #tpu.pipeline_mode<synchronous>, transform_indices = @transform_1, window_bounds = array<i64: 36, 4>}, {pipeline_mode = #tpu.pipeline_mode<synchronous>, transform_indices = @transform_2, window_bounds = array<i64: 1, 4>}, {pipeline_mode = #tpu.pipeline_mode<synchronous>, transform_indices = @transform_3, window_bounds = array<i64: 36, 8>}, {pipeline_mode = #tpu.pipeline_mode<synchronous>, transform_indices = @transform_4, window_bounds = array<i64: 1, 8>}, {pipeline_mode = #tpu.pipeline_mode<synchronous>, transform_indices = @transform_5, window_bounds = array<i64: 4, 8>}, {pipeline_mode = #tpu.pipeline_mode<synchronous>, transform_indices = @transform_6, window_bounds = array<i64: 1, 8>}, {transform_indices = @transform_7, window_bounds = array<i64: 1, 8, 8, 8>}]} {
    %cst = arith.constant 0.000000e+00 : bf16
    %0 = vector.broadcast %cst : bf16 to vector<1x18x4xbf16>
    %c0 = arith.constant 0 : index
    %c0_0 = arith.constant 0 : index
    %c0_1 = arith.constant 0 : index
    %1 = vector.load %arg9[%c0, %c0_0, %c0_1] : memref<18x18x4xbf16, #tpu.memory_space<vmem>>, vector<1x18x4xbf16>
    tpu.vector_store %arg9[%c0, %c0_0, %c0_1], %0 {strides = array<i32>} : memref<18x18x4xbf16, #tpu.memory_space<vmem>>, vector<1x18x4xbf16>,
    %cst_2 = arith.constant 0.000000e+00 : bf16
    %2 = vector.broadcast %cst_2 : bf16 to vector<1x18x4xbf16>
    %c17 = arith.constant 17 : index
    %c0_3 = arith.constant 0 : index
    %c0_4 = arith.constant 0 : index
    %3 = vector.load %arg9[%c17, %c0_3, %c0_4] : memref<18x18x4xbf16, #tpu.memory_space<vmem>>, vector<1x18x4xbf16>
    tpu.vector_store %arg9[%c17, %c0_3, %c0_4], %2 {strides = array<i32>} : memref<18x18x4xbf16, #tpu.memory_space<vmem>>, vector<1x18x4xbf16>,
    %cst_5 = arith.constant 0.000000e+00 : bf16
    %4 = vector.broadcast %cst_5 : bf16 to vector<18x1x4xbf16>
    %c0_6 = arith.constant 0 : index
    %c0_7 = arith.constant 0 : index
    %c0_8 = arith.constant 0 : index
    %5 = vector.load %arg9[%c0_6, %c0_7, %c0_8] : memref<18x18x4xbf16, #tpu.memory_space<vmem>>, vector<18x1x4xbf16>
    tpu.vector_store %arg9[%c0_6, %c0_7, %c0_8], %4 {strides = array<i32>} : memref<18x18x4xbf16, #tpu.memory_space<vmem>>, vector<18x1x4xbf16>,
    %cst_9 = arith.constant 0.000000e+00 : bf16
    %6 = vector.broadcast %cst_9 : bf16 to vector<18x1x4xbf16>
    %c0_10 = arith.constant 0 : index
    %c17_11 = arith.constant 17 : index
    %c0_12 = arith.constant 0 : index
    %7 = vector.load %arg9[%c0_10, %c17_11, %c0_12] : memref<18x18x4xbf16, #tpu.memory_space<vmem>>, vector<18x1x4xbf16>
    tpu.vector_store %arg9[%c0_10, %c17_11, %c0_12], %6 {strides = array<i32>} : memref<18x18x4xbf16, #tpu.memory_space<vmem>>, vector<18x1x4xbf16>,
    %c0_13 = arith.constant 0 : index
    %c0_14 = arith.constant 0 : index
    %c0_15 = arith.constant 0 : index
    %c0_16 = arith.constant 0 : index
    %8 = vector.load %arg1[%c0_13, %c0_14, %c0_15, %c0_16] : memref<1x16x16x4xbf16, #tpu.memory_space<vmem>>, vector<1x16x16x4xbf16>
    %9 = vector.shape_cast %8 : vector<1x16x16x4xbf16> to vector<16x16x4xbf16>
    %c1 = arith.constant 1 : index
    %c1_17 = arith.constant 1 : index
    %c0_18 = arith.constant 0 : index
    %10 = vector.load %arg9[%c1, %c1_17, %c0_18] : memref<18x18x4xbf16, #tpu.memory_space<vmem>>, vector<16x16x4xbf16>
    tpu.vector_store %arg9[%c1, %c1_17, %c0_18], %9 {strides = array<i32>} : memref<18x18x4xbf16, #tpu.memory_space<vmem>>, vector<16x16x4xbf16>,
    %c0_19 = arith.constant 0 : index
    %c0_20 = arith.constant 0 : index
    %c0_21 = arith.constant 0 : index
    %11 = vector.load %arg9[%c0_19, %c0_20, %c0_21] : memref<18x18x4xbf16, #tpu.memory_space<vmem>>, vector<16x16x4xbf16>
    %c0_22 = arith.constant 0 : index
    %c1_23 = arith.constant 1 : index
    %c0_24 = arith.constant 0 : index
    %12 = vector.load %arg9[%c0_22, %c1_23, %c0_24] : memref<18x18x4xbf16, #tpu.memory_space<vmem>>, vector<16x16x4xbf16>
    %c0_25 = arith.constant 0 : index
    %c2 = arith.constant 2 : index
    %c0_26 = arith.constant 0 : index
    %13 = vector.load %arg9[%c0_25, %c2, %c0_26] : memref<18x18x4xbf16, #tpu.memory_space<vmem>>, vector<16x16x4xbf16>
    %c1_27 = arith.constant 1 : index
    %c0_28 = arith.constant 0 : index
    %c0_29 = arith.constant 0 : index
    %14 = vector.load %arg9[%c1_27, %c0_28, %c0_29] : memref<18x18x4xbf16, #tpu.memory_space<vmem>>, vector<16x16x4xbf16>
    %c1_30 = arith.constant 1 : index
    %c1_31 = arith.constant 1 : index
    %c0_32 = arith.constant 0 : index
    %15 = vector.load %arg9[%c1_30, %c1_31, %c0_32] : memref<18x18x4xbf16, #tpu.memory_space<vmem>>, vector<16x16x4xbf16>
    %c1_33 = arith.constant 1 : index
    %c2_34 = arith.constant 2 : index
    %c0_35 = arith.constant 0 : index
    %16 = vector.load %arg9[%c1_33, %c2_34, %c0_35] : memref<18x18x4xbf16, #tpu.memory_space<vmem>>, vector<16x16x4xbf16>
    %c2_36 = arith.constant 2 : index
    %c0_37 = arith.constant 0 : index
    %c0_38 = arith.constant 0 : index
    %17 = vector.load %arg9[%c2_36, %c0_37, %c0_38] : memref<18x18x4xbf16, #tpu.memory_space<vmem>>, vector<16x16x4xbf16>
    %c2_39 = arith.constant 2 : index
    %c1_40 = arith.constant 1 : index
    %c0_41 = arith.constant 0 : index
    %18 = vector.load %arg9[%c2_39, %c1_40, %c0_41] : memref<18x18x4xbf16, #tpu.memory_space<vmem>>, vector<16x16x4xbf16>
    %c2_42 = arith.constant 2 : index
    %c2_43 = arith.constant 2 : index
    %c0_44 = arith.constant 0 : index
    %19 = vector.load %arg9[%c2_42, %c2_43, %c0_44] : memref<18x18x4xbf16, #tpu.memory_space<vmem>>, vector<16x16x4xbf16>
    %20 = tpu.concatenate %11, %12, %13, %14, %15, %16, %17, %18, %19 in 2 : vector<16x16x4xbf16>, vector<16x16x4xbf16>, vector<16x16x4xbf16>, vector<16x16x4xbf16>, vector<16x16x4xbf16>, vector<16x16x4xbf16>, vector<16x16x4xbf16>, vector<16x16x4xbf16>, vector<16x16x4xbf16> -> vector<16x16x36xbf16>
    %21 = vector.shape_cast %20 : vector<16x16x36xbf16> to vector<256x36xbf16>
    %c0_45 = arith.constant 0 : index
    %c0_46 = arith.constant 0 : index
    %22 = vector.load %arg2[%c0_45, %c0_46] : memref<36x4xbf16, #tpu.memory_space<vmem>>, vector<36x4xbf16>
    %cst_47 = arith.constant dense<0.000000e+00> : vector<256x4xf32>
    %23 = tpu.matmul %21, %22, %cst_47 {dimension_numbers = #tpu.dot_dimension_numbers<[1], [0], [0], [1], [0, 0, 1, 1], [], []>} : vector<256x36xbf16>, vector<36x4xbf16>, vector<256x4xf32> -> vector<256x4xf32>
    %c0_48 = arith.constant 0 : index
    %c0_49 = arith.constant 0 : index
    %24 = vector.load %arg3[%c0_48, %c0_49] : memref<1x4xf32, #tpu.memory_space<vmem>>, vector<1x4xf32>
    %25 = vector.broadcast %24 : vector<1x4xf32> to vector<256x4xf32>
    %26 = arith.addf %23, %25 : vector<256x4xf32>
    %cst_50 = arith.constant 0.000000e+00 : f32
    %27 = vector.broadcast %cst_50 : f32 to vector<256x4xf32>
    %28 = arith.cmpf oge, %26, %27 : vector<256x4xf32>
    %cst_51 = arith.constant 2.000000e-01 : f32
    %29 = vector.broadcast %cst_51 : f32 to vector<256x4xf32>
    %30 = arith.mulf %29, %26 : vector<256x4xf32>
    %31 = arith.select %28, %26, %30 : vector<256x4xi1>, vector<256x4xf32>
    %32 = vector.shape_cast %31 : vector<256x4xf32> to vector<16x16x4xf32>
    %33 = arith.truncf %32 : vector<16x16x4xf32> to vector<16x16x4xbf16>
    %c1_52 = arith.constant 1 : index
    %c1_53 = arith.constant 1 : index
    %c0_54 = arith.constant 0 : index
    %34 = vector.load %arg9[%c1_52, %c1_53, %c0_54] : memref<18x18x4xbf16, #tpu.memory_space<vmem>>, vector<16x16x4xbf16>
    tpu.vector_store %arg9[%c1_52, %c1_53, %c0_54], %33 {strides = array<i32>} : memref<18x18x4xbf16, #tpu.memory_space<vmem>>, vector<16x16x4xbf16>,
    %c0_55 = arith.constant 0 : index
    %c0_56 = arith.constant 0 : index
    %c0_57 = arith.constant 0 : index
    %35 = vector.load %arg9[%c0_55, %c0_56, %c0_57] : memref<18x18x4xbf16, #tpu.memory_space<vmem>>, vector<16x16x4xbf16>
    %c0_58 = arith.constant 0 : index
    %c1_59 = arith.constant 1 : index
    %c0_60 = arith.constant 0 : index
    %36 = vector.load %arg9[%c0_58, %c1_59, %c0_60] : memref<18x18x4xbf16, #tpu.memory_space<vmem>>, vector<16x16x4xbf16>
    %c0_61 = arith.constant 0 : index
    %c2_62 = arith.constant 2 : index
    %c0_63 = arith.constant 0 : index
    %37 = vector.load %arg9[%c0_61, %c2_62, %c0_63] : memref<18x18x4xbf16, #tpu.memory_space<vmem>>, vector<16x16x4xbf16>
    %c1_64 = arith.constant 1 : index
    %c0_65 = arith.constant 0 : index
    %c0_66 = arith.constant 0 : index
    %38 = vector.load %arg9[%c1_64, %c0_65, %c0_66] : memref<18x18x4xbf16, #tpu.memory_space<vmem>>, vector<16x16x4xbf16>
    %c1_67 = arith.constant 1 : index
    %c1_68 = arith.constant 1 : index
    %c0_69 = arith.constant 0 : index
    %39 = vector.load %arg9[%c1_67, %c1_68, %c0_69] : memref<18x18x4xbf16, #tpu.memory_space<vmem>>, vector<16x16x4xbf16>
    %c1_70 = arith.constant 1 : index
    %c2_71 = arith.constant 2 : index
    %c0_72 = arith.constant 0 : index
    %40 = vector.load %arg9[%c1_70, %c2_71, %c0_72] : memref<18x18x4xbf16, #tpu.memory_space<vmem>>, vector<16x16x4xbf16>
    %c2_73 = arith.constant 2 : index
    %c0_74 = arith.constant 0 : index
    %c0_75 = arith.constant 0 : index
    %41 = vector.load %arg9[%c2_73, %c0_74, %c0_75] : memref<18x18x4xbf16, #tpu.memory_space<vmem>>, vector<16x16x4xbf16>
    %c2_76 = arith.constant 2 : index
    %c1_77 = arith.constant 1 : index
    %c0_78 = arith.constant 0 : index
    %42 = vector.load %arg9[%c2_76, %c1_77, %c0_78] : memref<18x18x4xbf16, #tpu.memory_space<vmem>>, vector<16x16x4xbf16>
    %c2_79 = arith.constant 2 : index
    %c2_80 = arith.constant 2 : index
    %c0_81 = arith.constant 0 : index
    %43 = vector.load %arg9[%c2_79, %c2_80, %c0_81] : memref<18x18x4xbf16, #tpu.memory_space<vmem>>, vector<16x16x4xbf16>
    %44 = tpu.concatenate %35, %36, %37, %38, %39, %40, %41, %42, %43 in 2 : vector<16x16x4xbf16>, vector<16x16x4xbf16>, vector<16x16x4xbf16>, vector<16x16x4xbf16>, vector<16x16x4xbf16>, vector<16x16x4xbf16>, vector<16x16x4xbf16>, vector<16x16x4xbf16>, vector<16x16x4xbf16> -> vector<16x16x36xbf16>
    %45 = vector.shape_cast %44 : vector<16x16x36xbf16> to vector<256x36xbf16>
    %c0_82 = arith.constant 0 : index
    %c0_83 = arith.constant 0 : index
    %46 = vector.load %arg4[%c0_82, %c0_83] : memref<36x8xbf16, #tpu.memory_space<vmem>>, vector<36x8xbf16>
    %cst_84 = arith.constant dense<0.000000e+00> : vector<256x8xf32>
    %47 = tpu.matmul %45, %46, %cst_84 {dimension_numbers = #tpu.dot_dimension_numbers<[1], [0], [0], [1], [0, 0, 1, 1], [], []>} : vector<256x36xbf16>, vector<36x8xbf16>, vector<256x8xf32> -> vector<256x8xf32>
    %c0_85 = arith.constant 0 : index
    %c0_86 = arith.constant 0 : index
    %48 = vector.load %arg5[%c0_85, %c0_86] : memref<1x8xf32, #tpu.memory_space<vmem>>, vector<1x8xf32>
    %49 = vector.broadcast %48 : vector<1x8xf32> to vector<256x8xf32>
    %50 = arith.addf %47, %49 : vector<256x8xf32>
    %cst_87 = arith.constant 0.000000e+00 : f32
    %51 = vector.broadcast %cst_87 : f32 to vector<256x8xf32>
    %52 = arith.cmpf oge, %50, %51 : vector<256x8xf32>
    %cst_88 = arith.constant 2.000000e-01 : f32
    %53 = vector.broadcast %cst_88 : f32 to vector<256x8xf32>
    %54 = arith.mulf %53, %50 : vector<256x8xf32>
    %55 = arith.select %52, %50, %54 : vector<256x8xi1>, vector<256x8xf32>
    %56 = vector.shape_cast %55 : vector<256x8xf32> to vector<16x16x8xf32>
    %57 = vector.extract_strided_slice %56 {offsets = [1, 0, 0], sizes = [1, 16, 8], strides = [1, 1, 1]} : vector<16x16x8xf32> to vector<1x16x8xf32>
    %58 = vector.extract_strided_slice %56 {offsets = [14, 0, 0], sizes = [1, 16, 8], strides = [1, 1, 1]} : vector<16x16x8xf32> to vector<1x16x8xf32>
    %59 = tpu.concatenate %57, %56, %58 in 0 : vector<1x16x8xf32>, vector<16x16x8xf32>, vector<1x16x8xf32> -> vector<18x16x8xf32>
    %60 = vector.extract_strided_slice %59 {offsets = [0, 0, 0], sizes = [16, 16, 8], strides = [1, 1, 1]} : vector<18x16x8xf32> to vector<16x16x8xf32>
    %61 = vector.shape_cast %60 : vector<16x16x8xf32> to vector<8x2x16x8xf32>
    %62 = vector.extract_strided_slice %59 {offsets = [2, 0, 0], sizes = [16, 16, 8], strides = [1, 1, 1]} : vector<18x16x8xf32> to vector<16x16x8xf32>
    %63 = vector.shape_cast %62 : vector<16x16x8xf32> to vector<8x2x16x8xf32>
    %64 = vector.extract_strided_slice %61 {offsets = [0, 0, 0, 0], sizes = [8, 1, 16, 8], strides = [1, 1, 1, 1]} : vector<8x2x16x8xf32> to vector<8x1x16x8xf32>
    %65 = vector.shape_cast %64 : vector<8x1x16x8xf32> to vector<8x16x8xf32>
    %66 = vector.extract_strided_slice %61 {offsets = [0, 1, 0, 0], sizes = [8, 1, 16, 8], strides = [1, 1, 1, 1]} : vector<8x2x16x8xf32> to vector<8x1x16x8xf32>
    %67 = vector.shape_cast %66 : vector<8x1x16x8xf32> to vector<8x16x8xf32>
    %cst_89 = arith.constant 3.000000e+00 : f32
    %68 = vector.broadcast %cst_89 : f32 to vector<8x16x8xf32>
    %69 = arith.mulf %68, %67 : vector<8x16x8xf32>
    %70 = arith.addf %65, %69 : vector<8x16x8xf32>
    %71 = vector.extract_strided_slice %63 {offsets = [0, 0, 0, 0], sizes = [8, 1, 16, 8], strides = [1, 1, 1, 1]} : vector<8x2x16x8xf32> to vector<8x1x16x8xf32>
    %72 = vector.shape_cast %71 : vector<8x1x16x8xf32> to vector<8x16x8xf32>
    %cst_90 = arith.constant 3.000000e+00 : f32
    %73 = vector.broadcast %cst_90 : f32 to vector<8x16x8xf32>
    %74 = arith.mulf %73, %72 : vector<8x16x8xf32>
    %75 = arith.addf %70, %74 : vector<8x16x8xf32>
    %76 = vector.extract_strided_slice %63 {offsets = [0, 1, 0, 0], sizes = [8, 1, 16, 8], strides = [1, 1, 1, 1]} : vector<8x2x16x8xf32> to vector<8x1x16x8xf32>
    %77 = vector.shape_cast %76 : vector<8x1x16x8xf32> to vector<8x16x8xf32>
    %78 = arith.addf %75, %77 : vector<8x16x8xf32>
    %c0_91 = arith.constant 0 : index
    %c1_92 = arith.constant 1 : index
    %c0_93 = arith.constant 0 : index
    %79 = vector.load %arg10[%c0_91, %c1_92, %c0_93] : memref<8x18x8xf32, #tpu.memory_space<vmem>>, vector<8x16x8xf32>
    tpu.vector_store %arg10[%c0_91, %c1_92, %c0_93], %78 {strides = array<i32>} : memref<8x18x8xf32, #tpu.memory_space<vmem>>, vector<8x16x8xf32>,
    %80 = vector.extract_strided_slice %78 {offsets = [0, 1, 0], sizes = [8, 1, 8], strides = [1, 1, 1]} : vector<8x16x8xf32> to vector<8x1x8xf32>
    %c0_94 = arith.constant 0 : index
    %c0_95 = arith.constant 0 : index
    %c0_96 = arith.constant 0 : index
    %81 = vector.load %arg10[%c0_94, %c0_95, %c0_96] : memref<8x18x8xf32, #tpu.memory_space<vmem>>, vector<8x1x8xf32>
    tpu.vector_store %arg10[%c0_94, %c0_95, %c0_96], %80 {strides = array<i32>} : memref<8x18x8xf32, #tpu.memory_space<vmem>>, vector<8x1x8xf32>,
    %82 = vector.extract_strided_slice %78 {offsets = [0, 14, 0], sizes = [8, 1, 8], strides = [1, 1, 1]} : vector<8x16x8xf32> to vector<8x1x8xf32>
    %c0_97 = arith.constant 0 : index
    %c17_98 = arith.constant 17 : index
    %c0_99 = arith.constant 0 : index
    %83 = vector.load %arg10[%c0_97, %c17_98, %c0_99] : memref<8x18x8xf32, #tpu.memory_space<vmem>>, vector<8x1x8xf32>
    tpu.vector_store %arg10[%c0_97, %c17_98, %c0_99], %82 {strides = array<i32>} : memref<8x18x8xf32, #tpu.memory_space<vmem>>, vector<8x1x8xf32>,
    %c0_100 = arith.constant 0 : index
    %c0_101 = arith.constant 0 : index
    %c0_102 = arith.constant 0 : index
    %84 = tpu.strided_load %arg10[%c0_100, %c0_101, %c0_102] {strides = array<i32: 1, 2, 1>} : memref<8x18x8xf32, #tpu.memory_space<vmem>>, vector<8x8x8xf32>
    %c0_103 = arith.constant 0 : index
    %c1_104 = arith.constant 1 : index
    %c0_105 = arith.constant 0 : index
    %85 = tpu.strided_load %arg10[%c0_103, %c1_104, %c0_105] {strides = array<i32: 1, 2, 1>} : memref<8x18x8xf32, #tpu.memory_space<vmem>>, vector<8x8x8xf32>
    %c0_106 = arith.constant 0 : index
    %c2_107 = arith.constant 2 : index
    %c0_108 = arith.constant 0 : index
    %86 = tpu.strided_load %arg10[%c0_106, %c2_107, %c0_108] {strides = array<i32: 1, 2, 1>} : memref<8x18x8xf32, #tpu.memory_space<vmem>>, vector<8x8x8xf32>
    %c0_109 = arith.constant 0 : index
    %c3 = arith.constant 3 : index
    %c0_110 = arith.constant 0 : index
    %87 = tpu.strided_load %arg10[%c0_109, %c3, %c0_110] {strides = array<i32: 1, 2, 1>} : memref<8x18x8xf32, #tpu.memory_space<vmem>>, vector<8x8x8xf32>
    %cst_111 = arith.constant 3.000000e+00 : f32
    %88 = vector.broadcast %cst_111 : f32 to vector<8x8x8xf32>
    %89 = arith.mulf %88, %85 : vector<8x8x8xf32>
    %90 = arith.addf %84, %89 : vector<8x8x8xf32>
    %cst_112 = arith.constant 3.000000e+00 : f32
    %91 = vector.broadcast %cst_112 : f32 to vector<8x8x8xf32>
    %92 = arith.mulf %91, %86 : vector<8x8x8xf32>
    %93 = arith.addf %90, %92 : vector<8x8x8xf32>
    %94 = arith.addf %93, %87 : vector<8x8x8xf32>
    %cst_113 = arith.constant 1.562500e-02 : f32
    %95 = vector.broadcast %cst_113 : f32 to vector<8x8x8xf32>
    %96 = arith.mulf %94, %95 : vector<8x8x8xf32>
    %97 = vector.shape_cast %9 : vector<16x16x4xbf16> to vector<256x4xbf16>
    %c0_114 = arith.constant 0 : index
    %c0_115 = arith.constant 0 : index
    %98 = vector.load %arg6[%c0_114, %c0_115] : memref<4x8xbf16, #tpu.memory_space<vmem>>, vector<4x8xbf16>
    %cst_116 = arith.constant dense<0.000000e+00> : vector<256x8xf32>
    %99 = tpu.matmul %97, %98, %cst_116 {dimension_numbers = #tpu.dot_dimension_numbers<[1], [0], [0], [1], [0, 0, 1, 1], [], []>} : vector<256x4xbf16>, vector<4x8xbf16>, vector<256x8xf32> -> vector<256x8xf32>
    %c0_117 = arith.constant 0 : index
    %c0_118 = arith.constant 0 : index
    %100 = vector.load %arg7[%c0_117, %c0_118] : memref<1x8xf32, #tpu.memory_space<vmem>>, vector<1x8xf32>
    %101 = vector.broadcast %100 : vector<1x8xf32> to vector<256x8xf32>
    %102 = arith.addf %99, %101 : vector<256x8xf32>
    %103 = vector.shape_cast %102 : vector<256x8xf32> to vector<16x16x8xf32>
    %104 = vector.extract_strided_slice %103 {offsets = [1, 0, 0], sizes = [1, 16, 8], strides = [1, 1, 1]} : vector<16x16x8xf32> to vector<1x16x8xf32>
    %105 = vector.extract_strided_slice %103 {offsets = [14, 0, 0], sizes = [1, 16, 8], strides = [1, 1, 1]} : vector<16x16x8xf32> to vector<1x16x8xf32>
    %106 = tpu.concatenate %104, %103, %105 in 0 : vector<1x16x8xf32>, vector<16x16x8xf32>, vector<1x16x8xf32> -> vector<18x16x8xf32>
    %107 = vector.extract_strided_slice %106 {offsets = [0, 0, 0], sizes = [16, 16, 8], strides = [1, 1, 1]} : vector<18x16x8xf32> to vector<16x16x8xf32>
    %108 = vector.shape_cast %107 : vector<16x16x8xf32> to vector<8x2x16x8xf32>
    %109 = vector.extract_strided_slice %106 {offsets = [2, 0, 0], sizes = [16, 16, 8], strides = [1, 1, 1]} : vector<18x16x8xf32> to vector<16x16x8xf32>
    %110 = vector.shape_cast %109 : vector<16x16x8xf32> to vector<8x2x16x8xf32>
    %111 = vector.extract_strided_slice %108 {offsets = [0, 0, 0, 0], sizes = [8, 1, 16, 8], strides = [1, 1, 1, 1]} : vector<8x2x16x8xf32> to vector<8x1x16x8xf32>
    %112 = vector.shape_cast %111 : vector<8x1x16x8xf32> to vector<8x16x8xf32>
    %113 = vector.extract_strided_slice %108 {offsets = [0, 1, 0, 0], sizes = [8, 1, 16, 8], strides = [1, 1, 1, 1]} : vector<8x2x16x8xf32> to vector<8x1x16x8xf32>
    %114 = vector.shape_cast %113 : vector<8x1x16x8xf32> to vector<8x16x8xf32>
    %cst_119 = arith.constant 3.000000e+00 : f32
    %115 = vector.broadcast %cst_119 : f32 to vector<8x16x8xf32>
    %116 = arith.mulf %115, %114 : vector<8x16x8xf32>
    %117 = arith.addf %112, %116 : vector<8x16x8xf32>
    %118 = vector.extract_strided_slice %110 {offsets = [0, 0, 0, 0], sizes = [8, 1, 16, 8], strides = [1, 1, 1, 1]} : vector<8x2x16x8xf32> to vector<8x1x16x8xf32>
    %119 = vector.shape_cast %118 : vector<8x1x16x8xf32> to vector<8x16x8xf32>
    %cst_120 = arith.constant 3.000000e+00 : f32
    %120 = vector.broadcast %cst_120 : f32 to vector<8x16x8xf32>
    %121 = arith.mulf %120, %119 : vector<8x16x8xf32>
    %122 = arith.addf %117, %121 : vector<8x16x8xf32>
    %123 = vector.extract_strided_slice %110 {offsets = [0, 1, 0, 0], sizes = [8, 1, 16, 8], strides = [1, 1, 1, 1]} : vector<8x2x16x8xf32> to vector<8x1x16x8xf32>
    %124 = vector.shape_cast %123 : vector<8x1x16x8xf32> to vector<8x16x8xf32>
    %125 = arith.addf %122, %124 : vector<8x16x8xf32>
    %c0_121 = arith.constant 0 : index
    %c1_122 = arith.constant 1 : index
    %c0_123 = arith.constant 0 : index
    %126 = vector.load %arg10[%c0_121, %c1_122, %c0_123] : memref<8x18x8xf32, #tpu.memory_space<vmem>>, vector<8x16x8xf32>
    tpu.vector_store %arg10[%c0_121, %c1_122, %c0_123], %125 {strides = array<i32>} : memref<8x18x8xf32, #tpu.memory_space<vmem>>, vector<8x16x8xf32>,
    %127 = vector.extract_strided_slice %125 {offsets = [0, 1, 0], sizes = [8, 1, 8], strides = [1, 1, 1]} : vector<8x16x8xf32> to vector<8x1x8xf32>
    %c0_124 = arith.constant 0 : index
    %c0_125 = arith.constant 0 : index
    %c0_126 = arith.constant 0 : index
    %128 = vector.load %arg10[%c0_124, %c0_125, %c0_126] : memref<8x18x8xf32, #tpu.memory_space<vmem>>, vector<8x1x8xf32>
    tpu.vector_store %arg10[%c0_124, %c0_125, %c0_126], %127 {strides = array<i32>} : memref<8x18x8xf32, #tpu.memory_space<vmem>>, vector<8x1x8xf32>,
    %129 = vector.extract_strided_slice %125 {offsets = [0, 14, 0], sizes = [8, 1, 8], strides = [1, 1, 1]} : vector<8x16x8xf32> to vector<8x1x8xf32>
    %c0_127 = arith.constant 0 : index
    %c17_128 = arith.constant 17 : index
    %c0_129 = arith.constant 0 : index
    %130 = vector.load %arg10[%c0_127, %c17_128, %c0_129] : memref<8x18x8xf32, #tpu.memory_space<vmem>>, vector<8x1x8xf32>
    tpu.vector_store %arg10[%c0_127, %c17_128, %c0_129], %129 {strides = array<i32>} : memref<8x18x8xf32, #tpu.memory_space<vmem>>, vector<8x1x8xf32>,
    %c0_130 = arith.constant 0 : index
    %c0_131 = arith.constant 0 : index
    %c0_132 = arith.constant 0 : index
    %131 = tpu.strided_load %arg10[%c0_130, %c0_131, %c0_132] {strides = array<i32: 1, 2, 1>} : memref<8x18x8xf32, #tpu.memory_space<vmem>>, vector<8x8x8xf32>
    %c0_133 = arith.constant 0 : index
    %c1_134 = arith.constant 1 : index
    %c0_135 = arith.constant 0 : index
    %132 = tpu.strided_load %arg10[%c0_133, %c1_134, %c0_135] {strides = array<i32: 1, 2, 1>} : memref<8x18x8xf32, #tpu.memory_space<vmem>>, vector<8x8x8xf32>
    %c0_136 = arith.constant 0 : index
    %c2_137 = arith.constant 2 : index
    %c0_138 = arith.constant 0 : index
    %133 = tpu.strided_load %arg10[%c0_136, %c2_137, %c0_138] {strides = array<i32: 1, 2, 1>} : memref<8x18x8xf32, #tpu.memory_space<vmem>>, vector<8x8x8xf32>
    %c0_139 = arith.constant 0 : index
    %c3_140 = arith.constant 3 : index
    %c0_141 = arith.constant 0 : index
    %134 = tpu.strided_load %arg10[%c0_139, %c3_140, %c0_141] {strides = array<i32: 1, 2, 1>} : memref<8x18x8xf32, #tpu.memory_space<vmem>>, vector<8x8x8xf32>
    %cst_142 = arith.constant 3.000000e+00 : f32
    %135 = vector.broadcast %cst_142 : f32 to vector<8x8x8xf32>
    %136 = arith.mulf %135, %132 : vector<8x8x8xf32>
    %137 = arith.addf %131, %136 : vector<8x8x8xf32>
    %cst_143 = arith.constant 3.000000e+00 : f32
    %138 = vector.broadcast %cst_143 : f32 to vector<8x8x8xf32>
    %139 = arith.mulf %138, %133 : vector<8x8x8xf32>
    %140 = arith.addf %137, %139 : vector<8x8x8xf32>
    %141 = arith.addf %140, %134 : vector<8x8x8xf32>
    %cst_144 = arith.constant 1.562500e-02 : f32
    %142 = vector.broadcast %cst_144 : f32 to vector<8x8x8xf32>
    %143 = arith.mulf %141, %142 : vector<8x8x8xf32>
    %144 = arith.addf %96, %143 : vector<8x8x8xf32>
    %cst_145 = arith.constant 0.707106769 : f32
    %145 = vector.broadcast %cst_145 : f32 to vector<8x8x8xf32>
    %146 = arith.mulf %144, %145 : vector<8x8x8xf32>
    %c0_146 = arith.constant 0 : index
    %c0_147 = arith.constant 0 : index
    %c0_148 = arith.constant 0 : index
    %c0_149 = arith.constant 0 : index
    %147 = vector.load %arg8[%c0_146, %c0_147, %c0_148, %c0_149] : memref<1x8x8x8xf32, #tpu.memory_space<vmem>>, vector<1x8x8x8xf32>
    %148 = vector.shape_cast %147 : vector<1x8x8x8xf32> to vector<8x8x8xf32>
    %149 = vector.shape_cast %146 : vector<8x8x8xf32> to vector<1x8x8x8xf32>
    tpu.vector_store %arg8[%c0_146, %c0_147, %c0_148, %c0_149], %149 {strides = array<i32>} : memref<1x8x8x8xf32, #tpu.memory_space<vmem>>, vector<1x8x8x8xf32>,
    return
  }
  func.func @transform_0(%arg0: i32) -> (i32, i32, i32, i32) {
    %c0_i32 = arith.constant 0 : i32
    %c0_i32_0 = arith.constant 0 : i32
    %c0_i32_1 = arith.constant 0 : i32
    %c0_i32_2 = arith.constant 0 : i32
    return %arg0, %c0_i32, %c0_i32_0, %c0_i32_1 : i32, i32, i32, i32
  }
  func.func @transform_1(%arg0: i32) -> (i32, i32) {
    %c0_i32 = arith.constant 0 : i32
    %c0_i32_0 = arith.constant 0 : i32
    %c0_i32_1 = arith.constant 0 : i32
    return %c0_i32, %c0_i32_0 : i32, i32
  }
  func.func @transform_2(%arg0: i32) -> (i32, i32) {
    %c0_i32 = arith.constant 0 : i32
    %c0_i32_0 = arith.constant 0 : i32
    %c0_i32_1 = arith.constant 0 : i32
    return %c0_i32, %c0_i32_0 : i32, i32
  }
  func.func @transform_3(%arg0: i32) -> (i32, i32) {
    %c0_i32 = arith.constant 0 : i32
    %c0_i32_0 = arith.constant 0 : i32
    %c0_i32_1 = arith.constant 0 : i32
    return %c0_i32, %c0_i32_0 : i32, i32
  }
  func.func @transform_4(%arg0: i32) -> (i32, i32) {
    %c0_i32 = arith.constant 0 : i32
    %c0_i32_0 = arith.constant 0 : i32
    %c0_i32_1 = arith.constant 0 : i32
    return %c0_i32, %c0_i32_0 : i32, i32
  }
  func.func @transform_5(%arg0: i32) -> (i32, i32) {
    %c0_i32 = arith.constant 0 : i32
    %c0_i32_0 = arith.constant 0 : i32
    %c0_i32_1 = arith.constant 0 : i32
    return %c0_i32, %c0_i32_0 : i32, i32
  }
  func.func @transform_6(%arg0: i32) -> (i32, i32) {
    %c0_i32 = arith.constant 0 : i32
    %c0_i32_0 = arith.constant 0 : i32
    %c0_i32_1 = arith.constant 0 : i32
    return %c0_i32, %c0_i32_0 : i32, i32
  }
  func.func @transform_7(%arg0: i32) -> (i32, i32, i32, i32) {
    %c0_i32 = arith.constant 0 : i32
    %c0_i32_0 = arith.constant 0 : i32
    %c0_i32_1 = arith.constant 0 : i32
    %c0_i32_2 = arith.constant 0 : i32
    return %arg0, %c0_i32, %c0_i32_0, %c0_i32_1 : i32, i32, i32, i32
  }
}

</mosaic_0001>

<llo_original>
// kernel: tpu_custom_call.1
$region0: #{tpu_custom_call.1}
  #allocation0 [shape = 'u32[]', space=smem, size = 0x4, offset = 0x4, fixed_abs, tag = 'smem constant byte address 0x4 - core index']
  #allocation1 [shape = 'u32[144,128]{1,0:T(1,128)}', space=vmem, size = 0x12000, scoped, tag = 'internal scratch']
  #allocation2 [shape = 'bf16[18,18,4]{2,1,0:T(8,128)(2,1)}', space=vmem, size = 0x1b000, scoped, tag = 'scratch operand']
  #allocation3 [shape = 'f32[8,18,8]{2,1,0:T(8,128)}', space=vmem, size = 0x18000, scoped, tag = 'scratch operand']
  %s0 = inlined_call_operand.vmem [shape: bf16[2,16,16,4], index: 0, kind: input, shape index: {}]
  %s1 = inlined_call_operand.vmem [shape: bf16[36,4], index: 1, kind: input, shape index: {}]
  %s2 = inlined_call_operand.vmem [shape: f32[1,4], index: 2, kind: input, shape index: {}]
  %s3 = inlined_call_operand.vmem [shape: bf16[36,8], index: 3, kind: input, shape index: {}]
  %s4 = inlined_call_operand.vmem [shape: f32[1,8], index: 4, kind: input, shape index: {}]
  %s5 = inlined_call_operand.vmem [shape: bf16[4,8], index: 5, kind: input, shape index: {}]
  %s6 = inlined_call_operand.vmem [shape: f32[1,8], index: 6, kind: input, shape index: {}]
  %s7 = inlined_call_operand.hbm [shape: f32[2,8,8,8], index: 7, kind: output, shape index: {}]
  %s8 = sld [smem:[#allocation0]]
  $region61: #{tpu_custom_call.1} parent=0
    _
  %s10 = ssub.s32 1, %s8
  %s11 = scalar_select 0, %s10, %s8
  $region1: #{tpu_custom_call.1} parent=0
    #allocation4 [shape = 'u8[65536]{0}', space=vmem, size = 0x10000, scoped, tag = 'output window, operand 0']
    #allocation5 [shape = 's32[2]{0}', space=sflag, size = 0x8, scoped, tag = 'scoped memory for tpu_custom_call.1']
    %12 = vsyncpa [#allocation5], 0
    %s13 = scalar_lea.sflag [#allocation5], 1
    %14 = vsyncpa %s13, 0
    loop: start=0, step=1, limit=4
    $region2: #{tpu_custom_call.1} parent=1 // loop_pre_header
      _
    $region3: #{tpu_custom_call.1} parent=1 // loop_header
      %s16 = sphi 0, %s20
      %p17 = scmp.ge.s32.totalorder %s16, 4
      %s26 = sphi 0, %s28
      %s29 = sphi 0, %s26
      %s30 = sphi 0, %s29
      %s46 = sphi 0, %s30
      %s50 = sphi 0, %s50
      %s52 = sphi 0, %s50
      %s53 = sphi 0, %s52
      %s67 = sphi 0, %s53
      %s71 = sphi 0, %s71
      %s73 = sphi 0, %s71
      %s74 = sphi 0, %s73
      %s88 = sphi 0, %s74
      %s92 = sphi 0, %s92
      %s94 = sphi 0, %s92
      %s95 = sphi 0, %s94
      %s109 = sphi 0, %s95
      %s113 = sphi 0, %s113
      %s115 = sphi 0, %s113
      %s116 = sphi 0, %s115
      %s130 = sphi 0, %s116
      %s134 = sphi 0, %s134
      %s136 = sphi 0, %s134
      %s137 = sphi 0, %s136
      %s151 = sphi 0, %s137
      %s155 = sphi 0, %s155
      %s157 = sphi 0, %s155
      %s158 = sphi 0, %s157
      %s172 = sphi 0, %s158
      %s178 = sphi 0, %s180
      %s181 = sphi 0, %s178
      %s182 = sphi 0, %s181
      %s198 = sphi 0, %s182
    $region4: #{tpu_custom_call.1} parent=1 // loop_header_branch
      %19 = sbr.rel (%p17) target = $region8
    $region5: #{tpu_custom_call.1} parent=1 // loop_body
      %s21 = ssub.s32 %s16, 1
      %s22 = ssub.s32 %s16, 2
      %s23 = sadd.s32 %s16, 1
      %s24 = ssub.s32 %s16, %s23
      %p25 = scmp.eq.s32.totalorder %s24, 0
      %s27 = sadd.s32 %s26, 1
      %s28 = scalar_select %p25, %s26, %s27
      %p31 = pneg %p25
      %p32 = scmp.eq.s32.totalorder %s16, 1
      %p33 = por %p31, %p32
      %p34 = scmp.ne.s32.totalorder %s26, %s29
      %p35 = scmp.eq.s32.totalorder %s16, 0
      %p36 = por %p34, %p35
      %p37 = scmp.ne.s32.totalorder %s26, %s29
      %p38 = scmp.eq.s32.totalorder %s21, 1
      %p39 = por %p37, %p38
      %p40 = scmp.ne.s32.totalorder %s29, %s30
      %p41 = scmp.eq.s32.totalorder %s21, 0
      %p42 = por %p40, %p41
      %p43 = scmp.ne.s32.totalorder %s29, %s30
      %p44 = scmp.eq.s32.totalorder %s22, 1
      %p45 = por %p43, %p44
      %p47 = scmp.ne.s32.totalorder %s30, %s46
      %p48 = scmp.eq.s32.totalorder %s22, 0
      %p49 = por %p47, %p48
      %s51 = sadd.s32 %s50, 1
      %p54 = scmp.eq.s32.totalorder %s16, 1
      %p55 = scmp.ne.s32.totalorder %s50, %s52
      %p56 = scmp.eq.s32.totalorder %s16, 0
      %p57 = por %p55, %p56
      %p58 = scmp.ne.s32.totalorder %s50, %s52
      %p59 = scmp.eq.s32.totalorder %s21, 1
      %p60 = por %p58, %p59
      %p61 = scmp.ne.s32.totalorder %s52, %s53
      %p62 = scmp.eq.s32.totalorder %s21, 0
      %p63 = por %p61, %p62
      %p64 = scmp.ne.s32.totalorder %s52, %s53
      %p65 = scmp.eq.s32.totalorder %s22, 1
      %p66 = por %p64, %p65
      %p68 = scmp.ne.s32.totalorder %s53, %s67
      %p69 = scmp.eq.s32.totalorder %s22, 0
      %p70 = por %p68, %p69
      %s72 = sadd.s32 %s71, 1
      %p75 = scmp.eq.s32.totalorder %s16, 1
      %p76 = scmp.ne.s32.totalorder %s71, %s73
      %p77 = scmp.eq.s32.totalorder %s16, 0
      %p78 = por %p76, %p77
      %p79 = scmp.ne.s32.totalorder %s71, %s73
      %p80 = scmp.eq.s32.totalorder %s21, 1
      %p81 = por %p79, %p80
      %p82 = scmp.ne.s32.totalorder %s73, %s74
      %p83 = scmp.eq.s32.totalorder %s21, 0
      %p84 = por %p82, %p83
      %p85 = scmp.ne.s32.totalorder %s73, %s74
      %p86 = scmp.eq.s32.totalorder %s22, 1
      %p87 = por %p85, %p86
      %p89 = scmp.ne.s32.totalorder %s74, %s88
      %p90 = scmp.eq.s32.totalorder %s22, 0
      %p91 = por %p89, %p90
      %s93 = sadd.s32 %s92, 1
      %p96 = scmp.eq.s32.totalorder %s16, 1
      %p97 = scmp.ne.s32.totalorder %s92, %s94
      %p98 = scmp.eq.s32.totalorder %s16, 0
      %p99 = por %p97, %p98
      %p100 = scmp.ne.s32.totalorder %s92, %s94
      %p101 = scmp.eq.s32.totalorder %s21, 1
      %p102 = por %p100, %p101
      %p103 = scmp.ne.s32.totalorder %s94, %s95
      %p104 = scmp.eq.s32.totalorder %s21, 0
      %p105 = por %p103, %p104
      %p106 = scmp.ne.s32.totalorder %s94, %s95
      %p107 = scmp.eq.s32.totalorder %s22, 1
      %p108 = por %p106, %p107
      %p110 = scmp.ne.s32.totalorder %s95, %s109
      %p111 = scmp.eq.s32.totalorder %s22, 0
      %p112 = por %p110, %p111
      %s114 = sadd.s32 %s113, 1
      %p117 = scmp.eq.s32.totalorder %s16, 1
      %p118 = scmp.ne.s32.totalorder %s113, %s115
      %p119 = scmp.eq.s32.totalorder %s16, 0
      %p120 = por %p118, %p119
      %p121 = scmp.ne.s32.totalorder %s113, %s115
      %p122 = scmp.eq.s32.totalorder %s21, 1
      %p123 = por %p121, %p122
      %p124 = scmp.ne.s32.totalorder %s115, %s116
      %p125 = scmp.eq.s32.totalorder %s21, 0
      %p126 = por %p124, %p125
      %p127 = scmp.ne.s32.totalorder %s115, %s116
      %p128 = scmp.eq.s32.totalorder %s22, 1
      %p129 = por %p127, %p128
      %p131 = scmp.ne.s32.totalorder %s116, %s130
      %p132 = scmp.eq.s32.totalorder %s22, 0
      %p133 = por %p131, %p132
      %s135 = sadd.s32 %s134, 1
      %p138 = scmp.eq.s32.totalorder %s16, 1
      %p139 = scmp.ne.s32.totalorder %s134, %s136
      %p140 = scmp.eq.s32.totalorder %s16, 0
      %p141 = por %p139, %p140
      %p142 = scmp.ne.s32.totalorder %s134, %s136
      %p143 = scmp.eq.s32.totalorder %s21, 1
      %p144 = por %p142, %p143
      %p145 = scmp.ne.s32.totalorder %s136, %s137
      %p146 = scmp.eq.s32.totalorder %s21, 0
      %p147 = por %p145, %p146
      %p148 = scmp.ne.s32.totalorder %s136, %s137
      %p149 = scmp.eq.s32.totalorder %s22, 1
      %p150 = por %p148, %p149
      %p152 = scmp.ne.s32.totalorder %s137, %s151
      %p153 = scmp.eq.s32.totalorder %s22, 0
      %p154 = por %p152, %p153
      %s156 = sadd.s32 %s155, 1
      %p159 = scmp.eq.s32.totalorder %s16, 1
      %p160 = scmp.ne.s32.totalorder %s155, %s157
      %p161 = scmp.eq.s32.totalorder %s16, 0
      %p162 = por %p160, %p161
      %p163 = scmp.ne.s32.totalorder %s155, %s157
      %p164 = scmp.eq.s32.totalorder %s21, 1
      %p165 = por %p163, %p164
      %p166 = scmp.ne.s32.totalorder %s157, %s158
      %p167 = scmp.eq.s32.totalorder %s21, 0
      %p168 = por %p166, %p167
      %p169 = scmp.ne.s32.totalorder %s157, %s158
      %p170 = scmp.eq.s32.totalorder %s22, 1
      %p171 = por %p169, %p170
      %p173 = scmp.ne.s32.totalorder %s158, %s172
      %p174 = scmp.eq.s32.totalorder %s22, 0
      %p175 = por %p173, %p174
      %s176 = ssub.s32 %s16, %s23
      %p177 = scmp.eq.s32.totalorder %s176, 0
      %s179 = sadd.s32 %s178, 1
      %s180 = scalar_select %p177, %s178, %s179
      %p183 = pneg %p177
      %p184 = scmp.eq.s32.totalorder %s16, 1
      %p185 = por %p183, %p184
      %p186 = scmp.ne.s32.totalorder %s178, %s181
      %p187 = scmp.eq.s32.totalorder %s16, 0
      %p188 = por %p186, %p187
      %p189 = scmp.ne.s32.totalorder %s178, %s181
      %p190 = scmp.eq.s32.totalorder %s21, 1
      %p191 = por %p189, %p190
      %p192 = scmp.ne.s32.totalorder %s181, %s182
      %p193 = scmp.eq.s32.totalorder %s21, 0
      %p194 = por %p192, %p193
      %p195 = scmp.ne.s32.totalorder %s181, %s182
      %p196 = scmp.eq.s32.totalorder %s22, 1
      %p197 = por %p195, %p196
      %p199 = scmp.ne.s32.totalorder %s182, %s198
      %p200 = scmp.eq.s32.totalorder %s22, 0
      %p201 = por %p199, %p200
      %p202 = scmp.le.s32.totalorder 1, %s16
      %p203 = scmp.lt.s32.totalorder %s16, 3
      %p204 = pnand %p202, %p203
      %p205 = pneg %p204
      // Predicated region
      $region9: #{tpu_custom_call.1} parent=5 // pred_check
        _
      $region10: #{tpu_custom_call.1} parent=5 // pred_check_branch
        %207 = sbr.rel (%p204) target = $region12
      $region11: #{tpu_custom_call.1} parent=5 // pred_region
        %s208 = ssub.s32 %s16, 1
        // Predicated region
        $region13: #{tpu_custom_call.1} parent=11 // pred_check
          %p209 = pneg %p63
        $region14: #{tpu_custom_call.1} parent=11 // pred_check_branch
          %211 = sbr.rel (%p209) target = $region16
        $region15: #{tpu_custom_call.1} parent=11 // pred_region
          _
        $region16: #{tpu_custom_call.1} parent=11 // pred_fallthru
          _
        // Predicated region
        $region17: #{tpu_custom_call.1} parent=11 // pred_check
          %p212 = pneg %p84
        $region18: #{tpu_custom_call.1} parent=11 // pred_check_branch
          %214 = sbr.rel (%p212) target = $region20
        $region19: #{tpu_custom_call.1} parent=11 // pred_region
          _
        $region20: #{tpu_custom_call.1} parent=11 // pred_fallthru
          _
        // Predicated region
        $region21: #{tpu_custom_call.1} parent=11 // pred_check
          %p215 = pneg %p105
        $region22: #{tpu_custom_call.1} parent=11 // pred_check_branch
          %217 = sbr.rel (%p215) target = $region24
        $region23: #{tpu_custom_call.1} parent=11 // pred_region
          _
        $region24: #{tpu_custom_call.1} parent=11 // pred_fallthru
          _
        // Predicated region
        $region25: #{tpu_custom_call.1} parent=11 // pred_check
          %p218 = pneg %p126
        $region26: #{tpu_custom_call.1} parent=11 // pred_check_branch
          %220 = sbr.rel (%p218) target = $region28
        $region27: #{tpu_custom_call.1} parent=11 // pred_region
          _
        $region28: #{tpu_custom_call.1} parent=11 // pred_fallthru
          _
        // Predicated region
        $region29: #{tpu_custom_call.1} parent=11 // pred_check
          %p221 = pneg %p147
        $region30: #{tpu_custom_call.1} parent=11 // pred_check_branch
          %223 = sbr.rel (%p221) target = $region32
        $region31: #{tpu_custom_call.1} parent=11 // pred_region
          _
        $region32: #{tpu_custom_call.1} parent=11 // pred_fallthru
          _
        // Predicated region
        $region33: #{tpu_custom_call.1} parent=11 // pred_check
          %p224 = pneg %p168
        $region34: #{tpu_custom_call.1} parent=11 // pred_check_branch
          %226 = sbr.rel (%p224) target = $region36
        $region35: #{tpu_custom_call.1} parent=11 // pred_region
          _
        $region36: #{tpu_custom_call.1} parent=11 // pred_fallthru
          _
      $region12: #{tpu_custom_call.1} parent=5 // pred_fallthru
        _
      %p227 = scmp.lt.s32.totalorder %s16, 2
      // Predicated region
      $region37: #{tpu_custom_call.1} parent=5 // pred_check
        %p228 = pneg %p227
      $region38: #{tpu_custom_call.1} parent=5 // pred_check_branch
        %230 = sbr.rel (%p228) target = $region40
      $region39: #{tpu_custom_call.1} parent=5 // pred_region
        // Predicated region
        $region41: #{tpu_custom_call.1} parent=39 // pred_check
          %p231 = pneg %p36
        $region42: #{tpu_custom_call.1} parent=39 // pred_check_branch
          %233 = sbr.rel (%p231) target = $region44
        $region43: #{tpu_custom_call.1} parent=39 // pred_region
          %p234 = scmp.lt.s32.totalorder %s16, 1
          %s235 = scalar_select %p234, %s16, 1
          %s236 = smul.addr %s235, 32
          %s237 = smul.addr %s236, 4
          %s238 = scalar_lea.vmem %s0, %s237
        $region44: #{tpu_custom_call.1} parent=39 // pred_fallthru
          _
      $region40: #{tpu_custom_call.1} parent=5 // pred_fallthru
        _
      %p239 = scmp.le.s32.totalorder 1, %s16
      %p240 = scmp.lt.s32.totalorder %s16, 3
      %p241 = pnand %p239, %p240
      %p242 = pneg %p241
      // Predicated region
      $region45: #{tpu_custom_call.1} parent=5 // pred_check
        _
      $region46: #{tpu_custom_call.1} parent=5 // pred_check_branch
        %244 = sbr.rel (%p241) target = $region48
      $region47: #{tpu_custom_call.1} parent=5 // pred_region
        %s245 = ssub.s32 %s16, 1
        %p246 = scmp.lt.s32.totalorder %s21, 1
        %s247 = scalar_select %p246, %s21, 1
        %s248 = smul.addr %s247, 32
        %s249 = smul.addr %s248, 4
        %s250 = scalar_lea.vmem %s0, %s249
        %p251 = pneg %p42
        %p252 = pneg %p39
        %p253 = pneg %p63
        %p254 = pneg %p60
        %p255 = pneg %p84
        %p256 = pneg %p81
        %p257 = pneg %p105
        %p258 = pneg %p102
        %p259 = pneg %p126
        %p260 = pneg %p123
        %p261 = pneg %p147
        %p262 = pneg %p144
        %p263 = pneg %p168
        %p264 = pneg %p165
        %p265 = pneg %p194
        %p266 = pneg %p191
        %s267 = sand.u32 %s181, 1
        %s268 = scalar_lea.sflag [#allocation5], %s267
        %s269 = sand.u32 %s181, 1
        %s270 = smul.addr %s269, 64
        %s271 = scalar_lea.vmem [#allocation4], %s270
        %p272 = scmp.lt.s32.totalorder %s21, 1
        %s273 = scalar_select %p272, %s21, 1
        %s274 = smul.addr %s273, 32
        %s275 = smul.addr %s274, 4
        %s276 = scalar_lea.vmem %s0, %s275
        %vm278 = vcmask 27648
        %279 = vst.msk [vmem:[#allocation2] sm:$0xf] %vm278, 0
        %280 = vst.msk [vmem:[#allocation2 + $0x4] sm:$0xf] %vm278, 0
        %vm281 = vcmask 24576
        %282 = vst.msk [vmem:[#allocation2 + $0x8] sm:$0x1] %vm281, 0
        %s283 = scalar_lea.vmem [#allocation2], 204
        %284 = vst.msk [vmem:[%s283] sm:$0xf] %vm278, 0
        %285 = vst.msk [vmem:[%s283 + $0x4] sm:$0xf] %vm278, 0
        %286 = vst.msk [vmem:[%s283 + $0x8] sm:$0x1] %vm281, 0
        %vm287 = vcmask 24576
        %vm288 = vsmask.f32 256
        %vm289 = vmand %vm287, %vm288
        %v290 = vld [vmem:[#allocation2] sm:$0x1]
        %v291 = vsel %vm289, 0, %v290
        %292 = vst [vmem:[#allocation2] sm:$0x1] %v291
        %v293 = vld [vmem:[#allocation2 + $0xc] sm:$0x1]
        %v294 = vsel %vm289, 0, %v293
        %295 = vst [vmem:[#allocation2 + $0xc] sm:$0x1] %v294
        %v296 = vld [vmem:[#allocation2 + $0x18] sm:$0x1]
        %v297 = vsel %vm289, 0, %v296
        %298 = vst [vmem:[#allocation2 + $0x18] sm:$0x1] %v297
        %v299 = vld [vmem:[#allocation2 + $0x24] sm:$0x1]
        %v300 = vsel %vm289, 0, %v299
        %301 = vst [vmem:[#allocation2 + $0x24] sm:$0x1] %v300
        %v302 = vld [vmem:[#allocation2 + $0x30] sm:$0x1]
        %v303 = vsel %vm289, 0, %v302
        %304 = vst [vmem:[#allocation2 + $0x30] sm:$0x1] %v303
        %v305 = vld [vmem:[#allocation2 + $0x3c] sm:$0x1]
        %v306 = vsel %vm289, 0, %v305
        %307 = vst [vmem:[#allocation2 + $0x3c] sm:$0x1] %v306
        %v308 = vld [vmem:[#allocation2 + $0x48] sm:$0x1]
        %v309 = vsel %vm289, 0, %v308
        %310 = vst [vmem:[#allocation2 + $0x48] sm:$0x1] %v309
        %v311 = vld [vmem:[#allocation2 + $0x54] sm:$0x1]
        %v312 = vsel %vm289, 0, %v311
        %313 = vst [vmem:[#allocation2 + $0x54] sm:$0x1] %v312
        %v314 = vld [vmem:[#allocation2 + $0x60] sm:$0x1]
        %v315 = vsel %vm289, 0, %v314
        %316 = vst [vmem:[#allocation2 + $0x60] sm:$0x1] %v315
        %v317 = vld [vmem:[#allocation2 + $0x6c] sm:$0x1]
        %v318 = vsel %vm289, 0, %v317
        %319 = vst [vmem:[#allocation2 + $0x6c] sm:$0x1] %v318
        %v320 = vld [vmem:[#allocation2 + $0x78] sm:$0x1]
        %v321 = vsel %vm289, 0, %v320
        %322 = vst [vmem:[#allocation2 + $0x78] sm:$0x1] %v321
        %v323 = vld [vmem:[#allocation2 + $0x84] sm:$0x1]
        %v324 = vsel %vm289, 0, %v323
        %325 = vst [vmem:[#allocation2 + $0x84] sm:$0x1] %v324
        %v326 = vld [vmem:[#allocation2 + $0x90] sm:$0x1]
        %v327 = vsel %vm289, 0, %v326
        %328 = vst [vmem:[#allocation2 + $0x90] sm:$0x1] %v327
        %v329 = vld [vmem:[#allocation2 + $0x9c] sm:$0x1]
        %v330 = vsel %vm289, 0, %v329
        %331 = vst [vmem:[#allocation2 + $0x9c] sm:$0x1] %v330
        %v332 = vld [vmem:[#allocation2 + $0xa8] sm:$0x1]
        %v333 = vsel %vm289, 0, %v332
        %334 = vst [vmem:[#allocation2 + $0xa8] sm:$0x1] %v333
        %v335 = vld [vmem:[#allocation2 + $0xb4] sm:$0x1]
        %v336 = vsel %vm289, 0, %v335
        %337 = vst [vmem:[#allocation2 + $0xb4] sm:$0x1] %v336
        %v338 = vld [vmem:[#allocation2 + $0xc0] sm:$0x1]
        %v339 = vsel %vm289, 0, %v338
        %340 = vst [vmem:[#allocation2 + $0xc0] sm:$0x1] %v339
        %v341 = vld [vmem:[#allocation2 + $0xcc] sm:$0x1]
        %v342 = vsel %vm289, 0, %v341
        %343 = vst [vmem:[#allocation2 + $0xcc] sm:$0x1] %v342
        %vm344 = vsmask.f32 7938
        %vm345 = vmand %vm287, %vm344
        %v346 = vld [vmem:[#allocation2 + $0x8] sm:$0x1]
        %v347 = vsel %vm345, 0, %v346
        %348 = vst [vmem:[#allocation2 + $0x8] sm:$0x1] %v347
        %v349 = vld [vmem:[#allocation2 + $0x14] sm:$0x1]
        %v350 = vsel %vm345, 0, %v349
        %351 = vst [vmem:[#allocation2 + $0x14] sm:$0x1] %v350
        %v352 = vld [vmem:[#allocation2 + $0x20] sm:$0x1]
        %v353 = vsel %vm345, 0, %v352
        %354 = vst [vmem:[#allocation2 + $0x20] sm:$0x1] %v353
        %v355 = vld [vmem:[#allocation2 + $0x2c] sm:$0x1]
        %v356 = vsel %vm345, 0, %v355
        %357 = vst [vmem:[#allocation2 + $0x2c] sm:$0x1] %v356
        %v358 = vld [vmem:[#allocation2 + $0x38] sm:$0x1]
        %v359 = vsel %vm345, 0, %v358
        %360 = vst [vmem:[#allocation2 + $0x38] sm:$0x1] %v359
        %v361 = vld [vmem:[#allocation2 + $0x44] sm:$0x1]
        %v362 = vsel %vm345, 0, %v361
        %363 = vst [vmem:[#allocation2 + $0x44] sm:$0x1] %v362
        %v364 = vld [vmem:[#allocation2 + $0x50] sm:$0x1]
        %v365 = vsel %vm345, 0, %v364
        %366 = vst [vmem:[#allocation2 + $0x50] sm:$0x1] %v365
        %v367 = vld [vmem:[#allocation2 + $0x5c] sm:$0x1]
        %v368 = vsel %vm345, 0, %v367
        %369 = vst [vmem:[#allocation2 + $0x5c] sm:$0x1] %v368
        %v370 = vld [vmem:[#allocation2 + $0x68] sm:$0x1]
        %v371 = vsel %vm345, 0, %v370
        %372 = vst [vmem:[#allocation2 + $0x68] sm:$0x1] %v371
        %v373 = vld [vmem:[#allocation2 + $0x74] sm:$0x1]
        %v374 = vsel %vm345, 0, %v373
        %375 = vst [vmem:[#allocation2 + $0x74] sm:$0x1] %v374
        %v376 = vld [vmem:[#allocation2 + $0x80] sm:$0x1]
        %v377 = vsel %vm345, 0, %v376
        %378 = vst [vmem:[#allocation2 + $0x80] sm:$0x1] %v377
        %v379 = vld [vmem:[#allocation2 + $0x8c] sm:$0x1]
        %v380 = vsel %vm345, 0, %v379
        %381 = vst [vmem:[#allocation2 + $0x8c] sm:$0x1] %v380
        %v382 = vld [vmem:[#allocation2 + $0x98] sm:$0x1]
        %v383 = vsel %vm345, 0, %v382
        %384 = vst [vmem:[#allocation2 + $0x98] sm:$0x1] %v383
        %v385 = vld [vmem:[#allocation2 + $0xa4] sm:$0x1]
        %v386 = vsel %vm345, 0, %v385
        %387 = vst [vmem:[#allocation2 + $0xa4] sm:$0x1] %v386
        %v388 = vld [vmem:[#allocation2 + $0xb0] sm:$0x1]
        %v389 = vsel %vm345, 0, %v388
        %390 = vst [vmem:[#allocation2 + $0xb0] sm:$0x1] %v389
        %v391 = vld [vmem:[#allocation2 + $0xbc] sm:$0x1]
        %v392 = vsel %vm345, 0, %v391
        %393 = vst [vmem:[#allocation2 + $0xbc] sm:$0x1] %v392
        %v394 = vld [vmem:[#allocation2 + $0xc8] sm:$0x1]
        %v395 = vsel %vm345, 0, %v394
        %396 = vst [vmem:[#allocation2 + $0xc8] sm:$0x1] %v395
        %v397 = vld [vmem:[#allocation2 + $0xd4] sm:$0x1]
        %v398 = vsel %vm345, 0, %v397
        %399 = vst [vmem:[#allocation2 + $0xd4] sm:$0x1] %v398
        %v400 = vld [vmem:[%s276] sm:$0xf]
        %v401 = vld [vmem:[%s276 + $0x4] sm:$0xf]
        %v402 = vld [vmem:[%s276 + $0x8] sm:$0xf]
        %v403 = vld [vmem:[%s276 + $0xc] sm:$0xf]
        %v404 = vld [vmem:[%s276 + $0x10] sm:$0xf]
        %v405 = vld [vmem:[%s276 + $0x14] sm:$0xf]
        %v406 = vld [vmem:[%s276 + $0x18] sm:$0xf]
        %v407 = vld [vmem:[%s276 + $0x1c] sm:$0xf]
        %v408 = vld [vmem:[%s276 + $0x20] sm:$0xf]
        %v409 = vld [vmem:[%s276 + $0x24] sm:$0xf]
        %v410 = vld [vmem:[%s276 + $0x28] sm:$0xf]
        %v411 = vld [vmem:[%s276 + $0x2c] sm:$0xf]
        %v412 = vld [vmem:[%s276 + $0x30] sm:$0xf]
        %v413 = vld [vmem:[%s276 + $0x34] sm:$0xf]
        %v414 = vld [vmem:[%s276 + $0x38] sm:$0xf]
        %v415 = vld [vmem:[%s276 + $0x3c] sm:$0xf]
        %v416 = vld [vmem:[%s276 + $0x40] sm:$0xf]
        %v417 = vld [vmem:[%s276 + $0x44] sm:$0xf]
        %v418 = vld [vmem:[%s276 + $0x48] sm:$0xf]
        %v419 = vld [vmem:[%s276 + $0x4c] sm:$0xf]
        %v420 = vld [vmem:[%s276 + $0x50] sm:$0xf]
        %v421 = vld [vmem:[%s276 + $0x54] sm:$0xf]
        %v422 = vld [vmem:[%s276 + $0x58] sm:$0xf]
        %v423 = vld [vmem:[%s276 + $0x5c] sm:$0xf]
        %v424 = vld [vmem:[%s276 + $0x60] sm:$0xf]
        %v425 = vld [vmem:[%s276 + $0x64] sm:$0xf]
        %v426 = vld [vmem:[%s276 + $0x68] sm:$0xf]
        %v427 = vld [vmem:[%s276 + $0x6c] sm:$0xf]
        %v428 = vld [vmem:[%s276 + $0x70] sm:$0xf]
        %v429 = vld [vmem:[%s276 + $0x74] sm:$0xf]
        %v430 = vld [vmem:[%s276 + $0x78] sm:$0xf]
        %v431 = vld [vmem:[%s276 + $0x7c] sm:$0xf]
        %vm432 = vsmask.f32 4368
        %vm433 = vmor %vm288, %vm432
        %v435 = vshrl.u32 %v400, 16
        %v437 = vrot.slane %v435, 7
        %v438 = vshll.u32 %v400, 16
        %v440 = vor.u32 %v437, %v438
        %v441 = vrot.slane %v437, 4
        %v443 = vshrl.u32 %v401, 16
        %v445 = vrot.slane %v443, 7
        %v446 = vshll.u32 %v401, 16
        %v448 = vor.u32 %v445, %v446
        %v449 = vsel %vm433, %v441, %v448
        %v450 = vrot.slane %v445, 4
        %v452 = vshrl.u32 %v402, 16
        %v454 = vrot.slane %v452, 7
        %v455 = vshll.u32 %v402, 16
        %v457 = vor.u32 %v454, %v455
        %v458 = vrot.slane %v454, 4
        %v460 = vshrl.u32 %v403, 16
        %v462 = vrot.slane %v460, 7
        %v463 = vshll.u32 %v403, 16
        %v465 = vor.u32 %v462, %v463
        %v466 = vsel %vm433, %v458, %v465
        %v467 = vrot.slane %v462, 4
        %v469 = vshrl.u32 %v404, 16
        %v471 = vrot.slane %v469, 7
        %v472 = vshll.u32 %v404, 16
        %v474 = vor.u32 %v471, %v472
        %v475 = vrot.slane %v471, 4
        %v477 = vshrl.u32 %v405, 16
        %v479 = vrot.slane %v477, 7
        %v480 = vshll.u32 %v405, 16
        %v482 = vor.u32 %v479, %v480
        %v483 = vsel %vm433, %v475, %v482
        %v484 = vrot.slane %v479, 4
        %v486 = vshrl.u32 %v406, 16
        %v488 = vrot.slane %v486, 7
        %v489 = vshll.u32 %v406, 16
        %v491 = vor.u32 %v488, %v489
        %v492 = vrot.slane %v488, 4
        %v494 = vshrl.u32 %v407, 16
        %v496 = vrot.slane %v494, 7
        %v497 = vshll.u32 %v407, 16
        %v499 = vor.u32 %v496, %v497
        %v500 = vsel %vm433, %v492, %v499
        %v501 = vrot.slane %v496, 4
        %v503 = vshrl.u32 %v408, 16
        %v505 = vrot.slane %v503, 7
        %v506 = vshll.u32 %v408, 16
        %v508 = vor.u32 %v505, %v506
        %v509 = vrot.slane %v505, 4
        %v511 = vshrl.u32 %v409, 16
        %v513 = vrot.slane %v511, 7
        %v514 = vshll.u32 %v409, 16
        %v516 = vor.u32 %v513, %v514
        %v517 = vsel %vm433, %v509, %v516
        %v518 = vrot.slane %v513, 4
        %v520 = vshrl.u32 %v410, 16
        %v522 = vrot.slane %v520, 7
        %v523 = vshll.u32 %v410, 16
        %v525 = vor.u32 %v522, %v523
        %v526 = vrot.slane %v522, 4
        %v528 = vshrl.u32 %v411, 16
        %v530 = vrot.slane %v528, 7
        %v531 = vshll.u32 %v411, 16
        %v533 = vor.u32 %v530, %v531
        %v534 = vsel %vm433, %v526, %v533
        %v535 = vrot.slane %v530, 4
        %v537 = vshrl.u32 %v412, 16
        %v539 = vrot.slane %v537, 7
        %v540 = vshll.u32 %v412, 16
        %v542 = vor.u32 %v539, %v540
        %v543 = vrot.slane %v539, 4
        %v545 = vshrl.u32 %v413, 16
        %v547 = vrot.slane %v545, 7
        %v548 = vshll.u32 %v413, 16
        %v550 = vor.u32 %v547, %v548
        %v551 = vsel %vm433, %v543, %v550
        %v552 = vrot.slane %v547, 4
        %v554 = vshrl.u32 %v414, 16
        %v556 = vrot.slane %v554, 7
        %v557 = vshll.u32 %v414, 16
        %v559 = vor.u32 %v556, %v557
        %v560 = vrot.slane %v556, 4
        %v562 = vshrl.u32 %v415, 16
        %v564 = vrot.slane %v562, 7
        %v565 = vshll.u32 %v415, 16
        %v567 = vor.u32 %v564, %v565
        %v568 = vsel %vm433, %v560, %v567
        %v569 = vrot.slane %v564, 4
        %v571 = vshrl.u32 %v416, 16
        %v573 = vrot.slane %v571, 7
        %v574 = vshll.u32 %v416, 16
        %v576 = vor.u32 %v573, %v574
        %v577 = vrot.slane %v573, 4
        %v579 = vshrl.u32 %v417, 16
        %v581 = vrot.slane %v579, 7
        %v582 = vshll.u32 %v417, 16
        %v584 = vor.u32 %v581, %v582
        %v585 = vsel %vm433, %v577, %v584
        %v586 = vrot.slane %v581, 4
        %v588 = vshrl.u32 %v418, 16
        %v590 = vrot.slane %v588, 7
        %v591 = vshll.u32 %v418, 16
        %v593 = vor.u32 %v590, %v591
        %v594 = vrot.slane %v590, 4
        %v596 = vshrl.u32 %v419, 16
        %v598 = vrot.slane %v596, 7
        %v599 = vshll.u32 %v419, 16
        %v601 = vor.u32 %v598, %v599
        %v602 = vsel %vm433, %v594, %v601
        %v603 = vrot.slane %v598, 4
        %v605 = vshrl.u32 %v420, 16
        %v607 = vrot.slane %v605, 7
        %v608 = vshll.u32 %v420, 16
        %v610 = vor.u32 %v607, %v608
        %v611 = vrot.slane %v607, 4
        %v613 = vshrl.u32 %v421, 16
        %v615 = vrot.slane %v613, 7
        %v616 = vshll.u32 %v421, 16
        %v618 = vor.u32 %v615, %v616
        %v619 = vsel %vm433, %v611, %v618
        %v620 = vrot.slane %v615, 4
        %v622 = vshrl.u32 %v422, 16
        %v624 = vrot.slane %v622, 7
        %v625 = vshll.u32 %v422, 16
        %v627 = vor.u32 %v624, %v625
        %v628 = vrot.slane %v624, 4
        %v630 = vshrl.u32 %v423, 16
        %v632 = vrot.slane %v630, 7
        %v633 = vshll.u32 %v423, 16
        %v635 = vor.u32 %v632, %v633
        %v636 = vsel %vm433, %v628, %v635
        %v637 = vrot.slane %v632, 4
        %v639 = vshrl.u32 %v424, 16
        %v641 = vrot.slane %v639, 7
        %v642 = vshll.u32 %v424, 16
        %v644 = vor.u32 %v641, %v642
        %v645 = vrot.slane %v641, 4
        %v647 = vshrl.u32 %v425, 16
        %v649 = vrot.slane %v647, 7
        %v650 = vshll.u32 %v425, 16
        %v652 = vor.u32 %v649, %v650
        %v653 = vsel %vm433, %v645, %v652
        %v654 = vrot.slane %v649, 4
        %v656 = vshrl.u32 %v426, 16
        %v658 = vrot.slane %v656, 7
        %v659 = vshll.u32 %v426, 16
        %v661 = vor.u32 %v658, %v659
        %v662 = vrot.slane %v658, 4
        %v664 = vshrl.u32 %v427, 16
        %v666 = vrot.slane %v664, 7
        %v667 = vshll.u32 %v427, 16
        %v669 = vor.u32 %v666, %v667
        %v670 = vsel %vm433, %v662, %v669
        %v671 = vrot.slane %v666, 4
        %v673 = vshrl.u32 %v428, 16
        %v675 = vrot.slane %v673, 7
        %v676 = vshll.u32 %v428, 16
        %v678 = vor.u32 %v675, %v676
        %v679 = vrot.slane %v675, 4
        %v681 = vshrl.u32 %v429, 16
        %v683 = vrot.slane %v681, 7
        %v684 = vshll.u32 %v429, 16
        %v686 = vor.u32 %v683, %v684
        %v687 = vsel %vm433, %v679, %v686
        %v688 = vrot.slane %v683, 4
        %v690 = vshrl.u32 %v430, 16
        %v692 = vrot.slane %v690, 7
        %v693 = vshll.u32 %v430, 16
        %v695 = vor.u32 %v692, %v693
        %v696 = vrot.slane %v692, 4
        %v698 = vshrl.u32 %v431, 16
        %v700 = vrot.slane %v698, 7
        %v701 = vshll.u32 %v431, 16
        %v703 = vor.u32 %v700, %v701
        %v704 = vsel %vm433, %v696, %v703
        %v705 = vrot.slane %v700, 4
        %s754 = scalar_lea.vmem [#allocation2], 12
        %vm755 = vcmask 27648
        %vm756 = vmand %vm755, %vm344
        %v757 = vld [vmem:[%s754] sm:$0xf]
        %v758 = vsel %vm756, %v440, %v757
        %759 = vst [vmem:[%s754] sm:$0xf] %v758
        %760 = vst.msk [vmem:[%s754 + $0x4] sm:$0xf] %vm278, %v449
        %v761 = vld [vmem:[%s754 + $0x8] sm:$0x1]
        %v762 = vsel %vm289, %v450, %v761
        %763 = vst [vmem:[%s754 + $0x8] sm:$0x1] %v762
        %v764 = vld [vmem:[%s754 + $0xc] sm:$0xf]
        %v765 = vsel %vm756, %v457, %v764
        %766 = vst [vmem:[%s754 + $0xc] sm:$0xf] %v765
        %767 = vst.msk [vmem:[%s754 + $0x10] sm:$0xf] %vm278, %v466
        %v768 = vld [vmem:[%s754 + $0x14] sm:$0x1]
        %v769 = vsel %vm289, %v467, %v768
        %770 = vst [vmem:[%s754 + $0x14] sm:$0x1] %v769
        %v771 = vld [vmem:[%s754 + $0x18] sm:$0xf]
        %v772 = vsel %vm756, %v474, %v771
        %773 = vst [vmem:[%s754 + $0x18] sm:$0xf] %v772
        %774 = vst.msk [vmem:[%s754 + $0x1c] sm:$0xf] %vm278, %v483
        %v775 = vld [vmem:[%s754 + $0x20] sm:$0x1]
        %v776 = vsel %vm289, %v484, %v775
        %777 = vst [vmem:[%s754 + $0x20] sm:$0x1] %v776
        %v778 = vld [vmem:[%s754 + $0x24] sm:$0xf]
        %v779 = vsel %vm756, %v491, %v778
        %780 = vst [vmem:[%s754 + $0x24] sm:$0xf] %v779
        %781 = vst.msk [vmem:[%s754 + $0x28] sm:$0xf] %vm278, %v500
        %v782 = vld [vmem:[%s754 + $0x2c] sm:$0x1]
        %v783 = vsel %vm289, %v501, %v782
        %784 = vst [vmem:[%s754 + $0x2c] sm:$0x1] %v783
        %v785 = vld [vmem:[%s754 + $0x30] sm:$0xf]
        %v786 = vsel %vm756, %v508, %v785
        %787 = vst [vmem:[%s754 + $0x30] sm:$0xf] %v786
        %788 = vst.msk [vmem:[%s754 + $0x34] sm:$0xf] %vm278, %v517
        %v789 = vld [vmem:[%s754 + $0x38] sm:$0x1]
        %v790 = vsel %vm289, %v518, %v789
        %791 = vst [vmem:[%s754 + $0x38] sm:$0x1] %v790
        %v792 = vld [vmem:[%s754 + $0x3c] sm:$0xf]
        %v793 = vsel %vm756, %v525, %v792
        %794 = vst [vmem:[%s754 + $0x3c] sm:$0xf] %v793
        %795 = vst.msk [vmem:[%s754 + $0x40] sm:$0xf] %vm278, %v534
        %v796 = vld [vmem:[%s754 + $0x44] sm:$0x1]
        %v797 = vsel %vm289, %v535, %v796
        %798 = vst [vmem:[%s754 + $0x44] sm:$0x1] %v797
        %v799 = vld [vmem:[%s754 + $0x48] sm:$0xf]
        %v800 = vsel %vm756, %v542, %v799
        %801 = vst [vmem:[%s754 + $0x48] sm:$0xf] %v800
        %802 = vst.msk [vmem:[%s754 + $0x4c] sm:$0xf] %vm278, %v551
        %v803 = vld [vmem:[%s754 + $0x50] sm:$0x1]
        %v804 = vsel %vm289, %v552, %v803
        %805 = vst [vmem:[%s754 + $0x50] sm:$0x1] %v804
        %v806 = vld [vmem:[%s754 + $0x54] sm:$0xf]
        %v807 = vsel %vm756, %v559, %v806
        %808 = vst [vmem:[%s754 + $0x54] sm:$0xf] %v807
        %809 = vst.msk [vmem:[%s754 + $0x58] sm:$0xf] %vm278, %v568
        %v810 = vld [vmem:[%s754 + $0x5c] sm:$0x1]
        %v811 = vsel %vm289, %v569, %v810
        %812 = vst [vmem:[%s754 + $0x5c] sm:$0x1] %v811
        %v813 = vld [vmem:[%s754 + $0x60] sm:$0xf]
        %v814 = vsel %vm756, %v576, %v813
        %815 = vst [vmem:[%s754 + $0x60] sm:$0xf] %v814
        %816 = vst.msk [vmem:[%s754 + $0x64] sm:$0xf] %vm278, %v585
        %v817 = vld [vmem:[%s754 + $0x68] sm:$0x1]
        %v818 = vsel %vm289, %v586, %v817
        %819 = vst [vmem:[%s754 + $0x68] sm:$0x1] %v818
        %v820 = vld [vmem:[%s754 + $0x6c] sm:$0xf]
        %v821 = vsel %vm756, %v593, %v820
        %822 = vst [vmem:[%s754 + $0x6c] sm:$0xf] %v821
        %823 = vst.msk [vmem:[%s754 + $0x70] sm:$0xf] %vm278, %v602
        %v824 = vld [vmem:[%s754 + $0x74] sm:$0x1]
        %v825 = vsel %vm289, %v603, %v824
        %826 = vst [vmem:[%s754 + $0x74] sm:$0x1] %v825
        %v827 = vld [vmem:[%s754 + $0x78] sm:$0xf]
        %v828 = vsel %vm756, %v610, %v827
        %829 = vst [vmem:[%s754 + $0x78] sm:$0xf] %v828
        %830 = vst.msk [vmem:[%s754 + $0x7c] sm:$0xf] %vm278, %v619
        %v831 = vld [vmem:[%s754 + $0x80] sm:$0x1]
        %v832 = vsel %vm289, %v620, %v831
        %833 = vst [vmem:[%s754 + $0x80] sm:$0x1] %v832
        %v834 = vld [vmem:[%s754 + $0x84] sm:$0xf]
        %v835 = vsel %vm756, %v627, %v834
        %836 = vst [vmem:[%s754 + $0x84] sm:$0xf] %v835
        %837 = vst.msk [vmem:[%s754 + $0x88] sm:$0xf] %vm278, %v636
        %v838 = vld [vmem:[%s754 + $0x8c] sm:$0x1]
        %v839 = vsel %vm289, %v637, %v838
        %840 = vst [vmem:[%s754 + $0x8c] sm:$0x1] %v839
        %v841 = vld [vmem:[%s754 + $0x90] sm:$0xf]
        %v842 = vsel %vm756, %v644, %v841
        %843 = vst [vmem:[%s754 + $0x90] sm:$0xf] %v842
        %844 = vst.msk [vmem:[%s754 + $0x94] sm:$0xf] %vm278, %v653
        %v845 = vld [vmem:[%s754 + $0x98] sm:$0x1]
        %v846 = vsel %vm289, %v654, %v845
        %847 = vst [vmem:[%s754 + $0x98] sm:$0x1] %v846
        %v848 = vld [vmem:[%s754 + $0x9c] sm:$0xf]
        %v849 = vsel %vm756, %v661, %v848
        %850 = vst [vmem:[%s754 + $0x9c] sm:$0xf] %v849
        %851 = vst.msk [vmem:[%s754 + $0xa0] sm:$0xf] %vm278, %v670
        %v852 = vld [vmem:[%s754 + $0xa4] sm:$0x1]
        %v853 = vsel %vm289, %v671, %v852
        %854 = vst [vmem:[%s754 + $0xa4] sm:$0x1] %v853
        %v855 = vld [vmem:[%s754 + $0xa8] sm:$0xf]
        %v856 = vsel %vm756, %v678, %v855
        %857 = vst [vmem:[%s754 + $0xa8] sm:$0xf] %v856
        %858 = vst.msk [vmem:[%s754 + $0xac] sm:$0xf] %vm278, %v687
        %v859 = vld [vmem:[%s754 + $0xb0] sm:$0x1]
        %v860 = vsel %vm289, %v688, %v859
        %861 = vst [vmem:[%s754 + $0xb0] sm:$0x1] %v860
        %v862 = vld [vmem:[%s754 + $0xb4] sm:$0xf]
        %v863 = vsel %vm756, %v695, %v862
        %864 = vst [vmem:[%s754 + $0xb4] sm:$0xf] %v863
        %865 = vst.msk [vmem:[%s754 + $0xb8] sm:$0xf] %vm278, %v704
        %v866 = vld [vmem:[%s754 + $0xbc] sm:$0x1]
        %v867 = vsel %vm289, %v705, %v866
        %868 = vst [vmem:[%s754 + $0xbc] sm:$0x1] %v867
        %v869 = vld [vmem:[#allocation2] sm:$0xf]
        %v870 = vld [vmem:[#allocation2 + $0x4] sm:$0xf]
        %v871 = vld [vmem:[#allocation2 + $0xc] sm:$0xf]
        %v872 = vld [vmem:[#allocation2 + $0x10] sm:$0xf]
        %v873 = vld [vmem:[#allocation2 + $0x18] sm:$0xf]
        %v874 = vld [vmem:[#allocation2 + $0x1c] sm:$0xf]
        %v875 = vld [vmem:[#allocation2 + $0x24] sm:$0xf]
        %v876 = vld [vmem:[#allocation2 + $0x28] sm:$0xf]
        %v877 = vld [vmem:[#allocation2 + $0x30] sm:$0xf]
        %v878 = vld [vmem:[#allocation2 + $0x34] sm:$0xf]
        %v879 = vld [vmem:[#allocation2 + $0x3c] sm:$0xf]
        %v880 = vld [vmem:[#allocation2 + $0x40] sm:$0xf]
        %v881 = vld [vmem:[#allocation2 + $0x48] sm:$0xf]
        %v882 = vld [vmem:[#allocation2 + $0x4c] sm:$0xf]
        %v883 = vld [vmem:[#allocation2 + $0x54] sm:$0xf]
        %v884 = vld [vmem:[#allocation2 + $0x58] sm:$0xf]
        %v885 = vld [vmem:[#allocation2 + $0x60] sm:$0xf]
        %v886 = vld [vmem:[#allocation2 + $0x64] sm:$0xf]
        %v887 = vld [vmem:[#allocation2 + $0x6c] sm:$0xf]
        %v888 = vld [vmem:[#allocation2 + $0x70] sm:$0xf]
        %v889 = vld [vmem:[#allocation2 + $0x78] sm:$0xf]
        %v890 = vld [vmem:[#allocation2 + $0x7c] sm:$0xf]
        %v891 = vld [vmem:[#allocation2 + $0x84] sm:$0xf]
        %v892 = vld [vmem:[#allocation2 + $0x88] sm:$0xf]
        %v893 = vld [vmem:[#allocation2 + $0x90] sm:$0xf]
        %v894 = vld [vmem:[#allocation2 + $0x94] sm:$0xf]
        %v895 = vld [vmem:[#allocation2 + $0x9c] sm:$0xf]
        %v896 = vld [vmem:[#allocation2 + $0xa0] sm:$0xf]
        %v897 = vld [vmem:[#allocation2 + $0xa8] sm:$0xf]
        %v898 = vld [vmem:[#allocation2 + $0xac] sm:$0xf]
        %v899 = vld [vmem:[#allocation2 + $0xb4] sm:$0xf]
        %v900 = vld [vmem:[#allocation2 + $0xb8] sm:$0xf]
        %v901 = vld [vmem:[#allocation2 + $0x8] sm:$0x1]
        %v902 = vld [vmem:[#allocation2 + $0x14] sm:$0x1]
        %v903 = vld [vmem:[#allocation2 + $0x20] sm:$0x1]
        %v904 = vld [vmem:[#allocation2 + $0x2c] sm:$0x1]
        %v905 = vld [vmem:[#allocation2 + $0x38] sm:$0x1]
        %v906 = vld [vmem:[#allocation2 + $0x44] sm:$0x1]
        %v907 = vld [vmem:[#allocation2 + $0x50] sm:$0x1]
        %v908 = vld [vmem:[#allocation2 + $0x5c] sm:$0x1]
        %v909 = vld [vmem:[#allocation2 + $0x68] sm:$0x1]
        %v910 = vld [vmem:[#allocation2 + $0x74] sm:$0x1]
        %v911 = vld [vmem:[#allocation2 + $0x80] sm:$0x1]
        %v912 = vld [vmem:[#allocation2 + $0x8c] sm:$0x1]
        %v913 = vld [vmem:[#allocation2 + $0x98] sm:$0x1]
        %v914 = vld [vmem:[#allocation2 + $0xa4] sm:$0x1]
        %v915 = vld [vmem:[#allocation2 + $0xb0] sm:$0x1]
        %v916 = vld [vmem:[#allocation2 + $0xbc] sm:$0x1]
        %v917 = vld [vmem:[#allocation2] sm:$0xe]
        %v918 = vld [vmem:[#allocation2 + $0xc] sm:$0xe]
        %v919 = vld [vmem:[#allocation2 + $0x18] sm:$0xe]
        %v920 = vld [vmem:[#allocation2 + $0x24] sm:$0xe]
        %v921 = vld [vmem:[#allocation2 + $0x30] sm:$0xe]
        %v922 = vld [vmem:[#allocation2 + $0x3c] sm:$0xe]
        %v923 = vld [vmem:[#allocation2 + $0x48] sm:$0xe]
        %v924 = vld [vmem:[#allocation2 + $0x54] sm:$0xe]
        %v925 = vld [vmem:[#allocation2 + $0x60] sm:$0xe]
        %v926 = vld [vmem:[#allocation2 + $0x6c] sm:$0xe]
        %v927 = vld [vmem:[#allocation2 + $0x78] sm:$0xe]
        %v928 = vld [vmem:[#allocation2 + $0x84] sm:$0xe]
        %v929 = vld [vmem:[#allocation2 + $0x90] sm:$0xe]
        %v930 = vld [vmem:[#allocation2 + $0x9c] sm:$0xe]
        %v931 = vld [vmem:[#allocation2 + $0xa8] sm:$0xe]
        %v932 = vld [vmem:[#allocation2 + $0xb4] sm:$0xe]
        %v933 = vld [vmem:[%s754] sm:$0xf]
        %v934 = vld [vmem:[%s754 + $0x4] sm:$0xf]
        %v935 = vld [vmem:[%s754 + $0xc] sm:$0xf]
        %v936 = vld [vmem:[%s754 + $0x10] sm:$0xf]
        %v937 = vld [vmem:[%s754 + $0x18] sm:$0xf]
        %v938 = vld [vmem:[%s754 + $0x1c] sm:$0xf]
        %v939 = vld [vmem:[%s754 + $0x24] sm:$0xf]
        %v940 = vld [vmem:[%s754 + $0x28] sm:$0xf]
        %v941 = vld [vmem:[%s754 + $0x30] sm:$0xf]
        %v942 = vld [vmem:[%s754 + $0x34] sm:$0xf]
        %v943 = vld [vmem:[%s754 + $0x3c] sm:$0xf]
        %v944 = vld [vmem:[%s754 + $0x40] sm:$0xf]
        %v945 = vld [vmem:[%s754 + $0x48] sm:$0xf]
        %v946 = vld [vmem:[%s754 + $0x4c] sm:$0xf]
        %v947 = vld [vmem:[%s754 + $0x54] sm:$0xf]
        %v948 = vld [vmem:[%s754 + $0x58] sm:$0xf]
        %v949 = vld [vmem:[%s754 + $0x60] sm:$0xf]
        %v950 = vld [vmem:[%s754 + $0x64] sm:$0xf]
        %v951 = vld [vmem:[%s754 + $0x6c] sm:$0xf]
        %v952 = vld [vmem:[%s754 + $0x70] sm:$0xf]
        %v953 = vld [vmem:[%s754 + $0x78] sm:$0xf]
        %v954 = vld [vmem:[%s754 + $0x7c] sm:$0xf]
        %v955 = vld [vmem:[%s754 + $0x84] sm:$0xf]
        %v956 = vld [vmem:[%s754 + $0x88] sm:$0xf]
        %v957 = vld [vmem:[%s754 + $0x90] sm:$0xf]
        %v958 = vld [vmem:[%s754 + $0x94] sm:$0xf]
        %v959 = vld [vmem:[%s754 + $0x9c] sm:$0xf]
        %v960 = vld [vmem:[%s754 + $0xa0] sm:$0xf]
        %v961 = vld [vmem:[%s754 + $0xa8] sm:$0xf]
        %v962 = vld [vmem:[%s754 + $0xac] sm:$0xf]
        %v963 = vld [vmem:[%s754 + $0xb4] sm:$0xf]
        %v964 = vld [vmem:[%s754 + $0xb8] sm:$0xf]
        %v965 = vld [vmem:[%s754 + $0x8] sm:$0x1]
        %v966 = vld [vmem:[%s754 + $0x14] sm:$0x1]
        %v967 = vld [vmem:[%s754 + $0x20] sm:$0x1]
        %v968 = vld [vmem:[%s754 + $0x2c] sm:$0x1]
        %v969 = vld [vmem:[%s754 + $0x38] sm:$0x1]
        %v970 = vld [vmem:[%s754 + $0x44] sm:$0x1]
        %v971 = vld [vmem:[%s754 + $0x50] sm:$0x1]
        %v972 = vld [vmem:[%s754 + $0x5c] sm:$0x1]
        %v973 = vld [vmem:[%s754 + $0x68] sm:$0x1]
        %v974 = vld [vmem:[%s754 + $0x74] sm:$0x1]
        %v975 = vld [vmem:[%s754 + $0x80] sm:$0x1]
        %v976 = vld [vmem:[%s754 + $0x8c] sm:$0x1]
        %v977 = vld [vmem:[%s754 + $0x98] sm:$0x1]
        %v978 = vld [vmem:[%s754 + $0xa4] sm:$0x1]
        %v979 = vld [vmem:[%s754 + $0xb0] sm:$0x1]
        %v980 = vld [vmem:[%s754 + $0xbc] sm:$0x1]
        %v981 = vld [vmem:[%s754] sm:$0xe]
        %v982 = vld [vmem:[%s754 + $0xc] sm:$0xe]
        %v983 = vld [vmem:[%s754 + $0x18] sm:$0xe]
        %v984 = vld [vmem:[%s754 + $0x24] sm:$0xe]
        %v985 = vld [vmem:[%s754 + $0x30] sm:$0xe]
        %v986 = vld [vmem:[%s754 + $0x3c] sm:$0xe]
        %v987 = vld [vmem:[%s754 + $0x48] sm:$0xe]
        %v988 = vld [vmem:[%s754 + $0x54] sm:$0xe]
        %v989 = vld [vmem:[%s754 + $0x60] sm:$0xe]
        %v990 = vld [vmem:[%s754 + $0x6c] sm:$0xe]
        %v991 = vld [vmem:[%s754 + $0x78] sm:$0xe]
        %v992 = vld [vmem:[%s754 + $0x84] sm:$0xe]
        %v993 = vld [vmem:[%s754 + $0x90] sm:$0xe]
        %v994 = vld [vmem:[%s754 + $0x9c] sm:$0xe]
        %v995 = vld [vmem:[%s754 + $0xa8] sm:$0xe]
        %v996 = vld [vmem:[%s754 + $0xb4] sm:$0xe]
        %s997 = scalar_lea.vmem [#allocation2], 24
        %v998 = vld [vmem:[%s997] sm:$0xf]
        %v999 = vld [vmem:[%s997 + $0x4] sm:$0xf]
        %v1000 = vld [vmem:[%s997 + $0xc] sm:$0xf]
        %v1001 = vld [vmem:[%s997 + $0x10] sm:$0xf]
        %v1002 = vld [vmem:[%s997 + $0x18] sm:$0xf]
        %v1003 = vld [vmem:[%s997 + $0x1c] sm:$0xf]
        %v1004 = vld [vmem:[%s997 + $0x24] sm:$0xf]
        %v1005 = vld [vmem:[%s997 + $0x28] sm:$0xf]
        %v1006 = vld [vmem:[%s997 + $0x30] sm:$0xf]
        %v1007 = vld [vmem:[%s997 + $0x34] sm:$0xf]
        %v1008 = vld [vmem:[%s997 + $0x3c] sm:$0xf]
        %v1009 = vld [vmem:[%s997 + $0x40] sm:$0xf]
        %v1010 = vld [vmem:[%s997 + $0x48] sm:$0xf]
        %v1011 = vld [vmem:[%s997 + $0x4c] sm:$0xf]
        %v1012 = vld [vmem:[%s997 + $0x54] sm:$0xf]
        %v1013 = vld [vmem:[%s997 + $0x58] sm:$0xf]
        %v1014 = vld [vmem:[%s997 + $0x60] sm:$0xf]
        %v1015 = vld [vmem:[%s997 + $0x64] sm:$0xf]
        %v1016 = vld [vmem:[%s997 + $0x6c] sm:$0xf]
        %v1017 = vld [vmem:[%s997 + $0x70] sm:$0xf]
        %v1018 = vld [vmem:[%s997 + $0x78] sm:$0xf]
        %v1019 = vld [vmem:[%s997 + $0x7c] sm:$0xf]
        %v1020 = vld [vmem:[%s997 + $0x84] sm:$0xf]
        %v1021 = vld [vmem:[%s997 + $0x88] sm:$0xf]
        %v1022 = vld [vmem:[%s997 + $0x90] sm:$0xf]
        %v1023 = vld [vmem:[%s997 + $0x94] sm:$0xf]
        %v1024 = vld [vmem:[%s997 + $0x9c] sm:$0xf]
        %v1025 = vld [vmem:[%s997 + $0xa0] sm:$0xf]
        %v1026 = vld [vmem:[%s997 + $0xa8] sm:$0xf]
        %v1027 = vld [vmem:[%s997 + $0xac] sm:$0xf]
        %v1028 = vld [vmem:[%s997 + $0xb4] sm:$0xf]
        %v1029 = vld [vmem:[%s997 + $0xb8] sm:$0xf]
        %v1030 = vld [vmem:[%s997 + $0x8] sm:$0x1]
        %v1031 = vld [vmem:[%s997 + $0x14] sm:$0x1]
        %v1032 = vld [vmem:[%s997 + $0x20] sm:$0x1]
        %v1033 = vld [vmem:[%s997 + $0x2c] sm:$0x1]
        %v1034 = vld [vmem:[%s997 + $0x38] sm:$0x1]
        %v1035 = vld [vmem:[%s997 + $0x44] sm:$0x1]
        %v1036 = vld [vmem:[%s997 + $0x50] sm:$0x1]
        %v1037 = vld [vmem:[%s997 + $0x5c] sm:$0x1]
        %v1038 = vld [vmem:[%s997 + $0x68] sm:$0x1]
        %v1039 = vld [vmem:[%s997 + $0x74] sm:$0x1]
        %v1040 = vld [vmem:[%s997 + $0x80] sm:$0x1]
        %v1041 = vld [vmem:[%s997 + $0x8c] sm:$0x1]
        %v1042 = vld [vmem:[%s997 + $0x98] sm:$0x1]
        %v1043 = vld [vmem:[%s997 + $0xa4] sm:$0x1]
        %v1044 = vld [vmem:[%s997 + $0xb0] sm:$0x1]
        %v1045 = vld [vmem:[%s997 + $0xbc] sm:$0x1]
        %v1046 = vld [vmem:[%s997] sm:$0xe]
        %v1047 = vld [vmem:[%s997 + $0xc] sm:$0xe]
        %v1048 = vld [vmem:[%s997 + $0x18] sm:$0xe]
        %v1049 = vld [vmem:[%s997 + $0x24] sm:$0xe]
        %v1050 = vld [vmem:[%s997 + $0x30] sm:$0xe]
        %v1051 = vld [vmem:[%s997 + $0x3c] sm:$0xe]
        %v1052 = vld [vmem:[%s997 + $0x48] sm:$0xe]
        %v1053 = vld [vmem:[%s997 + $0x54] sm:$0xe]
        %v1054 = vld [vmem:[%s997 + $0x60] sm:$0xe]
        %v1055 = vld [vmem:[%s997 + $0x6c] sm:$0xe]
        %v1056 = vld [vmem:[%s997 + $0x78] sm:$0xe]
        %v1057 = vld [vmem:[%s997 + $0x84] sm:$0xe]
        %v1058 = vld [vmem:[%s997 + $0x90] sm:$0xe]
        %v1059 = vld [vmem:[%s997 + $0x9c] sm:$0xe]
        %v1060 = vld [vmem:[%s997 + $0xa8] sm:$0xe]
        %v1061 = vld [vmem:[%s997 + $0xb4] sm:$0xe]
        %v1094 = vunpack.c.l.b16 %v869
        %v1095 = vunpack.c.l.b16 %v870
        %v1096 = vunpack.c.l.b16 %v871
        %v1097 = vunpack.c.l.b16 %v872
        %v1098 = vunpack.c.l.b16 %v873
        %v1099 = vunpack.c.l.b16 %v874
        %v1100 = vunpack.c.l.b16 %v875
        %v1101 = vunpack.c.l.b16 %v876
        %v1102 = vunpack.c.l.b16 %v877
        %v1103 = vunpack.c.l.b16 %v878
        %v1104 = vunpack.c.l.b16 %v879
        %v1105 = vunpack.c.l.b16 %v880
        %v1106 = vunpack.c.l.b16 %v881
        %v1107 = vunpack.c.l.b16 %v882
        %v1108 = vunpack.c.l.b16 %v883
        %v1109 = vunpack.c.l.b16 %v884
        %v1110 = vunpack.c.l.b16 %v885
        %v1111 = vunpack.c.l.b16 %v886
        %v1112 = vunpack.c.l.b16 %v887
        %v1113 = vunpack.c.l.b16 %v888
        %v1114 = vunpack.c.l.b16 %v889
        %v1115 = vunpack.c.l.b16 %v890
        %v1116 = vunpack.c.l.b16 %v891
        %v1117 = vunpack.c.l.b16 %v892
        %v1118 = vunpack.c.l.b16 %v893
        %v1119 = vunpack.c.l.b16 %v894
        %v1120 = vunpack.c.l.b16 %v895
        %v1121 = vunpack.c.l.b16 %v896
        %v1122 = vunpack.c.l.b16 %v897
        %v1123 = vunpack.c.l.b16 %v898
        %v1124 = vunpack.c.l.b16 %v899
        %v1125 = vunpack.c.l.b16 %v900
        %v1126 = vpack.c.b16 %v1095, %v1094
        %v1127 = vpack.c.b16 %v1097, %v1096
        %v1128 = vpack.c.b16 %v1099, %v1098
        %v1129 = vpack.c.b16 %v1101, %v1100
        %v1130 = vpack.c.b16 %v1103, %v1102
        %v1131 = vpack.c.b16 %v1105, %v1104
        %v1132 = vpack.c.b16 %v1107, %v1106
        %v1133 = vpack.c.b16 %v1109, %v1108
        %v1134 = vpack.c.b16 %v1111, %v1110
        %v1135 = vpack.c.b16 %v1113, %v1112
        %v1136 = vpack.c.b16 %v1115, %v1114
        %v1137 = vpack.c.b16 %v1117, %v1116
        %v1138 = vpack.c.b16 %v1119, %v1118
        %v1139 = vpack.c.b16 %v1121, %v1120
        %v1140 = vpack.c.b16 %v1123, %v1122
        %v1141 = vpack.c.b16 %v1125, %v1124
        %v1158 = vunpack.c.l.b16 %v901
        %v1159 = vunpack.c.l.b16 %v902
        %v1160 = vunpack.c.l.b16 %v903
        %v1161 = vunpack.c.l.b16 %v904
        %v1162 = vunpack.c.l.b16 %v905
        %v1163 = vunpack.c.l.b16 %v906
        %v1164 = vunpack.c.l.b16 %v907
        %v1165 = vunpack.c.l.b16 %v908
        %v1166 = vunpack.c.l.b16 %v909
        %v1167 = vunpack.c.l.b16 %v910
        %v1168 = vunpack.c.l.b16 %v911
        %v1169 = vunpack.c.l.b16 %v912
        %v1170 = vunpack.c.l.b16 %v913
        %v1171 = vunpack.c.l.b16 %v914
        %v1172 = vunpack.c.l.b16 %v915
        %v1173 = vunpack.c.l.b16 %v916
        %v1174 = vpack.c.b16 %v1158, %v1158
        %v1175 = vpack.c.b16 %v1159, %v1159
        %v1176 = vpack.c.b16 %v1160, %v1160
        %v1177 = vpack.c.b16 %v1161, %v1161
        %v1178 = vpack.c.b16 %v1162, %v1162
        %v1179 = vpack.c.b16 %v1163, %v1163
        %v1180 = vpack.c.b16 %v1164, %v1164
        %v1181 = vpack.c.b16 %v1165, %v1165
        %v1182 = vpack.c.b16 %v1166, %v1166
        %v1183 = vpack.c.b16 %v1167, %v1167
        %v1184 = vpack.c.b16 %v1168, %v1168
        %v1185 = vpack.c.b16 %v1169, %v1169
        %v1186 = vpack.c.b16 %v1170, %v1170
        %v1187 = vpack.c.b16 %v1171, %v1171
        %v1188 = vpack.c.b16 %v1172, %v1172
        %v1189 = vpack.c.b16 %v1173, %v1173
        %vm1190 = vsmask.f32 7424
        %v1192 = vshrl.u32 %v1126, 16
        %v1194 = vshll.u32 %v1126, 16
        %v1196 = vrot.slane %v1194, 1
        %v1197 = vor.u32 %v1192, %v1196
        %v1199 = vshll.u32 %v1174, 16
        %v1201 = vrot.slane %v1199, 1
        %v1202 = vsel %vm1190, %v1197, %v1201
        %v1204 = vshrl.u32 %v1127, 16
        %v1206 = vshll.u32 %v1127, 16
        %v1208 = vrot.slane %v1206, 1
        %v1209 = vor.u32 %v1204, %v1208
        %v1211 = vshll.u32 %v1175, 16
        %v1213 = vrot.slane %v1211, 1
        %v1214 = vsel %vm1190, %v1209, %v1213
        %v1216 = vshrl.u32 %v1128, 16
        %v1218 = vshll.u32 %v1128, 16
        %v1220 = vrot.slane %v1218, 1
        %v1221 = vor.u32 %v1216, %v1220
        %v1223 = vshll.u32 %v1176, 16
        %v1225 = vrot.slane %v1223, 1
        %v1226 = vsel %vm1190, %v1221, %v1225
        %v1228 = vshrl.u32 %v1129, 16
        %v1230 = vshll.u32 %v1129, 16
        %v1232 = vrot.slane %v1230, 1
        %v1233 = vor.u32 %v1228, %v1232
        %v1235 = vshll.u32 %v1177, 16
        %v1237 = vrot.slane %v1235, 1
        %v1238 = vsel %vm1190, %v1233, %v1237
        %v1240 = vshrl.u32 %v1130, 16
        %v1242 = vshll.u32 %v1130, 16
        %v1244 = vrot.slane %v1242, 1
        %v1245 = vor.u32 %v1240, %v1244
        %v1247 = vshll.u32 %v1178, 16
        %v1249 = vrot.slane %v1247, 1
        %v1250 = vsel %vm1190, %v1245, %v1249
        %v1252 = vshrl.u32 %v1131, 16
        %v1254 = vshll.u32 %v1131, 16
        %v1256 = vrot.slane %v1254, 1
        %v1257 = vor.u32 %v1252, %v1256
        %v1259 = vshll.u32 %v1179, 16
        %v1261 = vrot.slane %v1259, 1
        %v1262 = vsel %vm1190, %v1257, %v1261
        %v1264 = vshrl.u32 %v1132, 16
        %v1266 = vshll.u32 %v1132, 16
        %v1268 = vrot.slane %v1266, 1
        %v1269 = vor.u32 %v1264, %v1268
        %v1271 = vshll.u32 %v1180, 16
        %v1273 = vrot.slane %v1271, 1
        %v1274 = vsel %vm1190, %v1269, %v1273
        %v1276 = vshrl.u32 %v1133, 16
        %v1278 = vshll.u32 %v1133, 16
        %v1280 = vrot.slane %v1278, 1
        %v1281 = vor.u32 %v1276, %v1280
        %v1283 = vshll.u32 %v1181, 16
        %v1285 = vrot.slane %v1283, 1
        %v1286 = vsel %vm1190, %v1281, %v1285
        %v1288 = vshrl.u32 %v1134, 16
        %v1290 = vshll.u32 %v1134, 16
        %v1292 = vrot.slane %v1290, 1
        %v1293 = vor.u32 %v1288, %v1292
        %v1295 = vshll.u32 %v1182, 16
        %v1297 = vrot.slane %v1295, 1
        %v1298 = vsel %vm1190, %v1293, %v1297
        %v1300 = vshrl.u32 %v1135, 16
        %v1302 = vshll.u32 %v1135, 16
        %v1304 = vrot.slane %v1302, 1
        %v1305 = vor.u32 %v1300, %v1304
        %v1307 = vshll.u32 %v1183, 16
        %v1309 = vrot.slane %v1307, 1
        %v1310 = vsel %vm1190, %v1305, %v1309
        %v1312 = vshrl.u32 %v1136, 16
        %v1314 = vshll.u32 %v1136, 16
        %v1316 = vrot.slane %v1314, 1
        %v1317 = vor.u32 %v1312, %v1316
        %v1319 = vshll.u32 %v1184, 16
        %v1321 = vrot.slane %v1319, 1
        %v1322 = vsel %vm1190, %v1317, %v1321
        %v1324 = vshrl.u32 %v1137, 16
        %v1326 = vshll.u32 %v1137, 16
        %v1328 = vrot.slane %v1326, 1
        %v1329 = vor.u32 %v1324, %v1328
        %v1331 = vshll.u32 %v1185, 16
        %v1333 = vrot.slane %v1331, 1
        %v1334 = vsel %vm1190, %v1329, %v1333
        %v1336 = vshrl.u32 %v1138, 16
        %v1338 = vshll.u32 %v1138, 16
        %v1340 = vrot.slane %v1338, 1
        %v1341 = vor.u32 %v1336, %v1340
        %v1343 = vshll.u32 %v1186, 16
        %v1345 = vrot.slane %v1343, 1
        %v1346 = vsel %vm1190, %v1341, %v1345
        %v1348 = vshrl.u32 %v1139, 16
        %v1350 = vshll.u32 %v1139, 16
        %v1352 = vrot.slane %v1350, 1
        %v1353 = vor.u32 %v1348, %v1352
        %v1355 = vshll.u32 %v1187, 16
        %v1357 = vrot.slane %v1355, 1
        %v1358 = vsel %vm1190, %v1353, %v1357
        %v1360 = vshrl.u32 %v1140, 16
        %v1362 = vshll.u32 %v1140, 16
        %v1364 = vrot.slane %v1362, 1
        %v1365 = vor.u32 %v1360, %v1364
        %v1367 = vshll.u32 %v1188, 16
        %v1369 = vrot.slane %v1367, 1
        %v1370 = vsel %vm1190, %v1365, %v1369
        %v1372 = vshrl.u32 %v1141, 16
        %v1374 = vshll.u32 %v1141, 16
        %v1376 = vrot.slane %v1374, 1
        %v1377 = vor.u32 %v1372, %v1376
        %v1379 = vshll.u32 %v1189, 16
        %v1381 = vrot.slane %v1379, 1
        %v1382 = vsel %vm1190, %v1377, %v1381
        %1383 = vrot.lane.b32.xlu0 %v1202, 4
        %v1384 = vpop.permute.xlu0 %1383
        %1385 = vrot.lane.b32.xlu0 %v1214, 4
        %v1386 = vpop.permute.xlu0 %1385
        %1387 = vrot.lane.b32.xlu0 %v1226, 4
        %v1388 = vpop.permute.xlu0 %1387
        %1389 = vrot.lane.b32.xlu0 %v1238, 4
        %v1390 = vpop.permute.xlu0 %1389
        %1391 = vrot.lane.b32.xlu0 %v1250, 4
        %v1392 = vpop.permute.xlu0 %1391
        %1393 = vrot.lane.b32.xlu0 %v1262, 4
        %v1394 = vpop.permute.xlu0 %1393
        %1395 = vrot.lane.b32.xlu0 %v1274, 4
        %v1396 = vpop.permute.xlu0 %1395
        %1397 = vrot.lane.b32.xlu0 %v1286, 4
        %v1398 = vpop.permute.xlu0 %1397
        %1399 = vrot.lane.b32.xlu0 %v1298, 4
        %v1400 = vpop.permute.xlu0 %1399
        %1401 = vrot.lane.b32.xlu0 %v1310, 4
        %v1402 = vpop.permute.xlu0 %1401
        %1403 = vrot.lane.b32.xlu0 %v1322, 4
        %v1404 = vpop.permute.xlu0 %1403
        %1405 = vrot.lane.b32.xlu0 %v1334, 4
        %v1406 = vpop.permute.xlu0 %1405
        %1407 = vrot.lane.b32.xlu0 %v1346, 4
        %v1408 = vpop.permute.xlu0 %1407
        %1409 = vrot.lane.b32.xlu0 %v1358, 4
        %v1410 = vpop.permute.xlu0 %1409
        %1411 = vrot.lane.b32.xlu0 %v1370, 4
        %v1412 = vpop.permute.xlu0 %1411
        %1413 = vrot.lane.b32.xlu0 %v1382, 4
        %v1414 = vpop.permute.xlu0 %1413
        %v1431 = vunpack.c.l.b16 %v917
        %v1432 = vunpack.c.l.b16 %v918
        %v1433 = vunpack.c.l.b16 %v919
        %v1434 = vunpack.c.l.b16 %v920
        %v1435 = vunpack.c.l.b16 %v921
        %v1436 = vunpack.c.l.b16 %v922
        %v1437 = vunpack.c.l.b16 %v923
        %v1438 = vunpack.c.l.b16 %v924
        %v1439 = vunpack.c.l.b16 %v925
        %v1440 = vunpack.c.l.b16 %v926
        %v1441 = vunpack.c.l.b16 %v927
        %v1442 = vunpack.c.l.b16 %v928
        %v1443 = vunpack.c.l.b16 %v929
        %v1444 = vunpack.c.l.b16 %v930
        %v1445 = vunpack.c.l.b16 %v931
        %v1446 = vunpack.c.l.b16 %v932
        %v1447 = vpack.c.b16 %v1095, %v1431
        %v1448 = vpack.c.b16 %v1097, %v1432
        %v1449 = vpack.c.b16 %v1099, %v1433
        %v1450 = vpack.c.b16 %v1101, %v1434
        %v1451 = vpack.c.b16 %v1103, %v1435
        %v1452 = vpack.c.b16 %v1105, %v1436
        %v1453 = vpack.c.b16 %v1107, %v1437
        %v1454 = vpack.c.b16 %v1109, %v1438
        %v1455 = vpack.c.b16 %v1111, %v1439
        %v1456 = vpack.c.b16 %v1113, %v1440
        %v1457 = vpack.c.b16 %v1115, %v1441
        %v1458 = vpack.c.b16 %v1117, %v1442
        %v1459 = vpack.c.b16 %v1119, %v1443
        %v1460 = vpack.c.b16 %v1121, %v1444
        %v1461 = vpack.c.b16 %v1123, %v1445
        %v1462 = vpack.c.b16 %v1125, %v1446
        %vm1463 = vcmask 1046528
        %v1464 = vrot.slane %v1447, 1
        %v1465 = vrot.slane %v1174, 1
        %v1466 = vsel %vm1463, %v1464, %v1465
        %v1467 = vrot.slane %v1448, 1
        %v1468 = vrot.slane %v1175, 1
        %v1469 = vsel %vm1463, %v1467, %v1468
        %v1470 = vrot.slane %v1449, 1
        %v1471 = vrot.slane %v1176, 1
        %v1472 = vsel %vm1463, %v1470, %v1471
        %v1473 = vrot.slane %v1450, 1
        %v1474 = vrot.slane %v1177, 1
        %v1475 = vsel %vm1463, %v1473, %v1474
        %v1476 = vrot.slane %v1451, 1
        %v1477 = vrot.slane %v1178, 1
        %v1478 = vsel %vm1463, %v1476, %v1477
        %v1479 = vrot.slane %v1452, 1
        %v1480 = vrot.slane %v1179, 1
        %v1481 = vsel %vm1463, %v1479, %v1480
        %v1482 = vrot.slane %v1453, 1
        %v1483 = vrot.slane %v1180, 1
        %v1484 = vsel %vm1463, %v1482, %v1483
        %v1485 = vrot.slane %v1454, 1
        %v1486 = vrot.slane %v1181, 1
        %v1487 = vsel %vm1463, %v1485, %v1486
        %v1488 = vrot.slane %v1455, 1
        %v1489 = vrot.slane %v1182, 1
        %v1490 = vsel %vm1463, %v1488, %v1489
        %v1491 = vrot.slane %v1456, 1
        %v1492 = vrot.slane %v1183, 1
        %v1493 = vsel %vm1463, %v1491, %v1492
        %v1494 = vrot.slane %v1457, 1
        %v1495 = vrot.slane %v1184, 1
        %v1496 = vsel %vm1463, %v1494, %v1495
        %v1497 = vrot.slane %v1458, 1
        %v1498 = vrot.slane %v1185, 1
        %v1499 = vsel %vm1463, %v1497, %v1498
        %v1500 = vrot.slane %v1459, 1
        %v1501 = vrot.slane %v1186, 1
        %v1502 = vsel %vm1463, %v1500, %v1501
        %v1503 = vrot.slane %v1460, 1
        %v1504 = vrot.slane %v1187, 1
        %v1505 = vsel %vm1463, %v1503, %v1504
        %v1506 = vrot.slane %v1461, 1
        %v1507 = vrot.slane %v1188, 1
        %v1508 = vsel %vm1463, %v1506, %v1507
        %v1509 = vrot.slane %v1462, 1
        %v1510 = vrot.slane %v1189, 1
        %v1511 = vsel %vm1463, %v1509, %v1510
        %1512 = vrot.lane.b32.xlu0 %v1466, 8
        %v1513 = vpop.permute.xlu0 %1512
        %1514 = vrot.lane.b32.xlu0 %v1469, 8
        %v1515 = vpop.permute.xlu0 %1514
        %1516 = vrot.lane.b32.xlu0 %v1472, 8
        %v1517 = vpop.permute.xlu0 %1516
        %1518 = vrot.lane.b32.xlu0 %v1475, 8
        %v1519 = vpop.permute.xlu0 %1518
        %1520 = vrot.lane.b32.xlu0 %v1478, 8
        %v1521 = vpop.permute.xlu0 %1520
        %1522 = vrot.lane.b32.xlu0 %v1481, 8
        %v1523 = vpop.permute.xlu0 %1522
        %1524 = vrot.lane.b32.xlu0 %v1484, 8
        %v1525 = vpop.permute.xlu0 %1524
        %1526 = vrot.lane.b32.xlu0 %v1487, 8
        %v1527 = vpop.permute.xlu0 %1526
        %1528 = vrot.lane.b32.xlu0 %v1490, 8
        %v1529 = vpop.permute.xlu0 %1528
        %1530 = vrot.lane.b32.xlu0 %v1493, 8
        %v1531 = vpop.permute.xlu0 %1530
        %1532 = vrot.lane.b32.xlu0 %v1496, 8
        %v1533 = vpop.permute.xlu0 %1532
        %1534 = vrot.lane.b32.xlu0 %v1499, 8
        %v1535 = vpop.permute.xlu0 %1534
        %1536 = vrot.lane.b32.xlu0 %v1502, 8
        %v1537 = vpop.permute.xlu0 %1536
        %1538 = vrot.lane.b32.xlu0 %v1505, 8
        %v1539 = vpop.permute.xlu0 %1538
        %1540 = vrot.lane.b32.xlu0 %v1508, 8
        %v1541 = vpop.permute.xlu0 %1540
        %1542 = vrot.lane.b32.xlu0 %v1511, 8
        %v1543 = vpop.permute.xlu0 %1542
        %v1576 = vunpack.c.l.b16 %v933
        %v1577 = vunpack.c.l.b16 %v934
        %v1578 = vunpack.c.l.b16 %v935
        %v1579 = vunpack.c.l.b16 %v936
        %v1580 = vunpack.c.l.b16 %v937
        %v1581 = vunpack.c.l.b16 %v938
        %v1582 = vunpack.c.l.b16 %v939
        %v1583 = vunpack.c.l.b16 %v940
        %v1584 = vunpack.c.l.b16 %v941
        %v1585 = vunpack.c.l.b16 %v942
        %v1586 = vunpack.c.l.b16 %v943
        %v1587 = vunpack.c.l.b16 %v944
        %v1588 = vunpack.c.l.b16 %v945
        %v1589 = vunpack.c.l.b16 %v946
        %v1590 = vunpack.c.l.b16 %v947
        %v1591 = vunpack.c.l.b16 %v948
        %v1592 = vunpack.c.l.b16 %v949
        %v1593 = vunpack.c.l.b16 %v950
        %v1594 = vunpack.c.l.b16 %v951
        %v1595 = vunpack.c.l.b16 %v952
        %v1596 = vunpack.c.l.b16 %v953
        %v1597 = vunpack.c.l.b16 %v954
        %v1598 = vunpack.c.l.b16 %v955
        %v1599 = vunpack.c.l.b16 %v956
        %v1600 = vunpack.c.l.b16 %v957
        %v1601 = vunpack.c.l.b16 %v958
        %v1602 = vunpack.c.l.b16 %v959
        %v1603 = vunpack.c.l.b16 %v960
        %v1604 = vunpack.c.l.b16 %v961
        %v1605 = vunpack.c.l.b16 %v962
        %v1606 = vunpack.c.l.b16 %v963
        %v1607 = vunpack.c.l.b16 %v964
        %v1608 = vpack.c.b16 %v1577, %v1576
        %v1609 = vpack.c.b16 %v1579, %v1578
        %v1610 = vpack.c.b16 %v1581, %v1580
        %v1611 = vpack.c.b16 %v1583, %v1582
        %v1612 = vpack.c.b16 %v1585, %v1584
        %v1613 = vpack.c.b16 %v1587, %v1586
        %v1614 = vpack.c.b16 %v1589, %v1588
        %v1615 = vpack.c.b16 %v1591, %v1590
        %v1616 = vpack.c.b16 %v1593, %v1592
        %v1617 = vpack.c.b16 %v1595, %v1594
        %v1618 = vpack.c.b16 %v1597, %v1596
        %v1619 = vpack.c.b16 %v1599, %v1598
        %v1620 = vpack.c.b16 %v1601, %v1600
        %v1621 = vpack.c.b16 %v1603, %v1602
        %v1622 = vpack.c.b16 %v1605, %v1604
        %v1623 = vpack.c.b16 %v1607, %v1606
        %1624 = vrot.lane.b32.xlu0 %v1608, 12
        %v1625 = vpop.permute.xlu0 %1624
        %1626 = vrot.lane.b32.xlu0 %v1609, 12
        %v1627 = vpop.permute.xlu0 %1626
        %1628 = vrot.lane.b32.xlu0 %v1610, 12
        %v1629 = vpop.permute.xlu0 %1628
        %1630 = vrot.lane.b32.xlu0 %v1611, 12
        %v1631 = vpop.permute.xlu0 %1630
        %1632 = vrot.lane.b32.xlu0 %v1612, 12
        %v1633 = vpop.permute.xlu0 %1632
        %1634 = vrot.lane.b32.xlu0 %v1613, 12
        %v1635 = vpop.permute.xlu0 %1634
        %1636 = vrot.lane.b32.xlu0 %v1614, 12
        %v1637 = vpop.permute.xlu0 %1636
        %1638 = vrot.lane.b32.xlu0 %v1615, 12
        %v1639 = vpop.permute.xlu0 %1638
        %1640 = vrot.lane.b32.xlu0 %v1616, 12
        %v1641 = vpop.permute.xlu0 %1640
        %1642 = vrot.lane.b32.xlu0 %v1617, 12
        %v1643 = vpop.permute.xlu0 %1642
        %1644 = vrot.lane.b32.xlu0 %v1618, 12
        %v1645 = vpop.permute.xlu0 %1644
        %1646 = vrot.lane.b32.xlu0 %v1619, 12
        %v1647 = vpop.permute.xlu0 %1646
        %1648 = vrot.lane.b32.xlu0 %v1620, 12
        %v1649 = vpop.permute.xlu0 %1648
        %1650 = vrot.lane.b32.xlu0 %v1621, 12
        %v1651 = vpop.permute.xlu0 %1650
        %1652 = vrot.lane.b32.xlu0 %v1622, 12
        %v1653 = vpop.permute.xlu0 %1652
        %1654 = vrot.lane.b32.xlu0 %v1623, 12
        %v1655 = vpop.permute.xlu0 %1654
        %v1672 = vunpack.c.l.b16 %v965
        %v1673 = vunpack.c.l.b16 %v966
        %v1674 = vunpack.c.l.b16 %v967
        %v1675 = vunpack.c.l.b16 %v968
        %v1676 = vunpack.c.l.b16 %v969
        %v1677 = vunpack.c.l.b16 %v970
        %v1678 = vunpack.c.l.b16 %v971
        %v1679 = vunpack.c.l.b16 %v972
        %v1680 = vunpack.c.l.b16 %v973
        %v1681 = vunpack.c.l.b16 %v974
        %v1682 = vunpack.c.l.b16 %v975
        %v1683 = vunpack.c.l.b16 %v976
        %v1684 = vunpack.c.l.b16 %v977
        %v1685 = vunpack.c.l.b16 %v978
        %v1686 = vunpack.c.l.b16 %v979
        %v1687 = vunpack.c.l.b16 %v980
        %v1688 = vpack.c.b16 %v1672, %v1672
        %v1689 = vpack.c.b16 %v1673, %v1673
        %v1690 = vpack.c.b16 %v1674, %v1674
        %v1691 = vpack.c.b16 %v1675, %v1675
        %v1692 = vpack.c.b16 %v1676, %v1676
        %v1693 = vpack.c.b16 %v1677, %v1677
        %v1694 = vpack.c.b16 %v1678, %v1678
        %v1695 = vpack.c.b16 %v1679, %v1679
        %v1696 = vpack.c.b16 %v1680, %v1680
        %v1697 = vpack.c.b16 %v1681, %v1681
        %v1698 = vpack.c.b16 %v1682, %v1682
        %v1699 = vpack.c.b16 %v1683, %v1683
        %v1700 = vpack.c.b16 %v1684, %v1684
        %v1701 = vpack.c.b16 %v1685, %v1685
        %v1702 = vpack.c.b16 %v1686, %v1686
        %v1703 = vpack.c.b16 %v1687, %v1687
        %v1705 = vshrl.u32 %v1608, 16
        %v1707 = vshll.u32 %v1608, 16
        %v1709 = vrot.slane %v1707, 1
        %v1710 = vor.u32 %v1705, %v1709
        %v1712 = vshll.u32 %v1688, 16
        %v1714 = vrot.slane %v1712, 1
        %v1715 = vsel %vm1190, %v1710, %v1714
        %v1717 = vshrl.u32 %v1609, 16
        %v1719 = vshll.u32 %v1609, 16
        %v1721 = vrot.slane %v1719, 1
        %v1722 = vor.u32 %v1717, %v1721
        %v1724 = vshll.u32 %v1689, 16
        %v1726 = vrot.slane %v1724, 1
        %v1727 = vsel %vm1190, %v1722, %v1726
        %v1729 = vshrl.u32 %v1610, 16
        %v1731 = vshll.u32 %v1610, 16
        %v1733 = vrot.slane %v1731, 1
        %v1734 = vor.u32 %v1729, %v1733
        %v1736 = vshll.u32 %v1690, 16
        %v1738 = vrot.slane %v1736, 1
        %v1739 = vsel %vm1190, %v1734, %v1738
        %v1741 = vshrl.u32 %v1611, 16
        %v1743 = vshll.u32 %v1611, 16
        %v1745 = vrot.slane %v1743, 1
        %v1746 = vor.u32 %v1741, %v1745
        %v1748 = vshll.u32 %v1691, 16
        %v1750 = vrot.slane %v1748, 1
        %v1751 = vsel %vm1190, %v1746, %v1750
        %v1753 = vshrl.u32 %v1612, 16
        %v1755 = vshll.u32 %v1612, 16
        %v1757 = vrot.slane %v1755, 1
        %v1758 = vor.u32 %v1753, %v1757
        %v1760 = vshll.u32 %v1692, 16
        %v1762 = vrot.slane %v1760, 1
        %v1763 = vsel %vm1190, %v1758, %v1762
        %v1765 = vshrl.u32 %v1613, 16
        %v1767 = vshll.u32 %v1613, 16
        %v1769 = vrot.slane %v1767, 1
        %v1770 = vor.u32 %v1765, %v1769
        %v1772 = vshll.u32 %v1693, 16
        %v1774 = vrot.slane %v1772, 1
        %v1775 = vsel %vm1190, %v1770, %v1774
        %v1777 = vshrl.u32 %v1614, 16
        %v1779 = vshll.u32 %v1614, 16
        %v1781 = vrot.slane %v1779, 1
        %v1782 = vor.u32 %v1777, %v1781
        %v1784 = vshll.u32 %v1694, 16
        %v1786 = vrot.slane %v1784, 1
        %v1787 = vsel %vm1190, %v1782, %v1786
        %v1789 = vshrl.u32 %v1615, 16
        %v1791 = vshll.u32 %v1615, 16
        %v1793 = vrot.slane %v1791, 1
        %v1794 = vor.u32 %v1789, %v1793
        %v1796 = vshll.u32 %v1695, 16
        %v1798 = vrot.slane %v1796, 1
        %v1799 = vsel %vm1190, %v1794, %v1798
        %v1801 = vshrl.u32 %v1616, 16
        %v1803 = vshll.u32 %v1616, 16
        %v1805 = vrot.slane %v1803, 1
        %v1806 = vor.u32 %v1801, %v1805
        %v1808 = vshll.u32 %v1696, 16
        %v1810 = vrot.slane %v1808, 1
        %v1811 = vsel %vm1190, %v1806, %v1810
        %v1813 = vshrl.u32 %v1617, 16
        %v1815 = vshll.u32 %v1617, 16
        %v1817 = vrot.slane %v1815, 1
        %v1818 = vor.u32 %v1813, %v1817
        %v1820 = vshll.u32 %v1697, 16
        %v1822 = vrot.slane %v1820, 1
        %v1823 = vsel %vm1190, %v1818, %v1822
        %v1825 = vshrl.u32 %v1618, 16
        %v1827 = vshll.u32 %v1618, 16
        %v1829 = vrot.slane %v1827, 1
        %v1830 = vor.u32 %v1825, %v1829
        %v1832 = vshll.u32 %v1698, 16
        %v1834 = vrot.slane %v1832, 1
        %v1835 = vsel %vm1190, %v1830, %v1834
        %v1837 = vshrl.u32 %v1619, 16
        %v1839 = vshll.u32 %v1619, 16
        %v1841 = vrot.slane %v1839, 1
        %v1842 = vor.u32 %v1837, %v1841
        %v1844 = vshll.u32 %v1699, 16
        %v1846 = vrot.slane %v1844, 1
        %v1847 = vsel %vm1190, %v1842, %v1846
        %v1849 = vshrl.u32 %v1620, 16
        %v1851 = vshll.u32 %v1620, 16
        %v1853 = vrot.slane %v1851, 1
        %v1854 = vor.u32 %v1849, %v1853
        %v1856 = vshll.u32 %v1700, 16
        %v1858 = vrot.slane %v1856, 1
        %v1859 = vsel %vm1190, %v1854, %v1858
        %v1861 = vshrl.u32 %v1621, 16
        %v1863 = vshll.u32 %v1621, 16
        %v1865 = vrot.slane %v1863, 1
        %v1866 = vor.u32 %v1861, %v1865
        %v1868 = vshll.u32 %v1701, 16
        %v1870 = vrot.slane %v1868, 1
        %v1871 = vsel %vm1190, %v1866, %v1870
        %v1873 = vshrl.u32 %v1622, 16
        %v1875 = vshll.u32 %v1622, 16
        %v1877 = vrot.slane %v1875, 1
        %v1878 = vor.u32 %v1873, %v1877
        %v1880 = vshll.u32 %v1702, 16
        %v1882 = vrot.slane %v1880, 1
        %v1883 = vsel %vm1190, %v1878, %v1882
        %v1885 = vshrl.u32 %v1623, 16
        %v1887 = vshll.u32 %v1623, 16
        %v1889 = vrot.slane %v1887, 1
        %v1890 = vor.u32 %v1885, %v1889
        %v1892 = vshll.u32 %v1703, 16
        %v1894 = vrot.slane %v1892, 1
        %v1895 = vsel %vm1190, %v1890, %v1894
        %1896 = vrot.lane.b32.xlu0 %v1715, 16
        %v1897 = vpop.permute.xlu0 %1896
        %1898 = vrot.lane.b32.xlu0 %v1727, 16
        %v1899 = vpop.permute.xlu0 %1898
        %1900 = vrot.lane.b32.xlu0 %v1739, 16
        %v1901 = vpop.permute.xlu0 %1900
        %1902 = vrot.lane.b32.xlu0 %v1751, 16
        %v1903 = vpop.permute.xlu0 %1902
        %1904 = vrot.lane.b32.xlu0 %v1763, 16
        %v1905 = vpop.permute.xlu0 %1904
        %1906 = vrot.lane.b32.xlu0 %v1775, 16
        %v1907 = vpop.permute.xlu0 %1906
        %1908 = vrot.lane.b32.xlu0 %v1787, 16
        %v1909 = vpop.permute.xlu0 %1908
        %1910 = vrot.lane.b32.xlu0 %v1799, 16
        %v1911 = vpop.permute.xlu0 %1910
        %1912 = vrot.lane.b32.xlu0 %v1811, 16
        %v1913 = vpop.permute.xlu0 %1912
        %1914 = vrot.lane.b32.xlu0 %v1823, 16
        %v1915 = vpop.permute.xlu0 %1914
        %1916 = vrot.lane.b32.xlu0 %v1835, 16
        %v1917 = vpop.permute.xlu0 %1916
        %1918 = vrot.lane.b32.xlu0 %v1847, 16
        %v1919 = vpop.permute.xlu0 %1918
        %1920 = vrot.lane.b32.xlu0 %v1859, 16
        %v1921 = vpop.permute.xlu0 %1920
        %1922 = vrot.lane.b32.xlu0 %v1871, 16
        %v1923 = vpop.permute.xlu0 %1922
        %1924 = vrot.lane.b32.xlu0 %v1883, 16
        %v1925 = vpop.permute.xlu0 %1924
        %1926 = vrot.lane.b32.xlu0 %v1895, 16
        %v1927 = vpop.permute.xlu0 %1926
        %v1944 = vunpack.c.l.b16 %v981
        %v1945 = vunpack.c.l.b16 %v982
        %v1946 = vunpack.c.l.b16 %v983
        %v1947 = vunpack.c.l.b16 %v984
        %v1948 = vunpack.c.l.b16 %v985
        %v1949 = vunpack.c.l.b16 %v986
        %v1950 = vunpack.c.l.b16 %v987
        %v1951 = vunpack.c.l.b16 %v988
        %v1952 = vunpack.c.l.b16 %v989
        %v1953 = vunpack.c.l.b16 %v990
        %v1954 = vunpack.c.l.b16 %v991
        %v1955 = vunpack.c.l.b16 %v992
        %v1956 = vunpack.c.l.b16 %v993
        %v1957 = vunpack.c.l.b16 %v994
        %v1958 = vunpack.c.l.b16 %v995
        %v1959 = vunpack.c.l.b16 %v996
        %v1960 = vpack.c.b16 %v1577, %v1944
        %v1961 = vpack.c.b16 %v1579, %v1945
        %v1962 = vpack.c.b16 %v1581, %v1946
        %v1963 = vpack.c.b16 %v1583, %v1947
        %v1964 = vpack.c.b16 %v1585, %v1948
        %v1965 = vpack.c.b16 %v1587, %v1949
        %v1966 = vpack.c.b16 %v1589, %v1950
        %v1967 = vpack.c.b16 %v1591, %v1951
        %v1968 = vpack.c.b16 %v1593, %v1952
        %v1969 = vpack.c.b16 %v1595, %v1953
        %v1970 = vpack.c.b16 %v1597, %v1954
        %v1971 = vpack.c.b16 %v1599, %v1955
        %v1972 = vpack.c.b16 %v1601, %v1956
        %v1973 = vpack.c.b16 %v1603, %v1957
        %v1974 = vpack.c.b16 %v1605, %v1958
        %v1975 = vpack.c.b16 %v1607, %v1959
        %v1976 = vrot.slane %v1960, 1
        %v1977 = vrot.slane %v1688, 1
        %v1978 = vsel %vm1463, %v1976, %v1977
        %v1979 = vrot.slane %v1961, 1
        %v1980 = vrot.slane %v1689, 1
        %v1981 = vsel %vm1463, %v1979, %v1980
        %v1982 = vrot.slane %v1962, 1
        %v1983 = vrot.slane %v1690, 1
        %v1984 = vsel %vm1463, %v1982, %v1983
        %v1985 = vrot.slane %v1963, 1
        %v1986 = vrot.slane %v1691, 1
        %v1987 = vsel %vm1463, %v1985, %v1986
        %v1988 = vrot.slane %v1964, 1
        %v1989 = vrot.slane %v1692, 1
        %v1990 = vsel %vm1463, %v1988, %v1989
        %v1991 = vrot.slane %v1965, 1
        %v1992 = vrot.slane %v1693, 1
        %v1993 = vsel %vm1463, %v1991, %v1992
        %v1994 = vrot.slane %v1966, 1
        %v1995 = vrot.slane %v1694, 1
        %v1996 = vsel %vm1463, %v1994, %v1995
        %v1997 = vrot.slane %v1967, 1
        %v1998 = vrot.slane %v1695, 1
        %v1999 = vsel %vm1463, %v1997, %v1998
        %v2000 = vrot.slane %v1968, 1
        %v2001 = vrot.slane %v1696, 1
        %v2002 = vsel %vm1463, %v2000, %v2001
        %v2003 = vrot.slane %v1969, 1
        %v2004 = vrot.slane %v1697, 1
        %v2005 = vsel %vm1463, %v2003, %v2004
        %v2006 = vrot.slane %v1970, 1
        %v2007 = vrot.slane %v1698, 1
        %v2008 = vsel %vm1463, %v2006, %v2007
        %v2009 = vrot.slane %v1971, 1
        %v2010 = vrot.slane %v1699, 1
        %v2011 = vsel %vm1463, %v2009, %v2010
        %v2012 = vrot.slane %v1972, 1
        %v2013 = vrot.slane %v1700, 1
        %v2014 = vsel %vm1463, %v2012, %v2013
        %v2015 = vrot.slane %v1973, 1
        %v2016 = vrot.slane %v1701, 1
        %v2017 = vsel %vm1463, %v2015, %v2016
        %v2018 = vrot.slane %v1974, 1
        %v2019 = vrot.slane %v1702, 1
        %v2020 = vsel %vm1463, %v2018, %v2019
        %v2021 = vrot.slane %v1975, 1
        %v2022 = vrot.slane %v1703, 1
        %v2023 = vsel %vm1463, %v2021, %v2022
        %2024 = vrot.lane.b32.xlu0 %v1978, 20
        %v2025 = vpop.permute.xlu0 %2024
        %2026 = vrot.lane.b32.xlu0 %v1981, 20
        %v2027 = vpop.permute.xlu0 %2026
        %2028 = vrot.lane.b32.xlu0 %v1984, 20
        %v2029 = vpop.permute.xlu0 %2028
        %2030 = vrot.lane.b32.xlu0 %v1987, 20
        %v2031 = vpop.permute.xlu0 %2030
        %2032 = vrot.lane.b32.xlu0 %v1990, 20
        %v2033 = vpop.permute.xlu0 %2032
        %2034 = vrot.lane.b32.xlu0 %v1993, 20
        %v2035 = vpop.permute.xlu0 %2034
        %2036 = vrot.lane.b32.xlu0 %v1996, 20
        %v2037 = vpop.permute.xlu0 %2036
        %2038 = vrot.lane.b32.xlu0 %v1999, 20
        %v2039 = vpop.permute.xlu0 %2038
        %2040 = vrot.lane.b32.xlu0 %v2002, 20
        %v2041 = vpop.permute.xlu0 %2040
        %2042 = vrot.lane.b32.xlu0 %v2005, 20
        %v2043 = vpop.permute.xlu0 %2042
        %2044 = vrot.lane.b32.xlu0 %v2008, 20
        %v2045 = vpop.permute.xlu0 %2044
        %2046 = vrot.lane.b32.xlu0 %v2011, 20
        %v2047 = vpop.permute.xlu0 %2046
        %2048 = vrot.lane.b32.xlu0 %v2014, 20
        %v2049 = vpop.permute.xlu0 %2048
        %2050 = vrot.lane.b32.xlu0 %v2017, 20
        %v2051 = vpop.permute.xlu0 %2050
        %2052 = vrot.lane.b32.xlu0 %v2020, 20
        %v2053 = vpop.permute.xlu0 %2052
        %2054 = vrot.lane.b32.xlu0 %v2023, 20
        %v2055 = vpop.permute.xlu0 %2054
        %v2088 = vunpack.c.l.b16 %v998
        %v2089 = vunpack.c.l.b16 %v999
        %v2090 = vunpack.c.l.b16 %v1000
        %v2091 = vunpack.c.l.b16 %v1001
        %v2092 = vunpack.c.l.b16 %v1002
        %v2093 = vunpack.c.l.b16 %v1003
        %v2094 = vunpack.c.l.b16 %v1004
        %v2095 = vunpack.c.l.b16 %v1005
        %v2096 = vunpack.c.l.b16 %v1006
        %v2097 = vunpack.c.l.b16 %v1007
        %v2098 = vunpack.c.l.b16 %v1008
        %v2099 = vunpack.c.l.b16 %v1009
        %v2100 = vunpack.c.l.b16 %v1010
        %v2101 = vunpack.c.l.b16 %v1011
        %v2102 = vunpack.c.l.b16 %v1012
        %v2103 = vunpack.c.l.b16 %v1013
        %v2104 = vunpack.c.l.b16 %v1014
        %v2105 = vunpack.c.l.b16 %v1015
        %v2106 = vunpack.c.l.b16 %v1016
        %v2107 = vunpack.c.l.b16 %v1017
        %v2108 = vunpack.c.l.b16 %v1018
        %v2109 = vunpack.c.l.b16 %v1019
        %v2110 = vunpack.c.l.b16 %v1020
        %v2111 = vunpack.c.l.b16 %v1021
        %v2112 = vunpack.c.l.b16 %v1022
        %v2113 = vunpack.c.l.b16 %v1023
        %v2114 = vunpack.c.l.b16 %v1024
        %v2115 = vunpack.c.l.b16 %v1025
        %v2116 = vunpack.c.l.b16 %v1026
        %v2117 = vunpack.c.l.b16 %v1027
        %v2118 = vunpack.c.l.b16 %v1028
        %v2119 = vunpack.c.l.b16 %v1029
        %v2120 = vpack.c.b16 %v2089, %v2088
        %v2121 = vpack.c.b16 %v2091, %v2090
        %v2122 = vpack.c.b16 %v2093, %v2092
        %v2123 = vpack.c.b16 %v2095, %v2094
        %v2124 = vpack.c.b16 %v2097, %v2096
        %v2125 = vpack.c.b16 %v2099, %v2098
        %v2126 = vpack.c.b16 %v2101, %v2100
        %v2127 = vpack.c.b16 %v2103, %v2102
        %v2128 = vpack.c.b16 %v2105, %v2104
        %v2129 = vpack.c.b16 %v2107, %v2106
        %v2130 = vpack.c.b16 %v2109, %v2108
        %v2131 = vpack.c.b16 %v2111, %v2110
        %v2132 = vpack.c.b16 %v2113, %v2112
        %v2133 = vpack.c.b16 %v2115, %v2114
        %v2134 = vpack.c.b16 %v2117, %v2116
        %v2135 = vpack.c.b16 %v2119, %v2118
        %2136 = vrot.lane.b32.xlu0 %v2120, 24
        %v2137 = vpop.permute.xlu0 %2136
        %2138 = vrot.lane.b32.xlu0 %v2121, 24
        %v2139 = vpop.permute.xlu0 %2138
        %2140 = vrot.lane.b32.xlu0 %v2122, 24
        %v2141 = vpop.permute.xlu0 %2140
        %2142 = vrot.lane.b32.xlu0 %v2123, 24
        %v2143 = vpop.permute.xlu0 %2142
        %2144 = vrot.lane.b32.xlu0 %v2124, 24
        %v2145 = vpop.permute.xlu0 %2144
        %2146 = vrot.lane.b32.xlu0 %v2125, 24
        %v2147 = vpop.permute.xlu0 %2146
        %2148 = vrot.lane.b32.xlu0 %v2126, 24
        %v2149 = vpop.permute.xlu0 %2148
        %2150 = vrot.lane.b32.xlu0 %v2127, 24
        %v2151 = vpop.permute.xlu0 %2150
        %2152 = vrot.lane.b32.xlu0 %v2128, 24
        %v2153 = vpop.permute.xlu0 %2152
        %2154 = vrot.lane.b32.xlu0 %v2129, 24
        %v2155 = vpop.permute.xlu0 %2154
        %2156 = vrot.lane.b32.xlu0 %v2130, 24
        %v2157 = vpop.permute.xlu0 %2156
        %2158 = vrot.lane.b32.xlu0 %v2131, 24
        %v2159 = vpop.permute.xlu0 %2158
        %2160 = vrot.lane.b32.xlu0 %v2132, 24
        %v2161 = vpop.permute.xlu0 %2160
        %2162 = vrot.lane.b32.xlu0 %v2133, 24
        %v2163 = vpop.permute.xlu0 %2162
        %2164 = vrot.lane.b32.xlu0 %v2134, 24
        %v2165 = vpop.permute.xlu0 %2164
        %2166 = vrot.lane.b32.xlu0 %v2135, 24
        %v2167 = vpop.permute.xlu0 %2166
        %v2184 = vunpack.c.l.b16 %v1030
        %v2185 = vunpack.c.l.b16 %v1031
        %v2186 = vunpack.c.l.b16 %v1032
        %v2187 = vunpack.c.l.b16 %v1033
        %v2188 = vunpack.c.l.b16 %v1034
        %v2189 = vunpack.c.l.b16 %v1035
        %v2190 = vunpack.c.l.b16 %v1036
        %v2191 = vunpack.c.l.b16 %v1037
        %v2192 = vunpack.c.l.b16 %v1038
        %v2193 = vunpack.c.l.b16 %v1039
        %v2194 = vunpack.c.l.b16 %v1040
        %v2195 = vunpack.c.l.b16 %v1041
        %v2196 = vunpack.c.l.b16 %v1042
        %v2197 = vunpack.c.l.b16 %v1043
        %v2198 = vunpack.c.l.b16 %v1044
        %v2199 = vunpack.c.l.b16 %v1045
        %v2200 = vpack.c.b16 %v2184, %v2184
        %v2201 = vpack.c.b16 %v2185, %v2185
        %v2202 = vpack.c.b16 %v2186, %v2186
        %v2203 = vpack.c.b16 %v2187, %v2187
        %v2204 = vpack.c.b16 %v2188, %v2188
        %v2205 = vpack.c.b16 %v2189, %v2189
        %v2206 = vpack.c.b16 %v2190, %v2190
        %v2207 = vpack.c.b16 %v2191, %v2191
        %v2208 = vpack.c.b16 %v2192, %v2192
        %v2209 = vpack.c.b16 %v2193, %v2193
        %v2210 = vpack.c.b16 %v2194, %v2194
        %v2211 = vpack.c.b16 %v2195, %v2195
        %v2212 = vpack.c.b16 %v2196, %v2196
        %v2213 = vpack.c.b16 %v2197, %v2197
        %v2214 = vpack.c.b16 %v2198, %v2198
        %v2215 = vpack.c.b16 %v2199, %v2199
        %v2217 = vshrl.u32 %v2120, 16
        %v2219 = vshll.u32 %v2120, 16
        %v2221 = vrot.slane %v2219, 1
        %v2222 = vor.u32 %v2217, %v2221
        %v2224 = vshll.u32 %v2200, 16
        %v2226 = vrot.slane %v2224, 1
        %v2227 = vsel %vm1190, %v2222, %v2226
        %v2229 = vshrl.u32 %v2121, 16
        %v2231 = vshll.u32 %v2121, 16
        %v2233 = vrot.slane %v2231, 1
        %v2234 = vor.u32 %v2229, %v2233
        %v2236 = vshll.u32 %v2201, 16
        %v2238 = vrot.slane %v2236, 1
        %v2239 = vsel %vm1190, %v2234, %v2238
        %v2241 = vshrl.u32 %v2122, 16
        %v2243 = vshll.u32 %v2122, 16
        %v2245 = vrot.slane %v2243, 1
        %v2246 = vor.u32 %v2241, %v2245
        %v2248 = vshll.u32 %v2202, 16
        %v2250 = vrot.slane %v2248, 1
        %v2251 = vsel %vm1190, %v2246, %v2250
        %v2253 = vshrl.u32 %v2123, 16
        %v2255 = vshll.u32 %v2123, 16
        %v2257 = vrot.slane %v2255, 1
        %v2258 = vor.u32 %v2253, %v2257
        %v2260 = vshll.u32 %v2203, 16
        %v2262 = vrot.slane %v2260, 1
        %v2263 = vsel %vm1190, %v2258, %v2262
        %v2265 = vshrl.u32 %v2124, 16
        %v2267 = vshll.u32 %v2124, 16
        %v2269 = vrot.slane %v2267, 1
        %v2270 = vor.u32 %v2265, %v2269
        %v2272 = vshll.u32 %v2204, 16
        %v2274 = vrot.slane %v2272, 1
        %v2275 = vsel %vm1190, %v2270, %v2274
        %v2277 = vshrl.u32 %v2125, 16
        %v2279 = vshll.u32 %v2125, 16
        %v2281 = vrot.slane %v2279, 1
        %v2282 = vor.u32 %v2277, %v2281
        %v2284 = vshll.u32 %v2205, 16
        %v2286 = vrot.slane %v2284, 1
        %v2287 = vsel %vm1190, %v2282, %v2286
        %v2289 = vshrl.u32 %v2126, 16
        %v2291 = vshll.u32 %v2126, 16
        %v2293 = vrot.slane %v2291, 1
        %v2294 = vor.u32 %v2289, %v2293
        %v2296 = vshll.u32 %v2206, 16
        %v2298 = vrot.slane %v2296, 1
        %v2299 = vsel %vm1190, %v2294, %v2298
        %v2301 = vshrl.u32 %v2127, 16
        %v2303 = vshll.u32 %v2127, 16
        %v2305 = vrot.slane %v2303, 1
        %v2306 = vor.u32 %v2301, %v2305
        %v2308 = vshll.u32 %v2207, 16
        %v2310 = vrot.slane %v2308, 1
        %v2311 = vsel %vm1190, %v2306, %v2310
        %v2313 = vshrl.u32 %v2128, 16
        %v2315 = vshll.u32 %v2128, 16
        %v2317 = vrot.slane %v2315, 1
        %v2318 = vor.u32 %v2313, %v2317
        %v2320 = vshll.u32 %v2208, 16
        %v2322 = vrot.slane %v2320, 1
        %v2323 = vsel %vm1190, %v2318, %v2322
        %v2325 = vshrl.u32 %v2129, 16
        %v2327 = vshll.u32 %v2129, 16
        %v2329 = vrot.slane %v2327, 1
        %v2330 = vor.u32 %v2325, %v2329
        %v2332 = vshll.u32 %v2209, 16
        %v2334 = vrot.slane %v2332, 1
        %v2335 = vsel %vm1190, %v2330, %v2334
        %v2337 = vshrl.u32 %v2130, 16
        %v2339 = vshll.u32 %v2130, 16
        %v2341 = vrot.slane %v2339, 1
        %v2342 = vor.u32 %v2337, %v2341
        %v2344 = vshll.u32 %v2210, 16
        %v2346 = vrot.slane %v2344, 1
        %v2347 = vsel %vm1190, %v2342, %v2346
        %v2349 = vshrl.u32 %v2131, 16
        %v2351 = vshll.u32 %v2131, 16
        %v2353 = vrot.slane %v2351, 1
        %v2354 = vor.u32 %v2349, %v2353
        %v2356 = vshll.u32 %v2211, 16
        %v2358 = vrot.slane %v2356, 1
        %v2359 = vsel %vm1190, %v2354, %v2358
        %v2361 = vshrl.u32 %v2132, 16
        %v2363 = vshll.u32 %v2132, 16
        %v2365 = vrot.slane %v2363, 1
        %v2366 = vor.u32 %v2361, %v2365
        %v2368 = vshll.u32 %v2212, 16
        %v2370 = vrot.slane %v2368, 1
        %v2371 = vsel %vm1190, %v2366, %v2370
        %v2373 = vshrl.u32 %v2133, 16
        %v2375 = vshll.u32 %v2133, 16
        %v2377 = vrot.slane %v2375, 1
        %v2378 = vor.u32 %v2373, %v2377
        %v2380 = vshll.u32 %v2213, 16
        %v2382 = vrot.slane %v2380, 1
        %v2383 = vsel %vm1190, %v2378, %v2382
        %v2385 = vshrl.u32 %v2134, 16
        %v2387 = vshll.u32 %v2134, 16
        %v2389 = vrot.slane %v2387, 1
        %v2390 = vor.u32 %v2385, %v2389
        %v2392 = vshll.u32 %v2214, 16
        %v2394 = vrot.slane %v2392, 1
        %v2395 = vsel %vm1190, %v2390, %v2394
        %v2397 = vshrl.u32 %v2135, 16
        %v2399 = vshll.u32 %v2135, 16
        %v2401 = vrot.slane %v2399, 1
        %v2402 = vor.u32 %v2397, %v2401
        %v2404 = vshll.u32 %v2215, 16
        %v2406 = vrot.slane %v2404, 1
        %v2407 = vsel %vm1190, %v2402, %v2406
        %2408 = vrot.lane.b32.xlu0 %v2227, 28
        %v2409 = vpop.permute.xlu0 %2408
        %2410 = vrot.lane.b32.xlu0 %v2239, 28
        %v2411 = vpop.permute.xlu0 %2410
        %2412 = vrot.lane.b32.xlu0 %v2251, 28
        %v2413 = vpop.permute.xlu0 %2412
        %2414 = vrot.lane.b32.xlu0 %v2263, 28
        %v2415 = vpop.permute.xlu0 %2414
        %2416 = vrot.lane.b32.xlu0 %v2275, 28
        %v2417 = vpop.permute.xlu0 %2416
        %2418 = vrot.lane.b32.xlu0 %v2287, 28
        %v2419 = vpop.permute.xlu0 %2418
        %2420 = vrot.lane.b32.xlu0 %v2299, 28
        %v2421 = vpop.permute.xlu0 %2420
        %2422 = vrot.lane.b32.xlu0 %v2311, 28
        %v2423 = vpop.permute.xlu0 %2422
        %2424 = vrot.lane.b32.xlu0 %v2323, 28
        %v2425 = vpop.permute.xlu0 %2424
        %2426 = vrot.lane.b32.xlu0 %v2335, 28
        %v2427 = vpop.permute.xlu0 %2426
        %2428 = vrot.lane.b32.xlu0 %v2347, 28
        %v2429 = vpop.permute.xlu0 %2428
        %2430 = vrot.lane.b32.xlu0 %v2359, 28
        %v2431 = vpop.permute.xlu0 %2430
        %2432 = vrot.lane.b32.xlu0 %v2371, 28
        %v2433 = vpop.permute.xlu0 %2432
        %2434 = vrot.lane.b32.xlu0 %v2383, 28
        %v2435 = vpop.permute.xlu0 %2434
        %2436 = vrot.lane.b32.xlu0 %v2395, 28
        %v2437 = vpop.permute.xlu0 %2436
        %2438 = vrot.lane.b32.xlu0 %v2407, 28
        %v2439 = vpop.permute.xlu0 %2438
        %v2456 = vunpack.c.l.b16 %v1046
        %v2457 = vunpack.c.l.b16 %v1047
        %v2458 = vunpack.c.l.b16 %v1048
        %v2459 = vunpack.c.l.b16 %v1049
        %v2460 = vunpack.c.l.b16 %v1050
        %v2461 = vunpack.c.l.b16 %v1051
        %v2462 = vunpack.c.l.b16 %v1052
        %v2463 = vunpack.c.l.b16 %v1053
        %v2464 = vunpack.c.l.b16 %v1054
        %v2465 = vunpack.c.l.b16 %v1055
        %v2466 = vunpack.c.l.b16 %v1056
        %v2467 = vunpack.c.l.b16 %v1057
        %v2468 = vunpack.c.l.b16 %v1058
        %v2469 = vunpack.c.l.b16 %v1059
        %v2470 = vunpack.c.l.b16 %v1060
        %v2471 = vunpack.c.l.b16 %v1061
        %v2472 = vpack.c.b16 %v2089, %v2456
        %v2473 = vpack.c.b16 %v2091, %v2457
        %v2474 = vpack.c.b16 %v2093, %v2458
        %v2475 = vpack.c.b16 %v2095, %v2459
        %v2476 = vpack.c.b16 %v2097, %v2460
        %v2477 = vpack.c.b16 %v2099, %v2461
        %v2478 = vpack.c.b16 %v2101, %v2462
        %v2479 = vpack.c.b16 %v2103, %v2463
        %v2480 = vpack.c.b16 %v2105, %v2464
        %v2481 = vpack.c.b16 %v2107, %v2465
        %v2482 = vpack.c.b16 %v2109, %v2466
        %v2483 = vpack.c.b16 %v2111, %v2467
        %v2484 = vpack.c.b16 %v2113, %v2468
        %v2485 = vpack.c.b16 %v2115, %v2469
        %v2486 = vpack.c.b16 %v2117, %v2470
        %v2487 = vpack.c.b16 %v2119, %v2471
        %v2488 = vrot.slane %v2472, 1
        %v2489 = vrot.slane %v2200, 1
        %v2490 = vsel %vm1463, %v2488, %v2489
        %v2491 = vrot.slane %v2473, 1
        %v2492 = vrot.slane %v2201, 1
        %v2493 = vsel %vm1463, %v2491, %v2492
        %v2494 = vrot.slane %v2474, 1
        %v2495 = vrot.slane %v2202, 1
        %v2496 = vsel %vm1463, %v2494, %v2495
        %v2497 = vrot.slane %v2475, 1
        %v2498 = vrot.slane %v2203, 1
        %v2499 = vsel %vm1463, %v2497, %v2498
        %v2500 = vrot.slane %v2476, 1
        %v2501 = vrot.slane %v2204, 1
        %v2502 = vsel %vm1463, %v2500, %v2501
        %v2503 = vrot.slane %v2477, 1
        %v2504 = vrot.slane %v2205, 1
        %v2505 = vsel %vm1463, %v2503, %v2504
        %v2506 = vrot.slane %v2478, 1
        %v2507 = vrot.slane %v2206, 1
        %v2508 = vsel %vm1463, %v2506, %v2507
        %v2509 = vrot.slane %v2479, 1
        %v2510 = vrot.slane %v2207, 1
        %v2511 = vsel %vm1463, %v2509, %v2510
        %v2512 = vrot.slane %v2480, 1
        %v2513 = vrot.slane %v2208, 1
        %v2514 = vsel %vm1463, %v2512, %v2513
        %v2515 = vrot.slane %v2481, 1
        %v2516 = vrot.slane %v2209, 1
        %v2517 = vsel %vm1463, %v2515, %v2516
        %v2518 = vrot.slane %v2482, 1
        %v2519 = vrot.slane %v2210, 1
        %v2520 = vsel %vm1463, %v2518, %v2519
        %v2521 = vrot.slane %v2483, 1
        %v2522 = vrot.slane %v2211, 1
        %v2523 = vsel %vm1463, %v2521, %v2522
        %v2524 = vrot.slane %v2484, 1
        %v2525 = vrot.slane %v2212, 1
        %v2526 = vsel %vm1463, %v2524, %v2525
        %v2527 = vrot.slane %v2485, 1
        %v2528 = vrot.slane %v2213, 1
        %v2529 = vsel %vm1463, %v2527, %v2528
        %v2530 = vrot.slane %v2486, 1
        %v2531 = vrot.slane %v2214, 1
        %v2532 = vsel %vm1463, %v2530, %v2531
        %v2533 = vrot.slane %v2487, 1
        %v2534 = vrot.slane %v2215, 1
        %v2535 = vsel %vm1463, %v2533, %v2534
        %2536 = vrot.lane.b32.xlu0 %v2490, 32
        %v2537 = vpop.permute.xlu0 %2536
        %2538 = vrot.lane.b32.xlu0 %v2493, 32
        %v2539 = vpop.permute.xlu0 %2538
        %2540 = vrot.lane.b32.xlu0 %v2496, 32
        %v2541 = vpop.permute.xlu0 %2540
        %2542 = vrot.lane.b32.xlu0 %v2499, 32
        %v2543 = vpop.permute.xlu0 %2542
        %2544 = vrot.lane.b32.xlu0 %v2502, 32
        %v2545 = vpop.permute.xlu0 %2544
        %2546 = vrot.lane.b32.xlu0 %v2505, 32
        %v2547 = vpop.permute.xlu0 %2546
        %2548 = vrot.lane.b32.xlu0 %v2508, 32
        %v2549 = vpop.permute.xlu0 %2548
        %2550 = vrot.lane.b32.xlu0 %v2511, 32
        %v2551 = vpop.permute.xlu0 %2550
        %2552 = vrot.lane.b32.xlu0 %v2514, 32
        %v2553 = vpop.permute.xlu0 %2552
        %2554 = vrot.lane.b32.xlu0 %v2517, 32
        %v2555 = vpop.permute.xlu0 %2554
        %2556 = vrot.lane.b32.xlu0 %v2520, 32
        %v2557 = vpop.permute.xlu0 %2556
        %2558 = vrot.lane.b32.xlu0 %v2523, 32
        %v2559 = vpop.permute.xlu0 %2558
        %2560 = vrot.lane.b32.xlu0 %v2526, 32
        %v2561 = vpop.permute.xlu0 %2560
        %2562 = vrot.lane.b32.xlu0 %v2529, 32
        %v2563 = vpop.permute.xlu0 %2562
        %2564 = vrot.lane.b32.xlu0 %v2532, 32
        %v2565 = vpop.permute.xlu0 %2564
        %2566 = vrot.lane.b32.xlu0 %v2535, 32
        %v2567 = vpop.permute.xlu0 %2566
        %vm2568 = vcmask 31744
        %v2570 = vsel %vm2568, %v1126, %v1384
        %v2572 = vsel %vm2568, %v1127, %v1386
        %v2574 = vsel %vm2568, %v1128, %v1388
        %v2576 = vsel %vm2568, %v1129, %v1390
        %v2578 = vsel %vm2568, %v1130, %v1392
        %v2580 = vsel %vm2568, %v1131, %v1394
        %v2582 = vsel %vm2568, %v1132, %v1396
        %v2584 = vsel %vm2568, %v1133, %v1398
        %v2586 = vsel %vm2568, %v1134, %v1400
        %v2588 = vsel %vm2568, %v1135, %v1402
        %v2590 = vsel %vm2568, %v1136, %v1404
        %v2592 = vsel %vm2568, %v1137, %v1406
        %v2594 = vsel %vm2568, %v1138, %v1408
        %v2596 = vsel %vm2568, %v1139, %v1410
        %v2598 = vsel %vm2568, %v1140, %v1412
        %v2600 = vsel %vm2568, %v1141, %v1414
        %vm2601 = vcmask 64512
        %v2603 = vsel %vm2601, %v2570, %v1513
        %v2605 = vsel %vm2601, %v2572, %v1515
        %v2607 = vsel %vm2601, %v2574, %v1517
        %v2609 = vsel %vm2601, %v2576, %v1519
        %v2611 = vsel %vm2601, %v2578, %v1521
        %v2613 = vsel %vm2601, %v2580, %v1523
        %v2615 = vsel %vm2601, %v2582, %v1525
        %v2617 = vsel %vm2601, %v2584, %v1527
        %v2619 = vsel %vm2601, %v2586, %v1529
        %v2621 = vsel %vm2601, %v2588, %v1531
        %v2623 = vsel %vm2601, %v2590, %v1533
        %v2625 = vsel %vm2601, %v2592, %v1535
        %v2627 = vsel %vm2601, %v2594, %v1537
        %v2629 = vsel %vm2601, %v2596, %v1539
        %v2631 = vsel %vm2601, %v2598, %v1541
        %v2633 = vsel %vm2601, %v2600, %v1543
        %vm2634 = vcmask 97280
        %v2636 = vsel %vm2634, %v2603, %v1625
        %v2638 = vsel %vm2634, %v2605, %v1627
        %v2640 = vsel %vm2634, %v2607, %v1629
        %v2642 = vsel %vm2634, %v2609, %v1631
        %v2644 = vsel %vm2634, %v2611, %v1633
        %v2646 = vsel %vm2634, %v2613, %v1635
        %v2648 = vsel %vm2634, %v2615, %v1637
        %v2650 = vsel %vm2634, %v2617, %v1639
        %v2652 = vsel %vm2634, %v2619, %v1641
        %v2654 = vsel %vm2634, %v2621, %v1643
        %v2656 = vsel %vm2634, %v2623, %v1645
        %v2658 = vsel %vm2634, %v2625, %v1647
        %v2660 = vsel %vm2634, %v2627, %v1649
        %v2662 = vsel %vm2634, %v2629, %v1651
        %v2664 = vsel %vm2634, %v2631, %v1653
        %v2666 = vsel %vm2634, %v2633, %v1655
        %vm2667 = vcmask 130048
        %v2669 = vsel %vm2667, %v2636, %v1897
        %v2671 = vsel %vm2667, %v2638, %v1899
        %v2673 = vsel %vm2667, %v2640, %v1901
        %v2675 = vsel %vm2667, %v2642, %v1903
        %v2677 = vsel %vm2667, %v2644, %v1905
        %v2679 = vsel %vm2667, %v2646, %v1907
        %v2681 = vsel %vm2667, %v2648, %v1909
        %v2683 = vsel %vm2667, %v2650, %v1911
        %v2685 = vsel %vm2667, %v2652, %v1913
        %v2687 = vsel %vm2667, %v2654, %v1915
        %v2689 = vsel %vm2667, %v2656, %v1917
        %v2691 = vsel %vm2667, %v2658, %v1919
        %v2693 = vsel %vm2667, %v2660, %v1921
        %v2695 = vsel %vm2667, %v2662, %v1923
        %v2697 = vsel %vm2667, %v2664, %v1925
        %v2699 = vsel %vm2667, %v2666, %v1927
        %vm2700 = vcmask 162816
        %v2702 = vsel %vm2700, %v2669, %v2025
        %v2704 = vsel %vm2700, %v2671, %v2027
        %v2706 = vsel %vm2700, %v2673, %v2029
        %v2708 = vsel %vm2700, %v2675, %v2031
        %v2710 = vsel %vm2700, %v2677, %v2033
        %v2712 = vsel %vm2700, %v2679, %v2035
        %v2714 = vsel %vm2700, %v2681, %v2037
        %v2716 = vsel %vm2700, %v2683, %v2039
        %v2718 = vsel %vm2700, %v2685, %v2041
        %v2720 = vsel %vm2700, %v2687, %v2043
        %v2722 = vsel %vm2700, %v2689, %v2045
        %v2724 = vsel %vm2700, %v2691, %v2047
        %v2726 = vsel %vm2700, %v2693, %v2049
        %v2728 = vsel %vm2700, %v2695, %v2051
        %v2730 = vsel %vm2700, %v2697, %v2053
        %v2732 = vsel %vm2700, %v2699, %v2055
        %vm2733 = vcmask 195584
        %v2735 = vsel %vm2733, %v2702, %v2137
        %v2737 = vsel %vm2733, %v2704, %v2139
        %v2739 = vsel %vm2733, %v2706, %v2141
        %v2741 = vsel %vm2733, %v2708, %v2143
        %v2743 = vsel %vm2733, %v2710, %v2145
        %v2745 = vsel %vm2733, %v2712, %v2147
        %v2747 = vsel %vm2733, %v2714, %v2149
        %v2749 = vsel %vm2733, %v2716, %v2151
        %v2751 = vsel %vm2733, %v2718, %v2153
        %v2753 = vsel %vm2733, %v2720, %v2155
        %v2755 = vsel %vm2733, %v2722, %v2157
        %v2757 = vsel %vm2733, %v2724, %v2159
        %v2759 = vsel %vm2733, %v2726, %v2161
        %v2761 = vsel %vm2733, %v2728, %v2163
        %v2763 = vsel %vm2733, %v2730, %v2165
        %v2765 = vsel %vm2733, %v2732, %v2167
        %vm2766 = vcmask 228352
        %v2768 = vsel %vm2766, %v2735, %v2409
        %v2770 = vsel %vm2766, %v2737, %v2411
        %v2772 = vsel %vm2766, %v2739, %v2413
        %v2774 = vsel %vm2766, %v2741, %v2415
        %v2776 = vsel %vm2766, %v2743, %v2417
        %v2778 = vsel %vm2766, %v2745, %v2419
        %v2780 = vsel %vm2766, %v2747, %v2421
        %v2782 = vsel %vm2766, %v2749, %v2423
        %v2784 = vsel %vm2766, %v2751, %v2425
        %v2786 = vsel %vm2766, %v2753, %v2427
        %v2788 = vsel %vm2766, %v2755, %v2429
        %v2790 = vsel %vm2766, %v2757, %v2431
        %v2792 = vsel %vm2766, %v2759, %v2433
        %v2794 = vsel %vm2766, %v2761, %v2435
        %v2796 = vsel %vm2766, %v2763, %v2437
        %v2798 = vsel %vm2766, %v2765, %v2439
        %vm2799 = vcmask 261120
        %v2801 = vsel %vm2799, %v2768, %v2537
        %v2803 = vsel %vm2799, %v2770, %v2539
        %v2805 = vsel %vm2799, %v2772, %v2541
        %v2807 = vsel %vm2799, %v2774, %v2543
        %v2809 = vsel %vm2799, %v2776, %v2545
        %v2811 = vsel %vm2799, %v2778, %v2547
        %v2813 = vsel %vm2799, %v2780, %v2549
        %v2815 = vsel %vm2799, %v2782, %v2551
        %v2817 = vsel %vm2799, %v2784, %v2553
        %v2819 = vsel %vm2799, %v2786, %v2555
        %v2821 = vsel %vm2799, %v2788, %v2557
        %v2823 = vsel %vm2799, %v2790, %v2559
        %v2825 = vsel %vm2799, %v2792, %v2561
        %v2827 = vsel %vm2799, %v2794, %v2563
        %v2829 = vsel %vm2799, %v2796, %v2565
        %v2831 = vsel %vm2799, %v2798, %v2567
        %v2832 = vld [vmem:[%s1] sm:$0xf]
        %v2833 = vld [vmem:[%s1 + $0x4] sm:$0xf]
        %v2834 = vld [vmem:[%s1 + $0x8] sm:$0xf]
        %v2835 = vld [vmem:[%s1 + $0xc] sm:$0xf]
        %v2836 = vld [vmem:[%s1 + $0x10] sm:$0x3]
        %v2837 = vld [vmem:[%s2] sm:$0x1]
        %v2839 = vlaneseq
        %v2840 = vshrl.u32 %v2839, 7
        %v2841 = vsub.s32 0, %v2840
        %v2842 = vrot.slane %v2837, %v2841
        %v2849 = vunpack.c.l.b16 %v2832
        %v2850 = vunpack.c.l.b16 %v2833
        %v2851 = vunpack.c.l.b16 %v2834
        %v2852 = vunpack.c.l.b16 %v2835
        %v2853 = vunpack.c.l.b16 %v2836
        %v2854 = vpack.c.b16 %v2850, %v2849
        %v2855 = vpack.c.b16 %v2852, %v2851
        %v2856 = vpack.c.b16 %v2853, %v2853
        %vm2859 = vcmask 293888
        %v2860 = vsel %vm2859, %v2801, 0
        %v2862 = vsel %vm2859, %v2803, 0
        %v2864 = vsel %vm2859, %v2805, 0
        %v2866 = vsel %vm2859, %v2807, 0
        %v2868 = vsel %vm2859, %v2809, 0
        %v2870 = vsel %vm2859, %v2811, 0
        %v2872 = vsel %vm2859, %v2813, 0
        %v2874 = vsel %vm2859, %v2815, 0
        %v2876 = vsel %vm2859, %v2817, 0
        %v2878 = vsel %vm2859, %v2819, 0
        %v2880 = vsel %vm2859, %v2821, 0
        %v2882 = vsel %vm2859, %v2823, 0
        %v2884 = vsel %vm2859, %v2825, 0
        %v2886 = vsel %vm2859, %v2827, 0
        %v2888 = vsel %vm2859, %v2829, 0
        %v2890 = vsel %vm2859, %v2831, 0
        %vm2892 = vcmask 1041408
        %v2894 = vsel %vm2892, %v2856, 0
        %2896 = vmatprep.subr.bf16.mxu0 0
        %2897 = vmatpush1.bf16.msra.mxu0 0
        %2898 = vmatprep.subr.bf16.mxu0 0
        %2899 = vmatpush1.bf16.msra.mxu0 0
        %2900 = vmatprep.subr.bf16.mxu0 0
        %2901 = vmatpush1.bf16.msra.mxu0 0
        %2902 = vmatprep.subr.bf16.mxu0 0
        %2903 = vmatpush1.bf16.msra.mxu0 0
        %2904 = vmatprep.subr.bf16.mxu0 0
        %2905 = vmatpush1.bf16.msra.mxu0 0
        %2906 = vmatprep.subr.bf16.mxu0 0
        %2907 = vmatpush1.bf16.msra.mxu0 %v2894
        %2908 = vmatprep.subr.bf16.mxu0 0
        %2909 = vmatpush1.bf16.msra.mxu0 %v2855
        %2910 = vmatprep.subr.bf16.mxu0 0
        %2911 = vmatpush1.bf16.msra.mxu0 %v2854
        %2912 = vmatprep.subr.bf16.mxu0 0
        %2913 = vmatpush2.bf16.msra.mxu0 0
        %2914 = vmatprep.subr.bf16.mxu0 0
        %2915 = vmatpush2.bf16.msra.mxu0 0
        %2916 = vmatprep.subr.bf16.mxu0 0
        %2917 = vmatpush2.bf16.msra.mxu0 0
        %2918 = vmatprep.subr.bf16.mxu0 0
        %2919 = vmatpush2.bf16.msra.mxu0 0
        %2920 = vmatprep.subr.bf16.mxu0 0
        %2921 = vmatpush2.bf16.msra.mxu0 0
        %2922 = vmatprep.subr.bf16.mxu0 0
        %2923 = vmatpush2.bf16.msra.mxu0 0
        %2924 = vmatprep.subr.bf16.mxu0 0
        %2925 = vmatpush2.bf16.msra.mxu0 0
        %2926 = vmatprep.subr.bf16.mxu0 0
        %2927 = vmatpush2.bf16.msra.mxu0 0
        %2928 = vmatprep.mubr.bf16.mxu0 0
        %2929 = vmatmul.mubr.bf16.gmra.mxu0 %v2860
        %v2930 = vpop.f32.mrf.mxu0
        %v2931 = vadd.f32 %v2842, %v2930
        %v2932 = vpop.f32.mrf.mxu0
        %v2933 = vpop.f32.mrf.mxu0
        %v2934 = vadd.f32 %v2842, %v2933
        %v2935 = vpop.f32.mrf.mxu0
        %2936 = vmatprep.mubr.bf16.mxu0 0
        %2937 = vmatmul.mubr.bf16.gmra.mxu0 %v2862
        %v2938 = vpop.f32.mrf.mxu0
        %v2939 = vadd.f32 %v2842, %v2938
        %v2940 = vpop.f32.mrf.mxu0
        %v2941 = vpop.f32.mrf.mxu0
        %v2942 = vadd.f32 %v2842, %v2941
        %v2943 = vpop.f32.mrf.mxu0
        %2944 = vmatprep.mubr.bf16.mxu0 0
        %2945 = vmatmul.mubr.bf16.gmra.mxu0 %v2864
        %v2946 = vpop.f32.mrf.mxu0
        %v2947 = vadd.f32 %v2842, %v2946
        %v2948 = vpop.f32.mrf.mxu0
        %v2949 = vpop.f32.mrf.mxu0
        %v2950 = vadd.f32 %v2842, %v2949
        %v2951 = vpop.f32.mrf.mxu0
        %2952 = vmatprep.mubr.bf16.mxu0 0
        %2953 = vmatmul.mubr.bf16.gmra.mxu0 %v2866
        %v2954 = vpop.f32.mrf.mxu0
        %v2955 = vadd.f32 %v2842, %v2954
        %v2956 = vpop.f32.mrf.mxu0
        %v2957 = vpop.f32.mrf.mxu0
        %v2958 = vadd.f32 %v2842, %v2957
        %v2959 = vpop.f32.mrf.mxu0
        %2960 = vmatprep.mubr.bf16.mxu0 0
        %2961 = vmatmul.mubr.bf16.gmra.mxu0 %v2868
        %v2962 = vpop.f32.mrf.mxu0
        %v2963 = vadd.f32 %v2842, %v2962
        %v2964 = vpop.f32.mrf.mxu0
        %v2965 = vpop.f32.mrf.mxu0
        %v2966 = vadd.f32 %v2842, %v2965
        %v2967 = vpop.f32.mrf.mxu0
        %2968 = vmatprep.mubr.bf16.mxu0 0
        %2969 = vmatmul.mubr.bf16.gmra.mxu0 %v2870
        %v2970 = vpop.f32.mrf.mxu0
        %v2971 = vadd.f32 %v2842, %v2970
        %v2972 = vpop.f32.mrf.mxu0
        %v2973 = vpop.f32.mrf.mxu0
        %v2974 = vadd.f32 %v2842, %v2973
        %v2975 = vpop.f32.mrf.mxu0
        %2976 = vmatprep.mubr.bf16.mxu0 0
        %2977 = vmatmul.mubr.bf16.gmra.mxu0 %v2872
        %v2978 = vpop.f32.mrf.mxu0
        %v2979 = vadd.f32 %v2842, %v2978
        %v2980 = vpop.f32.mrf.mxu0
        %v2981 = vpop.f32.mrf.mxu0
        %v2982 = vadd.f32 %v2842, %v2981
        %v2983 = vpop.f32.mrf.mxu0
        %2984 = vmatprep.mubr.bf16.mxu0 0
        %2985 = vmatmul.mubr.bf16.gmra.mxu0 %v2874
        %v2986 = vpop.f32.mrf.mxu0
        %v2987 = vadd.f32 %v2842, %v2986
        %v2988 = vpop.f32.mrf.mxu0
        %v2989 = vpop.f32.mrf.mxu0
        %v2990 = vadd.f32 %v2842, %v2989
        %v2991 = vpop.f32.mrf.mxu0
        %2992 = vmatprep.mubr.bf16.mxu0 0
        %2993 = vmatmul.mubr.bf16.gmra.mxu0 %v2876
        %v2994 = vpop.f32.mrf.mxu0
        %v2995 = vadd.f32 %v2842, %v2994
        %v2996 = vpop.f32.mrf.mxu0
        %v2997 = vpop.f32.mrf.mxu0
        %v2998 = vadd.f32 %v2842, %v2997
        %v2999 = vpop.f32.mrf.mxu0
        %3000 = vmatprep.mubr.bf16.mxu0 0
        %3001 = vmatmul.mubr.bf16.gmra.mxu0 %v2878
        %v3002 = vpop.f32.mrf.mxu0
        %v3003 = vadd.f32 %v2842, %v3002
        %v3004 = vpop.f32.mrf.mxu0
        %v3005 = vpop.f32.mrf.mxu0
        %v3006 = vadd.f32 %v2842, %v3005
        %v3007 = vpop.f32.mrf.mxu0
        %3008 = vmatprep.mubr.bf16.mxu0 0
        %3009 = vmatmul.mubr.bf16.gmra.mxu0 %v2880
        %v3010 = vpop.f32.mrf.mxu0
        %v3011 = vadd.f32 %v2842, %v3010
        %v3012 = vpop.f32.mrf.mxu0
        %v3013 = vpop.f32.mrf.mxu0
        %v3014 = vadd.f32 %v2842, %v3013
        %v3015 = vpop.f32.mrf.mxu0
        %3016 = vmatprep.mubr.bf16.mxu0 0
        %3017 = vmatmul.mubr.bf16.gmra.mxu0 %v2882
        %v3018 = vpop.f32.mrf.mxu0
        %v3019 = vadd.f32 %v2842, %v3018
        %v3020 = vpop.f32.mrf.mxu0
        %v3021 = vpop.f32.mrf.mxu0
        %v3022 = vadd.f32 %v2842, %v3021
        %v3023 = vpop.f32.mrf.mxu0
        %3024 = vmatprep.mubr.bf16.mxu0 0
        %3025 = vmatmul.mubr.bf16.gmra.mxu0 %v2884
        %v3026 = vpop.f32.mrf.mxu0
        %v3027 = vadd.f32 %v2842, %v3026
        %v3028 = vpop.f32.mrf.mxu0
        %v3029 = vpop.f32.mrf.mxu0
        %v3030 = vadd.f32 %v2842, %v3029
        %v3031 = vpop.f32.mrf.mxu0
        %3032 = vmatprep.mubr.bf16.mxu0 0
        %3033 = vmatmul.mubr.bf16.gmra.mxu0 %v2886
        %v3034 = vpop.f32.mrf.mxu0
        %v3035 = vadd.f32 %v2842, %v3034
        %v3036 = vpop.f32.mrf.mxu0
        %v3037 = vpop.f32.mrf.mxu0
        %v3038 = vadd.f32 %v2842, %v3037
        %v3039 = vpop.f32.mrf.mxu0
        %3040 = vmatprep.mubr.bf16.mxu0 0
        %3041 = vmatmul.mubr.bf16.gmra.mxu0 %v2888
        %v3042 = vpop.f32.mrf.mxu0
        %v3043 = vadd.f32 %v2842, %v3042
        %v3044 = vpop.f32.mrf.mxu0
        %v3045 = vpop.f32.mrf.mxu0
        %v3046 = vadd.f32 %v2842, %v3045
        %v3047 = vpop.f32.mrf.mxu0
        %3048 = vmatprep.mubr.bf16.mxu0 0
        %3049 = vmatmul.mubr.bf16.gmra.mxu0 %v2890
        %v3050 = vpop.f32.mrf.mxu0
        %v3051 = vadd.f32 %v2842, %v3050
        %v3052 = vpop.f32.mrf.mxu0
        %v3053 = vpop.f32.mrf.mxu0
        %v3054 = vadd.f32 %v2842, %v3053
        %v3055 = vpop.f32.mrf.mxu0
        %3056 = vdwg.mxu0
        %vm3057 = vcmp.ge.f32.partialorder %v2931, 0.0
        %vm3058 = vcmp.ge.f32.partialorder %v2934, 0.0
        %vm3059 = vcmp.ge.f32.partialorder %v2939, 0.0
        %vm3060 = vcmp.ge.f32.partialorder %v2942, 0.0
        %vm3061 = vcmp.ge.f32.partialorder %v2947, 0.0
        %vm3062 = vcmp.ge.f32.partialorder %v2950, 0.0
        %vm3063 = vcmp.ge.f32.partialorder %v2955, 0.0
        %vm3064 = vcmp.ge.f32.partialorder %v2958, 0.0
        %vm3065 = vcmp.ge.f32.partialorder %v2963, 0.0
        %vm3066 = vcmp.ge.f32.partialorder %v2966, 0.0
        %vm3067 = vcmp.ge.f32.partialorder %v2971, 0.0
        %vm3068 = vcmp.ge.f32.partialorder %v2974, 0.0
        %vm3069 = vcmp.ge.f32.partialorder %v2979, 0.0
        %vm3070 = vcmp.ge.f32.partialorder %v2982, 0.0
        %vm3071 = vcmp.ge.f32.partialorder %v2987, 0.0
        %vm3072 = vcmp.ge.f32.partialorder %v2990, 0.0
        %vm3073 = vcmp.ge.f32.partialorder %v2995, 0.0
        %vm3074 = vcmp.ge.f32.partialorder %v2998, 0.0
        %vm3075 = vcmp.ge.f32.partialorder %v3003, 0.0
        %vm3076 = vcmp.ge.f32.partialorder %v3006, 0.0
        %vm3077 = vcmp.ge.f32.partialorder %v3011, 0.0
        %vm3078 = vcmp.ge.f32.partialorder %v3014, 0.0
        %vm3079 = vcmp.ge.f32.partialorder %v3019, 0.0
        %vm3080 = vcmp.ge.f32.partialorder %v3022, 0.0
        %vm3081 = vcmp.ge.f32.partialorder %v3027, 0.0
        %vm3082 = vcmp.ge.f32.partialorder %v3030, 0.0
        %vm3083 = vcmp.ge.f32.partialorder %v3035, 0.0
        %vm3084 = vcmp.ge.f32.partialorder %v3038, 0.0
        %vm3085 = vcmp.ge.f32.partialorder %v3043, 0.0
        %vm3086 = vcmp.ge.f32.partialorder %v3046, 0.0
        %vm3087 = vcmp.ge.f32.partialorder %v3051, 0.0
        %vm3088 = vcmp.ge.f32.partialorder %v3054, 0.0
        %v3089 = vmul.f32 %v2931, 0.2
        %v3090 = vmul.f32 %v2934, 0.2
        %v3091 = vmul.f32 %v2939, 0.2
        %v3092 = vmul.f32 %v2942, 0.2
        %v3093 = vmul.f32 %v2947, 0.2
        %v3094 = vmul.f32 %v2950, 0.2
        %v3095 = vmul.f32 %v2955, 0.2
        %v3096 = vmul.f32 %v2958, 0.2
        %v3097 = vmul.f32 %v2963, 0.2
        %v3098 = vmul.f32 %v2966, 0.2
        %v3099 = vmul.f32 %v2971, 0.2
        %v3100 = vmul.f32 %v2974, 0.2
        %v3101 = vmul.f32 %v2979, 0.2
        %v3102 = vmul.f32 %v2982, 0.2
        %v3103 = vmul.f32 %v2987, 0.2
        %v3104 = vmul.f32 %v2990, 0.2
        %v3105 = vmul.f32 %v2995, 0.2
        %v3106 = vmul.f32 %v2998, 0.2
        %v3107 = vmul.f32 %v3003, 0.2
        %v3108 = vmul.f32 %v3006, 0.2
        %v3109 = vmul.f32 %v3011, 0.2
        %v3110 = vmul.f32 %v3014, 0.2
        %v3111 = vmul.f32 %v3019, 0.2
        %v3112 = vmul.f32 %v3022, 0.2
        %v3113 = vmul.f32 %v3027, 0.2
        %v3114 = vmul.f32 %v3030, 0.2
        %v3115 = vmul.f32 %v3035, 0.2
        %v3116 = vmul.f32 %v3038, 0.2
        %v3117 = vmul.f32 %v3043, 0.2
        %v3118 = vmul.f32 %v3046, 0.2
        %v3119 = vmul.f32 %v3051, 0.2
        %v3120 = vmul.f32 %v3054, 0.2
        %v3121 = vsel %vm3057, %v2931, %v3089
        %v3122 = vsel %vm3058, %v2934, %v3090
        %v3123 = vsel %vm3059, %v2939, %v3091
        %v3124 = vsel %vm3060, %v2942, %v3092
        %v3125 = vsel %vm3061, %v2947, %v3093
        %v3126 = vsel %vm3062, %v2950, %v3094
        %v3127 = vsel %vm3063, %v2955, %v3095
        %v3128 = vsel %vm3064, %v2958, %v3096
        %v3129 = vsel %vm3065, %v2963, %v3097
        %v3130 = vsel %vm3066, %v2966, %v3098
        %v3131 = vsel %vm3067, %v2971, %v3099
        %v3132 = vsel %vm3068, %v2974, %v3100
        %v3133 = vsel %vm3069, %v2979, %v3101
        %v3134 = vsel %vm3070, %v2982, %v3102
        %v3135 = vsel %vm3071, %v2987, %v3103
        %v3136 = vsel %vm3072, %v2990, %v3104
        %v3137 = vsel %vm3073, %v2995, %v3105
        %v3138 = vsel %vm3074, %v2998, %v3106
        %v3139 = vsel %vm3075, %v3003, %v3107
        %v3140 = vsel %vm3076, %v3006, %v3108
        %v3141 = vsel %vm3077, %v3011, %v3109
        %v3142 = vsel %vm3078, %v3014, %v3110
        %v3143 = vsel %vm3079, %v3019, %v3111
        %v3144 = vsel %vm3080, %v3022, %v3112
        %v3145 = vsel %vm3081, %v3027, %v3113
        %v3146 = vsel %vm3082, %v3030, %v3114
        %v3147 = vsel %vm3083, %v3035, %v3115
        %v3148 = vsel %vm3084, %v3038, %v3116
        %v3149 = vsel %vm3085, %v3043, %v3117
        %v3150 = vsel %vm3086, %v3046, %v3118
        %v3151 = vsel %vm3087, %v3051, %v3119
        %v3152 = vsel %vm3088, %v3054, %v3120
        %v3153 = vpack.c.bf16 %v3122, %v3121
        %v3154 = vpack.c.bf16 %v3124, %v3123
        %v3155 = vpack.c.bf16 %v3126, %v3125
        %v3156 = vpack.c.bf16 %v3128, %v3127
        %v3157 = vpack.c.bf16 %v3130, %v3129
        %v3158 = vpack.c.bf16 %v3132, %v3131
        %v3159 = vpack.c.bf16 %v3134, %v3133
        %v3160 = vpack.c.bf16 %v3136, %v3135
        %v3161 = vpack.c.bf16 %v3138, %v3137
        %v3162 = vpack.c.bf16 %v3140, %v3139
        %v3163 = vpack.c.bf16 %v3142, %v3141
        %v3164 = vpack.c.bf16 %v3144, %v3143
        %v3165 = vpack.c.bf16 %v3146, %v3145
        %v3166 = vpack.c.bf16 %v3148, %v3147
        %v3167 = vpack.c.bf16 %v3150, %v3149
        %v3168 = vpack.c.bf16 %v3152, %v3151
        %v3185 = vunpack.c.l.b16 %v3153
        %v3186 = vunpack.c.h.b16 %v3153
        %v3187 = vunpack.c.l.b16 %v3154
        %v3188 = vunpack.c.h.b16 %v3154
        %v3189 = vunpack.c.l.b16 %v3155
        %v3190 = vunpack.c.h.b16 %v3155
        %v3191 = vunpack.c.l.b16 %v3156
        %v3192 = vunpack.c.h.b16 %v3156
        %v3193 = vunpack.c.l.b16 %v3157
        %v3194 = vunpack.c.h.b16 %v3157
        %v3195 = vunpack.c.l.b16 %v3158
        %v3196 = vunpack.c.h.b16 %v3158
        %v3197 = vunpack.c.l.b16 %v3159
        %v3198 = vunpack.c.h.b16 %v3159
        %v3199 = vunpack.c.l.b16 %v3160
        %v3200 = vunpack.c.h.b16 %v3160
        %v3201 = vunpack.c.l.b16 %v3161
        %v3202 = vunpack.c.h.b16 %v3161
        %v3203 = vunpack.c.l.b16 %v3162
        %v3204 = vunpack.c.h.b16 %v3162
        %v3205 = vunpack.c.l.b16 %v3163
        %v3206 = vunpack.c.h.b16 %v3163
        %v3207 = vunpack.c.l.b16 %v3164
        %v3208 = vunpack.c.h.b16 %v3164
        %v3209 = vunpack.c.l.b16 %v3165
        %v3210 = vunpack.c.h.b16 %v3165
        %v3211 = vunpack.c.l.b16 %v3166
        %v3212 = vunpack.c.h.b16 %v3166
        %v3213 = vunpack.c.l.b16 %v3167
        %v3214 = vunpack.c.h.b16 %v3167
        %v3215 = vunpack.c.l.b16 %v3168
        %v3216 = vunpack.c.h.b16 %v3168
        %v3217 = vpack.c.b16 %v3185, %v3185
        %v3218 = vpack.c.b16 %v3186, %v3186
        %v3219 = vpack.c.b16 %v3187, %v3187
        %v3220 = vpack.c.b16 %v3188, %v3188
        %v3221 = vpack.c.b16 %v3189, %v3189
        %v3222 = vpack.c.b16 %v3190, %v3190
        %v3223 = vpack.c.b16 %v3191, %v3191
        %v3224 = vpack.c.b16 %v3192, %v3192
        %v3225 = vpack.c.b16 %v3193, %v3193
        %v3226 = vpack.c.b16 %v3194, %v3194
        %v3227 = vpack.c.b16 %v3195, %v3195
        %v3228 = vpack.c.b16 %v3196, %v3196
        %v3229 = vpack.c.b16 %v3197, %v3197
        %v3230 = vpack.c.b16 %v3198, %v3198
        %v3231 = vpack.c.b16 %v3199, %v3199
        %v3232 = vpack.c.b16 %v3200, %v3200
        %v3233 = vpack.c.b16 %v3201, %v3201
        %v3234 = vpack.c.b16 %v3202, %v3202
        %v3235 = vpack.c.b16 %v3203, %v3203
        %v3236 = vpack.c.b16 %v3204, %v3204
        %v3237 = vpack.c.b16 %v3205, %v3205
        %v3238 = vpack.c.b16 %v3206, %v3206
        %v3239 = vpack.c.b16 %v3207, %v3207
        %v3240 = vpack.c.b16 %v3208, %v3208
        %v3241 = vpack.c.b16 %v3209, %v3209
        %v3242 = vpack.c.b16 %v3210, %v3210
        %v3243 = vpack.c.b16 %v3211, %v3211
        %v3244 = vpack.c.b16 %v3212, %v3212
        %v3245 = vpack.c.b16 %v3213, %v3213
        %v3246 = vpack.c.b16 %v3214, %v3214
        %v3247 = vpack.c.b16 %v3215, %v3215
        %v3248 = vpack.c.b16 %v3216, %v3216
        %v3250 = vshrl.u32 %v3217, 16
        %v3252 = vrot.slane %v3250, 7
        %v3253 = vshll.u32 %v3217, 16
        %v3255 = vor.u32 %v3252, %v3253
        %v3256 = vrot.slane %v3252, 4
        %v3258 = vshrl.u32 %v3218, 16
        %v3260 = vrot.slane %v3258, 7
        %v3261 = vshll.u32 %v3218, 16
        %v3263 = vor.u32 %v3260, %v3261
        %v3264 = vsel %vm433, %v3256, %v3263
        %v3265 = vrot.slane %v3260, 4
        %v3267 = vshrl.u32 %v3219, 16
        %v3269 = vrot.slane %v3267, 7
        %v3270 = vshll.u32 %v3219, 16
        %v3272 = vor.u32 %v3269, %v3270
        %v3273 = vrot.slane %v3269, 4
        %v3275 = vshrl.u32 %v3220, 16
        %v3277 = vrot.slane %v3275, 7
        %v3278 = vshll.u32 %v3220, 16
        %v3280 = vor.u32 %v3277, %v3278
        %v3281 = vsel %vm433, %v3273, %v3280
        %v3282 = vrot.slane %v3277, 4
        %v3284 = vshrl.u32 %v3221, 16
        %v3286 = vrot.slane %v3284, 7
        %v3287 = vshll.u32 %v3221, 16
        %v3289 = vor.u32 %v3286, %v3287
        %v3290 = vrot.slane %v3286, 4
        %v3292 = vshrl.u32 %v3222, 16
        %v3294 = vrot.slane %v3292, 7
        %v3295 = vshll.u32 %v3222, 16
        %v3297 = vor.u32 %v3294, %v3295
        %v3298 = vsel %vm433, %v3290, %v3297
        %v3299 = vrot.slane %v3294, 4
        %v3301 = vshrl.u32 %v3223, 16
        %v3303 = vrot.slane %v3301, 7
        %v3304 = vshll.u32 %v3223, 16
        %v3306 = vor.u32 %v3303, %v3304
        %v3307 = vrot.slane %v3303, 4
        %v3309 = vshrl.u32 %v3224, 16
        %v3311 = vrot.slane %v3309, 7
        %v3312 = vshll.u32 %v3224, 16
        %v3314 = vor.u32 %v3311, %v3312
        %v3315 = vsel %vm433, %v3307, %v3314
        %v3316 = vrot.slane %v3311, 4
        %v3318 = vshrl.u32 %v3225, 16
        %v3320 = vrot.slane %v3318, 7
        %v3321 = vshll.u32 %v3225, 16
        %v3323 = vor.u32 %v3320, %v3321
        %v3324 = vrot.slane %v3320, 4
        %v3326 = vshrl.u32 %v3226, 16
        %v3328 = vrot.slane %v3326, 7
        %v3329 = vshll.u32 %v3226, 16
        %v3331 = vor.u32 %v3328, %v3329
        %v3332 = vsel %vm433, %v3324, %v3331
        %v3333 = vrot.slane %v3328, 4
        %v3335 = vshrl.u32 %v3227, 16
        %v3337 = vrot.slane %v3335, 7
        %v3338 = vshll.u32 %v3227, 16
        %v3340 = vor.u32 %v3337, %v3338
        %v3341 = vrot.slane %v3337, 4
        %v3343 = vshrl.u32 %v3228, 16
        %v3345 = vrot.slane %v3343, 7
        %v3346 = vshll.u32 %v3228, 16
        %v3348 = vor.u32 %v3345, %v3346
        %v3349 = vsel %vm433, %v3341, %v3348
        %v3350 = vrot.slane %v3345, 4
        %v3352 = vshrl.u32 %v3229, 16
        %v3354 = vrot.slane %v3352, 7
        %v3355 = vshll.u32 %v3229, 16
        %v3357 = vor.u32 %v3354, %v3355
        %v3358 = vrot.slane %v3354, 4
        %v3360 = vshrl.u32 %v3230, 16
        %v3362 = vrot.slane %v3360, 7
        %v3363 = vshll.u32 %v3230, 16
        %v3365 = vor.u32 %v3362, %v3363
        %v3366 = vsel %vm433, %v3358, %v3365
        %v3367 = vrot.slane %v3362, 4
        %v3369 = vshrl.u32 %v3231, 16
        %v3371 = vrot.slane %v3369, 7
        %v3372 = vshll.u32 %v3231, 16
        %v3374 = vor.u32 %v3371, %v3372
        %v3375 = vrot.slane %v3371, 4
        %v3377 = vshrl.u32 %v3232, 16
        %v3379 = vrot.slane %v3377, 7
        %v3380 = vshll.u32 %v3232, 16
        %v3382 = vor.u32 %v3379, %v3380
        %v3383 = vsel %vm433, %v3375, %v3382
        %v3384 = vrot.slane %v3379, 4
        %v3386 = vshrl.u32 %v3233, 16
        %v3388 = vrot.slane %v3386, 7
        %v3389 = vshll.u32 %v3233, 16
        %v3391 = vor.u32 %v3388, %v3389
        %v3392 = vrot.slane %v3388, 4
        %v3394 = vshrl.u32 %v3234, 16
        %v3396 = vrot.slane %v3394, 7
        %v3397 = vshll.u32 %v3234, 16
        %v3399 = vor.u32 %v3396, %v3397
        %v3400 = vsel %vm433, %v3392, %v3399
        %v3401 = vrot.slane %v3396, 4
        %v3403 = vshrl.u32 %v3235, 16
        %v3405 = vrot.slane %v3403, 7
        %v3406 = vshll.u32 %v3235, 16
        %v3408 = vor.u32 %v3405, %v3406
        %v3409 = vrot.slane %v3405, 4
        %v3411 = vshrl.u32 %v3236, 16
        %v3413 = vrot.slane %v3411, 7
        %v3414 = vshll.u32 %v3236, 16
        %v3416 = vor.u32 %v3413, %v3414
        %v3417 = vsel %vm433, %v3409, %v3416
        %v3418 = vrot.slane %v3413, 4
        %v3420 = vshrl.u32 %v3237, 16
        %v3422 = vrot.slane %v3420, 7
        %v3423 = vshll.u32 %v3237, 16
        %v3425 = vor.u32 %v3422, %v3423
        %v3426 = vrot.slane %v3422, 4
        %v3428 = vshrl.u32 %v3238, 16
        %v3430 = vrot.slane %v3428, 7
        %v3431 = vshll.u32 %v3238, 16
        %v3433 = vor.u32 %v3430, %v3431
        %v3434 = vsel %vm433, %v3426, %v3433
        %v3435 = vrot.slane %v3430, 4
        %v3437 = vshrl.u32 %v3239, 16
        %v3439 = vrot.slane %v3437, 7
        %v3440 = vshll.u32 %v3239, 16
        %v3442 = vor.u32 %v3439, %v3440
        %v3443 = vrot.slane %v3439, 4
        %v3445 = vshrl.u32 %v3240, 16
        %v3447 = vrot.slane %v3445, 7
        %v3448 = vshll.u32 %v3240, 16
        %v3450 = vor.u32 %v3447, %v3448
        %v3451 = vsel %vm433, %v3443, %v3450
        %v3452 = vrot.slane %v3447, 4
        %v3454 = vshrl.u32 %v3241, 16
        %v3456 = vrot.slane %v3454, 7
        %v3457 = vshll.u32 %v3241, 16
        %v3459 = vor.u32 %v3456, %v3457
        %v3460 = vrot.slane %v3456, 4
        %v3462 = vshrl.u32 %v3242, 16
        %v3464 = vrot.slane %v3462, 7
        %v3465 = vshll.u32 %v3242, 16
        %v3467 = vor.u32 %v3464, %v3465
        %v3468 = vsel %vm433, %v3460, %v3467
        %v3469 = vrot.slane %v3464, 4
        %v3471 = vshrl.u32 %v3243, 16
        %v3473 = vrot.slane %v3471, 7
        %v3474 = vshll.u32 %v3243, 16
        %v3476 = vor.u32 %v3473, %v3474
        %v3477 = vrot.slane %v3473, 4
        %v3479 = vshrl.u32 %v3244, 16
        %v3481 = vrot.slane %v3479, 7
        %v3482 = vshll.u32 %v3244, 16
        %v3484 = vor.u32 %v3481, %v3482
        %v3485 = vsel %vm433, %v3477, %v3484
        %v3486 = vrot.slane %v3481, 4
        %v3488 = vshrl.u32 %v3245, 16
        %v3490 = vrot.slane %v3488, 7
        %v3491 = vshll.u32 %v3245, 16
        %v3493 = vor.u32 %v3490, %v3491
        %v3494 = vrot.slane %v3490, 4
        %v3496 = vshrl.u32 %v3246, 16
        %v3498 = vrot.slane %v3496, 7
        %v3499 = vshll.u32 %v3246, 16
        %v3501 = vor.u32 %v3498, %v3499
        %v3502 = vsel %vm433, %v3494, %v3501
        %v3503 = vrot.slane %v3498, 4
        %v3505 = vshrl.u32 %v3247, 16
        %v3507 = vrot.slane %v3505, 7
        %v3508 = vshll.u32 %v3247, 16
        %v3510 = vor.u32 %v3507, %v3508
        %v3511 = vrot.slane %v3507, 4
        %v3513 = vshrl.u32 %v3248, 16
        %v3515 = vrot.slane %v3513, 7
        %v3516 = vshll.u32 %v3248, 16
        %v3518 = vor.u32 %v3515, %v3516
        %v3519 = vsel %vm433, %v3511, %v3518
        %v3520 = vrot.slane %v3515, 4
        %v3569 = vsel %vm756, %v3255, %v933
        %3570 = vst [vmem:[%s754] sm:$0xf] %v3569
        %3571 = vst.msk [vmem:[%s754 + $0x4] sm:$0xf] %vm278, %v3264
        %v3572 = vld [vmem:[%s754 + $0x8] sm:$0x1]
        %v3573 = vsel %vm289, %v3265, %v3572
        %3574 = vst [vmem:[%s754 + $0x8] sm:$0x1] %v3573
        %v3575 = vld [vmem:[%s754 + $0xc] sm:$0xf]
        %v3576 = vsel %vm756, %v3272, %v3575
        %3577 = vst [vmem:[%s754 + $0xc] sm:$0xf] %v3576
        %3578 = vst.msk [vmem:[%s754 + $0x10] sm:$0xf] %vm278, %v3281
        %v3579 = vld [vmem:[%s754 + $0x14] sm:$0x1]
        %v3580 = vsel %vm289, %v3282, %v3579
        %3581 = vst [vmem:[%s754 + $0x14] sm:$0x1] %v3580
        %v3582 = vld [vmem:[%s754 + $0x18] sm:$0xf]
        %v3583 = vsel %vm756, %v3289, %v3582
        %3584 = vst [vmem:[%s754 + $0x18] sm:$0xf] %v3583
        %3585 = vst.msk [vmem:[%s754 + $0x1c] sm:$0xf] %vm278, %v3298
        %v3586 = vld [vmem:[%s754 + $0x20] sm:$0x1]
        %v3587 = vsel %vm289, %v3299, %v3586
        %3588 = vst [vmem:[%s754 + $0x20] sm:$0x1] %v3587
        %v3589 = vld [vmem:[%s754 + $0x24] sm:$0xf]
        %v3590 = vsel %vm756, %v3306, %v3589
        %3591 = vst [vmem:[%s754 + $0x24] sm:$0xf] %v3590
        %3592 = vst.msk [vmem:[%s754 + $0x28] sm:$0xf] %vm278, %v3315
        %v3593 = vld [vmem:[%s754 + $0x2c] sm:$0x1]
        %v3594 = vsel %vm289, %v3316, %v3593
        %3595 = vst [vmem:[%s754 + $0x2c] sm:$0x1] %v3594
        %v3596 = vld [vmem:[%s754 + $0x30] sm:$0xf]
        %v3597 = vsel %vm756, %v3323, %v3596
        %3598 = vst [vmem:[%s754 + $0x30] sm:$0xf] %v3597
        %3599 = vst.msk [vmem:[%s754 + $0x34] sm:$0xf] %vm278, %v3332
        %v3600 = vld [vmem:[%s754 + $0x38] sm:$0x1]
        %v3601 = vsel %vm289, %v3333, %v3600
        %3602 = vst [vmem:[%s754 + $0x38] sm:$0x1] %v3601
        %v3603 = vld [vmem:[%s754 + $0x3c] sm:$0xf]
        %v3604 = vsel %vm756, %v3340, %v3603
        %3605 = vst [vmem:[%s754 + $0x3c] sm:$0xf] %v3604
        %3606 = vst.msk [vmem:[%s754 + $0x40] sm:$0xf] %vm278, %v3349
        %v3607 = vld [vmem:[%s754 + $0x44] sm:$0x1]
        %v3608 = vsel %vm289, %v3350, %v3607
        %3609 = vst [vmem:[%s754 + $0x44] sm:$0x1] %v3608
        %v3610 = vld [vmem:[%s754 + $0x48] sm:$0xf]
        %v3611 = vsel %vm756, %v3357, %v3610
        %3612 = vst [vmem:[%s754 + $0x48] sm:$0xf] %v3611
        %3613 = vst.msk [vmem:[%s754 + $0x4c] sm:$0xf] %vm278, %v3366
        %v3614 = vld [vmem:[%s754 + $0x50] sm:$0x1]
        %v3615 = vsel %vm289, %v3367, %v3614
        %3616 = vst [vmem:[%s754 + $0x50] sm:$0x1] %v3615
        %v3617 = vld [vmem:[%s754 + $0x54] sm:$0xf]
        %v3618 = vsel %vm756, %v3374, %v3617
        %3619 = vst [vmem:[%s754 + $0x54] sm:$0xf] %v3618
        %3620 = vst.msk [vmem:[%s754 + $0x58] sm:$0xf] %vm278, %v3383
        %v3621 = vld [vmem:[%s754 + $0x5c] sm:$0x1]
        %v3622 = vsel %vm289, %v3384, %v3621
        %3623 = vst [vmem:[%s754 + $0x5c] sm:$0x1] %v3622
        %v3624 = vld [vmem:[%s754 + $0x60] sm:$0xf]
        %v3625 = vsel %vm756, %v3391, %v3624
        %3626 = vst [vmem:[%s754 + $0x60] sm:$0xf] %v3625
        %3627 = vst.msk [vmem:[%s754 + $0x64] sm:$0xf] %vm278, %v3400
        %v3628 = vld [vmem:[%s754 + $0x68] sm:$0x1]
        %v3629 = vsel %vm289, %v3401, %v3628
        %3630 = vst [vmem:[%s754 + $0x68] sm:$0x1] %v3629
        %v3631 = vld [vmem:[%s754 + $0x6c] sm:$0xf]
        %v3632 = vsel %vm756, %v3408, %v3631
        %3633 = vst [vmem:[%s754 + $0x6c] sm:$0xf] %v3632
        %3634 = vst.msk [vmem:[%s754 + $0x70] sm:$0xf] %vm278, %v3417
        %v3635 = vld [vmem:[%s754 + $0x74] sm:$0x1]
        %v3636 = vsel %vm289, %v3418, %v3635
        %3637 = vst [vmem:[%s754 + $0x74] sm:$0x1] %v3636
        %v3638 = vld [vmem:[%s754 + $0x78] sm:$0xf]
        %v3639 = vsel %vm756, %v3425, %v3638
        %3640 = vst [vmem:[%s754 + $0x78] sm:$0xf] %v3639
        %3641 = vst.msk [vmem:[%s754 + $0x7c] sm:$0xf] %vm278, %v3434
        %v3642 = vld [vmem:[%s754 + $0x80] sm:$0x1]
        %v3643 = vsel %vm289, %v3435, %v3642
        %3644 = vst [vmem:[%s754 + $0x80] sm:$0x1] %v3643
        %v3645 = vld [vmem:[%s754 + $0x84] sm:$0xf]
        %v3646 = vsel %vm756, %v3442, %v3645
        %3647 = vst [vmem:[%s754 + $0x84] sm:$0xf] %v3646
        %3648 = vst.msk [vmem:[%s754 + $0x88] sm:$0xf] %vm278, %v3451
        %v3649 = vld [vmem:[%s754 + $0x8c] sm:$0x1]
        %v3650 = vsel %vm289, %v3452, %v3649
        %3651 = vst [vmem:[%s754 + $0x8c] sm:$0x1] %v3650
        %v3652 = vld [vmem:[%s754 + $0x90] sm:$0xf]
        %v3653 = vsel %vm756, %v3459, %v3652
        %3654 = vst [vmem:[%s754 + $0x90] sm:$0xf] %v3653
        %3655 = vst.msk [vmem:[%s754 + $0x94] sm:$0xf] %vm278, %v3468
        %v3656 = vld [vmem:[%s754 + $0x98] sm:$0x1]
        %v3657 = vsel %vm289, %v3469, %v3656
        %3658 = vst [vmem:[%s754 + $0x98] sm:$0x1] %v3657
        %v3659 = vld [vmem:[%s754 + $0x9c] sm:$0xf]
        %v3660 = vsel %vm756, %v3476, %v3659
        %3661 = vst [vmem:[%s754 + $0x9c] sm:$0xf] %v3660
        %3662 = vst.msk [vmem:[%s754 + $0xa0] sm:$0xf] %vm278, %v3485
        %v3663 = vld [vmem:[%s754 + $0xa4] sm:$0x1]
        %v3664 = vsel %vm289, %v3486, %v3663
        %3665 = vst [vmem:[%s754 + $0xa4] sm:$0x1] %v3664
        %v3666 = vld [vmem:[%s754 + $0xa8] sm:$0xf]
        %v3667 = vsel %vm756, %v3493, %v3666
        %3668 = vst [vmem:[%s754 + $0xa8] sm:$0xf] %v3667
        %3669 = vst.msk [vmem:[%s754 + $0xac] sm:$0xf] %vm278, %v3502
        %v3670 = vld [vmem:[%s754 + $0xb0] sm:$0x1]
        %v3671 = vsel %vm289, %v3503, %v3670
        %3672 = vst [vmem:[%s754 + $0xb0] sm:$0x1] %v3671
        %v3673 = vld [vmem:[%s754 + $0xb4] sm:$0xf]
        %v3674 = vsel %vm756, %v3510, %v3673
        %3675 = vst [vmem:[%s754 + $0xb4] sm:$0xf] %v3674
        %3676 = vst.msk [vmem:[%s754 + $0xb8] sm:$0xf] %vm278, %v3519
        %v3677 = vld [vmem:[%s754 + $0xbc] sm:$0x1]
        %v3678 = vsel %vm289, %v3520, %v3677
        %3679 = vst [vmem:[%s754 + $0xbc] sm:$0x1] %v3678
        %v3680 = vld [vmem:[#allocation2] sm:$0xf]
        %v3681 = vld [vmem:[#allocation2 + $0x4] sm:$0xf]
        %v3682 = vld [vmem:[#allocation2 + $0xc] sm:$0xf]
        %v3683 = vld [vmem:[#allocation2 + $0x10] sm:$0xf]
        %v3684 = vld [vmem:[#allocation2 + $0x18] sm:$0xf]
        %v3685 = vld [vmem:[#allocation2 + $0x1c] sm:$0xf]
        %v3686 = vld [vmem:[#allocation2 + $0x24] sm:$0xf]
        %v3687 = vld [vmem:[#allocation2 + $0x28] sm:$0xf]
        %v3688 = vld [vmem:[#allocation2 + $0x30] sm:$0xf]
        %v3689 = vld [vmem:[#allocation2 + $0x34] sm:$0xf]
        %v3690 = vld [vmem:[#allocation2 + $0x3c] sm:$0xf]
        %v3691 = vld [vmem:[#allocation2 + $0x40] sm:$0xf]
        %v3692 = vld [vmem:[#allocation2 + $0x48] sm:$0xf]
        %v3693 = vld [vmem:[#allocation2 + $0x4c] sm:$0xf]
        %v3694 = vld [vmem:[#allocation2 + $0x54] sm:$0xf]
        %v3695 = vld [vmem:[#allocation2 + $0x58] sm:$0xf]
        %v3696 = vld [vmem:[#allocation2 + $0x60] sm:$0xf]
        %v3697 = vld [vmem:[#allocation2 + $0x64] sm:$0xf]
        %v3698 = vld [vmem:[#allocation2 + $0x6c] sm:$0xf]
        %v3699 = vld [vmem:[#allocation2 + $0x70] sm:$0xf]
        %v3700 = vld [vmem:[#allocation2 + $0x78] sm:$0xf]
        %v3701 = vld [vmem:[#allocation2 + $0x7c] sm:$0xf]
        %v3702 = vld [vmem:[#allocation2 + $0x84] sm:$0xf]
        %v3703 = vld [vmem:[#allocation2 + $0x88] sm:$0xf]
        %v3704 = vld [vmem:[#allocation2 + $0x90] sm:$0xf]
        %v3705 = vld [vmem:[#allocation2 + $0x94] sm:$0xf]
        %v3706 = vld [vmem:[#allocation2 + $0x9c] sm:$0xf]
        %v3707 = vld [vmem:[#allocation2 + $0xa0] sm:$0xf]
        %v3708 = vld [vmem:[#allocation2 + $0xa8] sm:$0xf]
        %v3709 = vld [vmem:[#allocation2 + $0xac] sm:$0xf]
        %v3710 = vld [vmem:[#allocation2 + $0xb4] sm:$0xf]
        %v3711 = vld [vmem:[#allocation2 + $0xb8] sm:$0xf]
        %v3712 = vld [vmem:[#allocation2 + $0x8] sm:$0x1]
        %v3713 = vld [vmem:[#allocation2 + $0x14] sm:$0x1]
        %v3714 = vld [vmem:[#allocation2 + $0x20] sm:$0x1]
        %v3715 = vld [vmem:[#allocation2 + $0x2c] sm:$0x1]
        %v3716 = vld [vmem:[#allocation2 + $0x38] sm:$0x1]
        %v3717 = vld [vmem:[#allocation2 + $0x44] sm:$0x1]
        %v3718 = vld [vmem:[#allocation2 + $0x50] sm:$0x1]
        %v3719 = vld [vmem:[#allocation2 + $0x5c] sm:$0x1]
        %v3720 = vld [vmem:[#allocation2 + $0x68] sm:$0x1]
        %v3721 = vld [vmem:[#allocation2 + $0x74] sm:$0x1]
        %v3722 = vld [vmem:[#allocation2 + $0x80] sm:$0x1]
        %v3723 = vld [vmem:[#allocation2 + $0x8c] sm:$0x1]
        %v3724 = vld [vmem:[#allocation2 + $0x98] sm:$0x1]
        %v3725 = vld [vmem:[#allocation2 + $0xa4] sm:$0x1]
        %v3726 = vld [vmem:[#allocation2 + $0xb0] sm:$0x1]
        %v3727 = vld [vmem:[#allocation2 + $0xbc] sm:$0x1]
        %v3728 = vld [vmem:[#allocation2] sm:$0xe]
        %v3729 = vld [vmem:[#allocation2 + $0xc] sm:$0xe]
        %v3730 = vld [vmem:[#allocation2 + $0x18] sm:$0xe]
        %v3731 = vld [vmem:[#allocation2 + $0x24] sm:$0xe]
        %v3732 = vld [vmem:[#allocation2 + $0x30] sm:$0xe]
        %v3733 = vld [vmem:[#allocation2 + $0x3c] sm:$0xe]
        %v3734 = vld [vmem:[#allocation2 + $0x48] sm:$0xe]
        %v3735 = vld [vmem:[#allocation2 + $0x54] sm:$0xe]
        %v3736 = vld [vmem:[#allocation2 + $0x60] sm:$0xe]
        %v3737 = vld [vmem:[#allocation2 + $0x6c] sm:$0xe]
        %v3738 = vld [vmem:[#allocation2 + $0x78] sm:$0xe]
        %v3739 = vld [vmem:[#allocation2 + $0x84] sm:$0xe]
        %v3740 = vld [vmem:[#allocation2 + $0x90] sm:$0xe]
        %v3741 = vld [vmem:[#allocation2 + $0x9c] sm:$0xe]
        %v3742 = vld [vmem:[#allocation2 + $0xa8] sm:$0xe]
        %v3743 = vld [vmem:[#allocation2 + $0xb4] sm:$0xe]
        %v3744 = vld [vmem:[%s754] sm:$0xf]
        %v3745 = vld [vmem:[%s754 + $0x4] sm:$0xf]
        %v3746 = vld [vmem:[%s754 + $0xc] sm:$0xf]
        %v3747 = vld [vmem:[%s754 + $0x10] sm:$0xf]
        %v3748 = vld [vmem:[%s754 + $0x18] sm:$0xf]
        %v3749 = vld [vmem:[%s754 + $0x1c] sm:$0xf]
        %v3750 = vld [vmem:[%s754 + $0x24] sm:$0xf]
        %v3751 = vld [vmem:[%s754 + $0x28] sm:$0xf]
        %v3752 = vld [vmem:[%s754 + $0x30] sm:$0xf]
        %v3753 = vld [vmem:[%s754 + $0x34] sm:$0xf]
        %v3754 = vld [vmem:[%s754 + $0x3c] sm:$0xf]
        %v3755 = vld [vmem:[%s754 + $0x40] sm:$0xf]
        %v3756 = vld [vmem:[%s754 + $0x48] sm:$0xf]
        %v3757 = vld [vmem:[%s754 + $0x4c] sm:$0xf]
        %v3758 = vld [vmem:[%s754 + $0x54] sm:$0xf]
        %v3759 = vld [vmem:[%s754 + $0x58] sm:$0xf]
        %v3760 = vld [vmem:[%s754 + $0x60] sm:$0xf]
        %v3761 = vld [vmem:[%s754 + $0x64] sm:$0xf]
        %v3762 = vld [vmem:[%s754 + $0x6c] sm:$0xf]
        %v3763 = vld [vmem:[%s754 + $0x70] sm:$0xf]
        %v3764 = vld [vmem:[%s754 + $0x78] sm:$0xf]
        %v3765 = vld [vmem:[%s754 + $0x7c] sm:$0xf]
        %v3766 = vld [vmem:[%s754 + $0x84] sm:$0xf]
        %v3767 = vld [vmem:[%s754 + $0x88] sm:$0xf]
        %v3768 = vld [vmem:[%s754 + $0x90] sm:$0xf]
        %v3769 = vld [vmem:[%s754 + $0x94] sm:$0xf]
        %v3770 = vld [vmem:[%s754 + $0x9c] sm:$0xf]
        %v3771 = vld [vmem:[%s754 + $0xa0] sm:$0xf]
        %v3772 = vld [vmem:[%s754 + $0xa8] sm:$0xf]
        %v3773 = vld [vmem:[%s754 + $0xac] sm:$0xf]
        %v3774 = vld [vmem:[%s754 + $0xb4] sm:$0xf]
        %v3775 = vld [vmem:[%s754 + $0xb8] sm:$0xf]
        %v3776 = vld [vmem:[%s754 + $0x8] sm:$0x1]
        %v3777 = vld [vmem:[%s754 + $0x14] sm:$0x1]
        %v3778 = vld [vmem:[%s754 + $0x20] sm:$0x1]
        %v3779 = vld [vmem:[%s754 + $0x2c] sm:$0x1]
        %v3780 = vld [vmem:[%s754 + $0x38] sm:$0x1]
        %v3781 = vld [vmem:[%s754 + $0x44] sm:$0x1]
        %v3782 = vld [vmem:[%s754 + $0x50] sm:$0x1]
        %v3783 = vld [vmem:[%s754 + $0x5c] sm:$0x1]
        %v3784 = vld [vmem:[%s754 + $0x68] sm:$0x1]
        %v3785 = vld [vmem:[%s754 + $0x74] sm:$0x1]
        %v3786 = vld [vmem:[%s754 + $0x80] sm:$0x1]
        %v3787 = vld [vmem:[%s754 + $0x8c] sm:$0x1]
        %v3788 = vld [vmem:[%s754 + $0x98] sm:$0x1]
        %v3789 = vld [vmem:[%s754 + $0xa4] sm:$0x1]
        %v3790 = vld [vmem:[%s754 + $0xb0] sm:$0x1]
        %v3791 = vld [vmem:[%s754 + $0xbc] sm:$0x1]
        %v3792 = vld [vmem:[%s754] sm:$0xe]
        %v3793 = vld [vmem:[%s754 + $0xc] sm:$0xe]
        %v3794 = vld [vmem:[%s754 + $0x18] sm:$0xe]
        %v3795 = vld [vmem:[%s754 + $0x24] sm:$0xe]
        %v3796 = vld [vmem:[%s754 + $0x30] sm:$0xe]
        %v3797 = vld [vmem:[%s754 + $0x3c] sm:$0xe]
        %v3798 = vld [vmem:[%s754 + $0x48] sm:$0xe]
        %v3799 = vld [vmem:[%s754 + $0x54] sm:$0xe]
        %v3800 = vld [vmem:[%s754 + $0x60] sm:$0xe]
        %v3801 = vld [vmem:[%s754 + $0x6c] sm:$0xe]
        %v3802 = vld [vmem:[%s754 + $0x78] sm:$0xe]
        %v3803 = vld [vmem:[%s754 + $0x84] sm:$0xe]
        %v3804 = vld [vmem:[%s754 + $0x90] sm:$0xe]
        %v3805 = vld [vmem:[%s754 + $0x9c] sm:$0xe]
        %v3806 = vld [vmem:[%s754 + $0xa8] sm:$0xe]
        %v3807 = vld [vmem:[%s754 + $0xb4] sm:$0xe]
        %v3808 = vld [vmem:[%s997] sm:$0xf]
        %v3809 = vld [vmem:[%s997 + $0x4] sm:$0xf]
        %v3810 = vld [vmem:[%s997 + $0xc] sm:$0xf]
        %v3811 = vld [vmem:[%s997 + $0x10] sm:$0xf]
        %v3812 = vld [vmem:[%s997 + $0x18] sm:$0xf]
        %v3813 = vld [vmem:[%s997 + $0x1c] sm:$0xf]
        %v3814 = vld [vmem:[%s997 + $0x24] sm:$0xf]
        %v3815 = vld [vmem:[%s997 + $0x28] sm:$0xf]
        %v3816 = vld [vmem:[%s997 + $0x30] sm:$0xf]
        %v3817 = vld [vmem:[%s997 + $0x34] sm:$0xf]
        %v3818 = vld [vmem:[%s997 + $0x3c] sm:$0xf]
        %v3819 = vld [vmem:[%s997 + $0x40] sm:$0xf]
        %v3820 = vld [vmem:[%s997 + $0x48] sm:$0xf]
        %v3821 = vld [vmem:[%s997 + $0x4c] sm:$0xf]
        %v3822 = vld [vmem:[%s997 + $0x54] sm:$0xf]
        %v3823 = vld [vmem:[%s997 + $0x58] sm:$0xf]
        %v3824 = vld [vmem:[%s997 + $0x60] sm:$0xf]
        %v3825 = vld [vmem:[%s997 + $0x64] sm:$0xf]
        %v3826 = vld [vmem:[%s997 + $0x6c] sm:$0xf]
        %v3827 = vld [vmem:[%s997 + $0x70] sm:$0xf]
        %v3828 = vld [vmem:[%s997 + $0x78] sm:$0xf]
        %v3829 = vld [vmem:[%s997 + $0x7c] sm:$0xf]
        %v3830 = vld [vmem:[%s997 + $0x84] sm:$0xf]
        %v3831 = vld [vmem:[%s997 + $0x88] sm:$0xf]
        %v3832 = vld [vmem:[%s997 + $0x90] sm:$0xf]
        %v3833 = vld [vmem:[%s997 + $0x94] sm:$0xf]
        %v3834 = vld [vmem:[%s997 + $0x9c] sm:$0xf]
        %v3835 = vld [vmem:[%s997 + $0xa0] sm:$0xf]
        %v3836 = vld [vmem:[%s997 + $0xa8] sm:$0xf]
        %v3837 = vld [vmem:[%s997 + $0xac] sm:$0xf]
        %v3838 = vld [vmem:[%s997 + $0xb4] sm:$0xf]
        %v3839 = vld [vmem:[%s997 + $0xb8] sm:$0xf]
        %v3840 = vld [vmem:[%s997 + $0x8] sm:$0x1]
        %v3841 = vld [vmem:[%s997 + $0x14] sm:$0x1]
        %v3842 = vld [vmem:[%s997 + $0x20] sm:$0x1]
        %v3843 = vld [vmem:[%s997 + $0x2c] sm:$0x1]
        %v3844 = vld [vmem:[%s997 + $0x38] sm:$0x1]
        %v3845 = vld [vmem:[%s997 + $0x44] sm:$0x1]
        %v3846 = vld [vmem:[%s997 + $0x50] sm:$0x1]
        %v3847 = vld [vmem:[%s997 + $0x5c] sm:$0x1]
        %v3848 = vld [vmem:[%s997 + $0x68] sm:$0x1]
        %v3849 = vld [vmem:[%s997 + $0x74] sm:$0x1]
        %v3850 = vld [vmem:[%s997 + $0x80] sm:$0x1]
        %v3851 = vld [vmem:[%s997 + $0x8c] sm:$0x1]
        %v3852 = vld [vmem:[%s997 + $0x98] sm:$0x1]
        %v3853 = vld [vmem:[%s997 + $0xa4] sm:$0x1]
        %v3854 = vld [vmem:[%s997 + $0xb0] sm:$0x1]
        %v3855 = vld [vmem:[%s997 + $0xbc] sm:$0x1]
        %v3856 = vld [vmem:[%s997] sm:$0xe]
        %v3857 = vld [vmem:[%s997 + $0xc] sm:$0xe]
        %v3858 = vld [vmem:[%s997 + $0x18] sm:$0xe]
        %v3859 = vld [vmem:[%s997 + $0x24] sm:$0xe]
        %v3860 = vld [vmem:[%s997 + $0x30] sm:$0xe]
        %v3861 = vld [vmem:[%s997 + $0x3c] sm:$0xe]
        %v3862 = vld [vmem:[%s997 + $0x48] sm:$0xe]
        %v3863 = vld [vmem:[%s997 + $0x54] sm:$0xe]
        %v3864 = vld [vmem:[%s997 + $0x60] sm:$0xe]
        %v3865 = vld [vmem:[%s997 + $0x6c] sm:$0xe]
        %v3866 = vld [vmem:[%s997 + $0x78] sm:$0xe]
        %v3867 = vld [vmem:[%s997 + $0x84] sm:$0xe]
        %v3868 = vld [vmem:[%s997 + $0x90] sm:$0xe]
        %v3869 = vld [vmem:[%s997 + $0x9c] sm:$0xe]
        %v3870 = vld [vmem:[%s997 + $0xa8] sm:$0xe]
        %v3871 = vld [vmem:[%s997 + $0xb4] sm:$0xe]
        %v3904 = vunpack.c.l.b16 %v3680
        %v3905 = vunpack.c.l.b16 %v3681
        %v3906 = vunpack.c.l.b16 %v3682
        %v3907 = vunpack.c.l.b16 %v3683
        %v3908 = vunpack.c.l.b16 %v3684
        %v3909 = vunpack.c.l.b16 %v3685
        %v3910 = vunpack.c.l.b16 %v3686
        %v3911 = vunpack.c.l.b16 %v3687
        %v3912 = vunpack.c.l.b16 %v3688
        %v3913 = vunpack.c.l.b16 %v3689
        %v3914 = vunpack.c.l.b16 %v3690
        %v3915 = vunpack.c.l.b16 %v3691
        %v3916 = vunpack.c.l.b16 %v3692
        %v3917 = vunpack.c.l.b16 %v3693
        %v3918 = vunpack.c.l.b16 %v3694
        %v3919 = vunpack.c.l.b16 %v3695
        %v3920 = vunpack.c.l.b16 %v3696
        %v3921 = vunpack.c.l.b16 %v3697
        %v3922 = vunpack.c.l.b16 %v3698
        %v3923 = vunpack.c.l.b16 %v3699
        %v3924 = vunpack.c.l.b16 %v3700
        %v3925 = vunpack.c.l.b16 %v3701
        %v3926 = vunpack.c.l.b16 %v3702
        %v3927 = vunpack.c.l.b16 %v3703
        %v3928 = vunpack.c.l.b16 %v3704
        %v3929 = vunpack.c.l.b16 %v3705
        %v3930 = vunpack.c.l.b16 %v3706
        %v3931 = vunpack.c.l.b16 %v3707
        %v3932 = vunpack.c.l.b16 %v3708
        %v3933 = vunpack.c.l.b16 %v3709
        %v3934 = vunpack.c.l.b16 %v3710
        %v3935 = vunpack.c.l.b16 %v3711
        %v3936 = vpack.c.b16 %v3905, %v3904
        %v3937 = vpack.c.b16 %v3907, %v3906
        %v3938 = vpack.c.b16 %v3909, %v3908
        %v3939 = vpack.c.b16 %v3911, %v3910
        %v3940 = vpack.c.b16 %v3913, %v3912
        %v3941 = vpack.c.b16 %v3915, %v3914
        %v3942 = vpack.c.b16 %v3917, %v3916
        %v3943 = vpack.c.b16 %v3919, %v3918
        %v3944 = vpack.c.b16 %v3921, %v3920
        %v3945 = vpack.c.b16 %v3923, %v3922
        %v3946 = vpack.c.b16 %v3925, %v3924
        %v3947 = vpack.c.b16 %v3927, %v3926
        %v3948 = vpack.c.b16 %v3929, %v3928
        %v3949 = vpack.c.b16 %v3931, %v3930
        %v3950 = vpack.c.b16 %v3933, %v3932
        %v3951 = vpack.c.b16 %v3935, %v3934
        %v3968 = vunpack.c.l.b16 %v3712
        %v3969 = vunpack.c.l.b16 %v3713
        %v3970 = vunpack.c.l.b16 %v3714
        %v3971 = vunpack.c.l.b16 %v3715
        %v3972 = vunpack.c.l.b16 %v3716
        %v3973 = vunpack.c.l.b16 %v3717
        %v3974 = vunpack.c.l.b16 %v3718
        %v3975 = vunpack.c.l.b16 %v3719
        %v3976 = vunpack.c.l.b16 %v3720
        %v3977 = vunpack.c.l.b16 %v3721
        %v3978 = vunpack.c.l.b16 %v3722
        %v3979 = vunpack.c.l.b16 %v3723
        %v3980 = vunpack.c.l.b16 %v3724
        %v3981 = vunpack.c.l.b16 %v3725
        %v3982 = vunpack.c.l.b16 %v3726
        %v3983 = vunpack.c.l.b16 %v3727
        %v3984 = vpack.c.b16 %v3968, %v3968
        %v3985 = vpack.c.b16 %v3969, %v3969
        %v3986 = vpack.c.b16 %v3970, %v3970
        %v3987 = vpack.c.b16 %v3971, %v3971
        %v3988 = vpack.c.b16 %v3972, %v3972
        %v3989 = vpack.c.b16 %v3973, %v3973
        %v3990 = vpack.c.b16 %v3974, %v3974
        %v3991 = vpack.c.b16 %v3975, %v3975
        %v3992 = vpack.c.b16 %v3976, %v3976
        %v3993 = vpack.c.b16 %v3977, %v3977
        %v3994 = vpack.c.b16 %v3978, %v3978
        %v3995 = vpack.c.b16 %v3979, %v3979
        %v3996 = vpack.c.b16 %v3980, %v3980
        %v3997 = vpack.c.b16 %v3981, %v3981
        %v3998 = vpack.c.b16 %v3982, %v3982
        %v3999 = vpack.c.b16 %v3983, %v3983
        %v4001 = vshrl.u32 %v3936, 16
        %v4003 = vshll.u32 %v3936, 16
        %v4005 = vrot.slane %v4003, 1
        %v4006 = vor.u32 %v4001, %v4005
        %v4008 = vshll.u32 %v3984, 16
        %v4010 = vrot.slane %v4008, 1
        %v4011 = vsel %vm1190, %v4006, %v4010
        %v4013 = vshrl.u32 %v3937, 16
        %v4015 = vshll.u32 %v3937, 16
        %v4017 = vrot.slane %v4015, 1
        %v4018 = vor.u32 %v4013, %v4017
        %v4020 = vshll.u32 %v3985, 16
        %v4022 = vrot.slane %v4020, 1
        %v4023 = vsel %vm1190, %v4018, %v4022
        %v4025 = vshrl.u32 %v3938, 16
        %v4027 = vshll.u32 %v3938, 16
        %v4029 = vrot.slane %v4027, 1
        %v4030 = vor.u32 %v4025, %v4029
        %v4032 = vshll.u32 %v3986, 16
        %v4034 = vrot.slane %v4032, 1
        %v4035 = vsel %vm1190, %v4030, %v4034
        %v4037 = vshrl.u32 %v3939, 16
        %v4039 = vshll.u32 %v3939, 16
        %v4041 = vrot.slane %v4039, 1
        %v4042 = vor.u32 %v4037, %v4041
        %v4044 = vshll.u32 %v3987, 16
        %v4046 = vrot.slane %v4044, 1
        %v4047 = vsel %vm1190, %v4042, %v4046
        %v4049 = vshrl.u32 %v3940, 16
        %v4051 = vshll.u32 %v3940, 16
        %v4053 = vrot.slane %v4051, 1
        %v4054 = vor.u32 %v4049, %v4053
        %v4056 = vshll.u32 %v3988, 16
        %v4058 = vrot.slane %v4056, 1
        %v4059 = vsel %vm1190, %v4054, %v4058
        %v4061 = vshrl.u32 %v3941, 16
        %v4063 = vshll.u32 %v3941, 16
        %v4065 = vrot.slane %v4063, 1
        %v4066 = vor.u32 %v4061, %v4065
        %v4068 = vshll.u32 %v3989, 16
        %v4070 = vrot.slane %v4068, 1
        %v4071 = vsel %vm1190, %v4066, %v4070
        %v4073 = vshrl.u32 %v3942, 16
        %v4075 = vshll.u32 %v3942, 16
        %v4077 = vrot.slane %v4075, 1
        %v4078 = vor.u32 %v4073, %v4077
        %v4080 = vshll.u32 %v3990, 16
        %v4082 = vrot.slane %v4080, 1
        %v4083 = vsel %vm1190, %v4078, %v4082
        %v4085 = vshrl.u32 %v3943, 16
        %v4087 = vshll.u32 %v3943, 16
        %v4089 = vrot.slane %v4087, 1
        %v4090 = vor.u32 %v4085, %v4089
        %v4092 = vshll.u32 %v3991, 16
        %v4094 = vrot.slane %v4092, 1
        %v4095 = vsel %vm1190, %v4090, %v4094
        %v4097 = vshrl.u32 %v3944, 16
        %v4099 = vshll.u32 %v3944, 16
        %v4101 = vrot.slane %v4099, 1
        %v4102 = vor.u32 %v4097, %v4101
        %v4104 = vshll.u32 %v3992, 16
        %v4106 = vrot.slane %v4104, 1
        %v4107 = vsel %vm1190, %v4102, %v4106
        %v4109 = vshrl.u32 %v3945, 16
        %v4111 = vshll.u32 %v3945, 16
        %v4113 = vrot.slane %v4111, 1
        %v4114 = vor.u32 %v4109, %v4113
        %v4116 = vshll.u32 %v3993, 16
        %v4118 = vrot.slane %v4116, 1
        %v4119 = vsel %vm1190, %v4114, %v4118
        %v4121 = vshrl.u32 %v3946, 16
        %v4123 = vshll.u32 %v3946, 16
        %v4125 = vrot.slane %v4123, 1
        %v4126 = vor.u32 %v4121, %v4125
        %v4128 = vshll.u32 %v3994, 16
        %v4130 = vrot.slane %v4128, 1
        %v4131 = vsel %vm1190, %v4126, %v4130
        %v4133 = vshrl.u32 %v3947, 16
        %v4135 = vshll.u32 %v3947, 16
        %v4137 = vrot.slane %v4135, 1
        %v4138 = vor.u32 %v4133, %v4137
        %v4140 = vshll.u32 %v3995, 16
        %v4142 = vrot.slane %v4140, 1
        %v4143 = vsel %vm1190, %v4138, %v4142
        %v4145 = vshrl.u32 %v3948, 16
        %v4147 = vshll.u32 %v3948, 16
        %v4149 = vrot.slane %v4147, 1
        %v4150 = vor.u32 %v4145, %v4149
        %v4152 = vshll.u32 %v3996, 16
        %v4154 = vrot.slane %v4152, 1
        %v4155 = vsel %vm1190, %v4150, %v4154
        %v4157 = vshrl.u32 %v3949, 16
        %v4159 = vshll.u32 %v3949, 16
        %v4161 = vrot.slane %v4159, 1
        %v4162 = vor.u32 %v4157, %v4161
        %v4164 = vshll.u32 %v3997, 16
        %v4166 = vrot.slane %v4164, 1
        %v4167 = vsel %vm1190, %v4162, %v4166
        %v4169 = vshrl.u32 %v3950, 16
        %v4171 = vshll.u32 %v3950, 16
        %v4173 = vrot.slane %v4171, 1
        %v4174 = vor.u32 %v4169, %v4173
        %v4176 = vshll.u32 %v3998, 16
        %v4178 = vrot.slane %v4176, 1
        %v4179 = vsel %vm1190, %v4174, %v4178
        %v4181 = vshrl.u32 %v3951, 16
        %v4183 = vshll.u32 %v3951, 16
        %v4185 = vrot.slane %v4183, 1
        %v4186 = vor.u32 %v4181, %v4185
        %v4188 = vshll.u32 %v3999, 16
        %v4190 = vrot.slane %v4188, 1
        %v4191 = vsel %vm1190, %v4186, %v4190
        %4192 = vrot.lane.b32.xlu0 %v4011, 4
        %v4193 = vpop.permute.xlu0 %4192
        %4194 = vrot.lane.b32.xlu0 %v4023, 4
        %v4195 = vpop.permute.xlu0 %4194
        %4196 = vrot.lane.b32.xlu0 %v4035, 4
        %v4197 = vpop.permute.xlu0 %4196
        %4198 = vrot.lane.b32.xlu0 %v4047, 4
        %v4199 = vpop.permute.xlu0 %4198
        %4200 = vrot.lane.b32.xlu0 %v4059, 4
        %v4201 = vpop.permute.xlu0 %4200
        %4202 = vrot.lane.b32.xlu0 %v4071, 4
        %v4203 = vpop.permute.xlu0 %4202
        %4204 = vrot.lane.b32.xlu0 %v4083, 4
        %v4205 = vpop.permute.xlu0 %4204
        %4206 = vrot.lane.b32.xlu0 %v4095, 4
        %v4207 = vpop.permute.xlu0 %4206
        %4208 = vrot.lane.b32.xlu0 %v4107, 4
        %v4209 = vpop.permute.xlu0 %4208
        %4210 = vrot.lane.b32.xlu0 %v4119, 4
        %v4211 = vpop.permute.xlu0 %4210
        %4212 = vrot.lane.b32.xlu0 %v4131, 4
        %v4213 = vpop.permute.xlu0 %4212
        %4214 = vrot.lane.b32.xlu0 %v4143, 4
        %v4215 = vpop.permute.xlu0 %4214
        %4216 = vrot.lane.b32.xlu0 %v4155, 4
        %v4217 = vpop.permute.xlu0 %4216
        %4218 = vrot.lane.b32.xlu0 %v4167, 4
        %v4219 = vpop.permute.xlu0 %4218
        %4220 = vrot.lane.b32.xlu0 %v4179, 4
        %v4221 = vpop.permute.xlu0 %4220
        %4222 = vrot.lane.b32.xlu0 %v4191, 4
        %v4223 = vpop.permute.xlu0 %4222
        %v4240 = vunpack.c.l.b16 %v3728
        %v4241 = vunpack.c.l.b16 %v3729
        %v4242 = vunpack.c.l.b16 %v3730
        %v4243 = vunpack.c.l.b16 %v3731
        %v4244 = vunpack.c.l.b16 %v3732
        %v4245 = vunpack.c.l.b16 %v3733
        %v4246 = vunpack.c.l.b16 %v3734
        %v4247 = vunpack.c.l.b16 %v3735
        %v4248 = vunpack.c.l.b16 %v3736
        %v4249 = vunpack.c.l.b16 %v3737
        %v4250 = vunpack.c.l.b16 %v3738
        %v4251 = vunpack.c.l.b16 %v3739
        %v4252 = vunpack.c.l.b16 %v3740
        %v4253 = vunpack.c.l.b16 %v3741
        %v4254 = vunpack.c.l.b16 %v3742
        %v4255 = vunpack.c.l.b16 %v3743
        %v4256 = vpack.c.b16 %v3905, %v4240
        %v4257 = vpack.c.b16 %v3907, %v4241
        %v4258 = vpack.c.b16 %v3909, %v4242
        %v4259 = vpack.c.b16 %v3911, %v4243
        %v4260 = vpack.c.b16 %v3913, %v4244
        %v4261 = vpack.c.b16 %v3915, %v4245
        %v4262 = vpack.c.b16 %v3917, %v4246
        %v4263 = vpack.c.b16 %v3919, %v4247
        %v4264 = vpack.c.b16 %v3921, %v4248
        %v4265 = vpack.c.b16 %v3923, %v4249
        %v4266 = vpack.c.b16 %v3925, %v4250
        %v4267 = vpack.c.b16 %v3927, %v4251
        %v4268 = vpack.c.b16 %v3929, %v4252
        %v4269 = vpack.c.b16 %v3931, %v4253
        %v4270 = vpack.c.b16 %v3933, %v4254
        %v4271 = vpack.c.b16 %v3935, %v4255
        %v4272 = vrot.slane %v4256, 1
        %v4273 = vrot.slane %v3984, 1
        %v4274 = vsel %vm1463, %v4272, %v4273
        %v4275 = vrot.slane %v4257, 1
        %v4276 = vrot.slane %v3985, 1
        %v4277 = vsel %vm1463, %v4275, %v4276
        %v4278 = vrot.slane %v4258, 1
        %v4279 = vrot.slane %v3986, 1
        %v4280 = vsel %vm1463, %v4278, %v4279
        %v4281 = vrot.slane %v4259, 1
        %v4282 = vrot.slane %v3987, 1
        %v4283 = vsel %vm1463, %v4281, %v4282
        %v4284 = vrot.slane %v4260, 1
        %v4285 = vrot.slane %v3988, 1
        %v4286 = vsel %vm1463, %v4284, %v4285
        %v4287 = vrot.slane %v4261, 1
        %v4288 = vrot.slane %v3989, 1
        %v4289 = vsel %vm1463, %v4287, %v4288
        %v4290 = vrot.slane %v4262, 1
        %v4291 = vrot.slane %v3990, 1
        %v4292 = vsel %vm1463, %v4290, %v4291
        %v4293 = vrot.slane %v4263, 1
        %v4294 = vrot.slane %v3991, 1
        %v4295 = vsel %vm1463, %v4293, %v4294
        %v4296 = vrot.slane %v4264, 1
        %v4297 = vrot.slane %v3992, 1
        %v4298 = vsel %vm1463, %v4296, %v4297
        %v4299 = vrot.slane %v4265, 1
        %v4300 = vrot.slane %v3993, 1
        %v4301 = vsel %vm1463, %v4299, %v4300
        %v4302 = vrot.slane %v4266, 1
        %v4303 = vrot.slane %v3994, 1
        %v4304 = vsel %vm1463, %v4302, %v4303
        %v4305 = vrot.slane %v4267, 1
        %v4306 = vrot.slane %v3995, 1
        %v4307 = vsel %vm1463, %v4305, %v4306
        %v4308 = vrot.slane %v4268, 1
        %v4309 = vrot.slane %v3996, 1
        %v4310 = vsel %vm1463, %v4308, %v4309
        %v4311 = vrot.slane %v4269, 1
        %v4312 = vrot.slane %v3997, 1
        %v4313 = vsel %vm1463, %v4311, %v4312
        %v4314 = vrot.slane %v4270, 1
        %v4315 = vrot.slane %v3998, 1
        %v4316 = vsel %vm1463, %v4314, %v4315
        %v4317 = vrot.slane %v4271, 1
        %v4318 = vrot.slane %v3999, 1
        %v4319 = vsel %vm1463, %v4317, %v4318
        %4320 = vrot.lane.b32.xlu0 %v4274, 8
        %v4321 = vpop.permute.xlu0 %4320
        %4322 = vrot.lane.b32.xlu0 %v4277, 8
        %v4323 = vpop.permute.xlu0 %4322
        %4324 = vrot.lane.b32.xlu0 %v4280, 8
        %v4325 = vpop.permute.xlu0 %4324
        %4326 = vrot.lane.b32.xlu0 %v4283, 8
        %v4327 = vpop.permute.xlu0 %4326
        %4328 = vrot.lane.b32.xlu0 %v4286, 8
        %v4329 = vpop.permute.xlu0 %4328
        %4330 = vrot.lane.b32.xlu0 %v4289, 8
        %v4331 = vpop.permute.xlu0 %4330
        %4332 = vrot.lane.b32.xlu0 %v4292, 8
        %v4333 = vpop.permute.xlu0 %4332
        %4334 = vrot.lane.b32.xlu0 %v4295, 8
        %v4335 = vpop.permute.xlu0 %4334
        %4336 = vrot.lane.b32.xlu0 %v4298, 8
        %v4337 = vpop.permute.xlu0 %4336
        %4338 = vrot.lane.b32.xlu0 %v4301, 8
        %v4339 = vpop.permute.xlu0 %4338
        %4340 = vrot.lane.b32.xlu0 %v4304, 8
        %v4341 = vpop.permute.xlu0 %4340
        %4342 = vrot.lane.b32.xlu0 %v4307, 8
        %v4343 = vpop.permute.xlu0 %4342
        %4344 = vrot.lane.b32.xlu0 %v4310, 8
        %v4345 = vpop.permute.xlu0 %4344
        %4346 = vrot.lane.b32.xlu0 %v4313, 8
        %v4347 = vpop.permute.xlu0 %4346
        %4348 = vrot.lane.b32.xlu0 %v4316, 8
        %v4349 = vpop.permute.xlu0 %4348
        %4350 = vrot.lane.b32.xlu0 %v4319, 8
        %v4351 = vpop.permute.xlu0 %4350
        %v4384 = vunpack.c.l.b16 %v3744
        %v4385 = vunpack.c.l.b16 %v3745
        %v4386 = vunpack.c.l.b16 %v3746
        %v4387 = vunpack.c.l.b16 %v3747
        %v4388 = vunpack.c.l.b16 %v3748
        %v4389 = vunpack.c.l.b16 %v3749
        %v4390 = vunpack.c.l.b16 %v3750
        %v4391 = vunpack.c.l.b16 %v3751
        %v4392 = vunpack.c.l.b16 %v3752
        %v4393 = vunpack.c.l.b16 %v3753
        %v4394 = vunpack.c.l.b16 %v3754
        %v4395 = vunpack.c.l.b16 %v3755
        %v4396 = vunpack.c.l.b16 %v3756
        %v4397 = vunpack.c.l.b16 %v3757
        %v4398 = vunpack.c.l.b16 %v3758
        %v4399 = vunpack.c.l.b16 %v3759
        %v4400 = vunpack.c.l.b16 %v3760
        %v4401 = vunpack.c.l.b16 %v3761
        %v4402 = vunpack.c.l.b16 %v3762
        %v4403 = vunpack.c.l.b16 %v3763
        %v4404 = vunpack.c.l.b16 %v3764
        %v4405 = vunpack.c.l.b16 %v3765
        %v4406 = vunpack.c.l.b16 %v3766
        %v4407 = vunpack.c.l.b16 %v3767
        %v4408 = vunpack.c.l.b16 %v3768
        %v4409 = vunpack.c.l.b16 %v3769
        %v4410 = vunpack.c.l.b16 %v3770
        %v4411 = vunpack.c.l.b16 %v3771
        %v4412 = vunpack.c.l.b16 %v3772
        %v4413 = vunpack.c.l.b16 %v3773
        %v4414 = vunpack.c.l.b16 %v3774
        %v4415 = vunpack.c.l.b16 %v3775
        %v4416 = vpack.c.b16 %v4385, %v4384
        %v4417 = vpack.c.b16 %v4387, %v4386
        %v4418 = vpack.c.b16 %v4389, %v4388
        %v4419 = vpack.c.b16 %v4391, %v4390
        %v4420 = vpack.c.b16 %v4393, %v4392
        %v4421 = vpack.c.b16 %v4395, %v4394
        %v4422 = vpack.c.b16 %v4397, %v4396
        %v4423 = vpack.c.b16 %v4399, %v4398
        %v4424 = vpack.c.b16 %v4401, %v4400
        %v4425 = vpack.c.b16 %v4403, %v4402
        %v4426 = vpack.c.b16 %v4405, %v4404
        %v4427 = vpack.c.b16 %v4407, %v4406
        %v4428 = vpack.c.b16 %v4409, %v4408
        %v4429 = vpack.c.b16 %v4411, %v4410
        %v4430 = vpack.c.b16 %v4413, %v4412
        %v4431 = vpack.c.b16 %v4415, %v4414
        %4432 = vrot.lane.b32.xlu0 %v4416, 12
        %v4433 = vpop.permute.xlu0 %4432
        %4434 = vrot.lane.b32.xlu0 %v4417, 12
        %v4435 = vpop.permute.xlu0 %4434
        %4436 = vrot.lane.b32.xlu0 %v4418, 12
        %v4437 = vpop.permute.xlu0 %4436
        %4438 = vrot.lane.b32.xlu0 %v4419, 12
        %v4439 = vpop.permute.xlu0 %4438
        %4440 = vrot.lane.b32.xlu0 %v4420, 12
        %v4441 = vpop.permute.xlu0 %4440
        %4442 = vrot.lane.b32.xlu0 %v4421, 12
        %v4443 = vpop.permute.xlu0 %4442
        %4444 = vrot.lane.b32.xlu0 %v4422, 12
        %v4445 = vpop.permute.xlu0 %4444
        %4446 = vrot.lane.b32.xlu0 %v4423, 12
        %v4447 = vpop.permute.xlu0 %4446
        %4448 = vrot.lane.b32.xlu0 %v4424, 12
        %v4449 = vpop.permute.xlu0 %4448
        %4450 = vrot.lane.b32.xlu0 %v4425, 12
        %v4451 = vpop.permute.xlu0 %4450
        %4452 = vrot.lane.b32.xlu0 %v4426, 12
        %v4453 = vpop.permute.xlu0 %4452
        %4454 = vrot.lane.b32.xlu0 %v4427, 12
        %v4455 = vpop.permute.xlu0 %4454
        %4456 = vrot.lane.b32.xlu0 %v4428, 12
        %v4457 = vpop.permute.xlu0 %4456
        %4458 = vrot.lane.b32.xlu0 %v4429, 12
        %v4459 = vpop.permute.xlu0 %4458
        %4460 = vrot.lane.b32.xlu0 %v4430, 12
        %v4461 = vpop.permute.xlu0 %4460
        %4462 = vrot.lane.b32.xlu0 %v4431, 12
        %v4463 = vpop.permute.xlu0 %4462
        %v4480 = vunpack.c.l.b16 %v3776
        %v4481 = vunpack.c.l.b16 %v3777
        %v4482 = vunpack.c.l.b16 %v3778
        %v4483 = vunpack.c.l.b16 %v3779
        %v4484 = vunpack.c.l.b16 %v3780
        %v4485 = vunpack.c.l.b16 %v3781
        %v4486 = vunpack.c.l.b16 %v3782
        %v4487 = vunpack.c.l.b16 %v3783
        %v4488 = vunpack.c.l.b16 %v3784
        %v4489 = vunpack.c.l.b16 %v3785
        %v4490 = vunpack.c.l.b16 %v3786
        %v4491 = vunpack.c.l.b16 %v3787
        %v4492 = vunpack.c.l.b16 %v3788
        %v4493 = vunpack.c.l.b16 %v3789
        %v4494 = vunpack.c.l.b16 %v3790
        %v4495 = vunpack.c.l.b16 %v3791
        %v4496 = vpack.c.b16 %v4480, %v4480
        %v4497 = vpack.c.b16 %v4481, %v4481
        %v4498 = vpack.c.b16 %v4482, %v4482
        %v4499 = vpack.c.b16 %v4483, %v4483
        %v4500 = vpack.c.b16 %v4484, %v4484
        %v4501 = vpack.c.b16 %v4485, %v4485
        %v4502 = vpack.c.b16 %v4486, %v4486
        %v4503 = vpack.c.b16 %v4487, %v4487
        %v4504 = vpack.c.b16 %v4488, %v4488
        %v4505 = vpack.c.b16 %v4489, %v4489
        %v4506 = vpack.c.b16 %v4490, %v4490
        %v4507 = vpack.c.b16 %v4491, %v4491
        %v4508 = vpack.c.b16 %v4492, %v4492
        %v4509 = vpack.c.b16 %v4493, %v4493
        %v4510 = vpack.c.b16 %v4494, %v4494
        %v4511 = vpack.c.b16 %v4495, %v4495
        %v4513 = vshrl.u32 %v4416, 16
        %v4515 = vshll.u32 %v4416, 16
        %v4517 = vrot.slane %v4515, 1
        %v4518 = vor.u32 %v4513, %v4517
        %v4520 = vshll.u32 %v4496, 16
        %v4522 = vrot.slane %v4520, 1
        %v4523 = vsel %vm1190, %v4518, %v4522
        %v4525 = vshrl.u32 %v4417, 16
        %v4527 = vshll.u32 %v4417, 16
        %v4529 = vrot.slane %v4527, 1
        %v4530 = vor.u32 %v4525, %v4529
        %v4532 = vshll.u32 %v4497, 16
        %v4534 = vrot.slane %v4532, 1
        %v4535 = vsel %vm1190, %v4530, %v4534
        %v4537 = vshrl.u32 %v4418, 16
        %v4539 = vshll.u32 %v4418, 16
        %v4541 = vrot.slane %v4539, 1
        %v4542 = vor.u32 %v4537, %v4541
        %v4544 = vshll.u32 %v4498, 16
        %v4546 = vrot.slane %v4544, 1
        %v4547 = vsel %vm1190, %v4542, %v4546
        %v4549 = vshrl.u32 %v4419, 16
        %v4551 = vshll.u32 %v4419, 16
        %v4553 = vrot.slane %v4551, 1
        %v4554 = vor.u32 %v4549, %v4553
        %v4556 = vshll.u32 %v4499, 16
        %v4558 = vrot.slane %v4556, 1
        %v4559 = vsel %vm1190, %v4554, %v4558
        %v4561 = vshrl.u32 %v4420, 16
        %v4563 = vshll.u32 %v4420, 16
        %v4565 = vrot.slane %v4563, 1
        %v4566 = vor.u32 %v4561, %v4565
        %v4568 = vshll.u32 %v4500, 16
        %v4570 = vrot.slane %v4568, 1
        %v4571 = vsel %vm1190, %v4566, %v4570
        %v4573 = vshrl.u32 %v4421, 16
        %v4575 = vshll.u32 %v4421, 16
        %v4577 = vrot.slane %v4575, 1
        %v4578 = vor.u32 %v4573, %v4577
        %v4580 = vshll.u32 %v4501, 16
        %v4582 = vrot.slane %v4580, 1
        %v4583 = vsel %vm1190, %v4578, %v4582
        %v4585 = vshrl.u32 %v4422, 16
        %v4587 = vshll.u32 %v4422, 16
        %v4589 = vrot.slane %v4587, 1
        %v4590 = vor.u32 %v4585, %v4589
        %v4592 = vshll.u32 %v4502, 16
        %v4594 = vrot.slane %v4592, 1
        %v4595 = vsel %vm1190, %v4590, %v4594
        %v4597 = vshrl.u32 %v4423, 16
        %v4599 = vshll.u32 %v4423, 16
        %v4601 = vrot.slane %v4599, 1
        %v4602 = vor.u32 %v4597, %v4601
        %v4604 = vshll.u32 %v4503, 16
        %v4606 = vrot.slane %v4604, 1
        %v4607 = vsel %vm1190, %v4602, %v4606
        %v4609 = vshrl.u32 %v4424, 16
        %v4611 = vshll.u32 %v4424, 16
        %v4613 = vrot.slane %v4611, 1
        %v4614 = vor.u32 %v4609, %v4613
        %v4616 = vshll.u32 %v4504, 16
        %v4618 = vrot.slane %v4616, 1
        %v4619 = vsel %vm1190, %v4614, %v4618
        %v4621 = vshrl.u32 %v4425, 16
        %v4623 = vshll.u32 %v4425, 16
        %v4625 = vrot.slane %v4623, 1
        %v4626 = vor.u32 %v4621, %v4625
        %v4628 = vshll.u32 %v4505, 16
        %v4630 = vrot.slane %v4628, 1
        %v4631 = vsel %vm1190, %v4626, %v4630
        %v4633 = vshrl.u32 %v4426, 16
        %v4635 = vshll.u32 %v4426, 16
        %v4637 = vrot.slane %v4635, 1
        %v4638 = vor.u32 %v4633, %v4637
        %v4640 = vshll.u32 %v4506, 16
        %v4642 = vrot.slane %v4640, 1
        %v4643 = vsel %vm1190, %v4638, %v4642
        %v4645 = vshrl.u32 %v4427, 16
        %v4647 = vshll.u32 %v4427, 16
        %v4649 = vrot.slane %v4647, 1
        %v4650 = vor.u32 %v4645, %v4649
        %v4652 = vshll.u32 %v4507, 16
        %v4654 = vrot.slane %v4652, 1
        %v4655 = vsel %vm1190, %v4650, %v4654
        %v4657 = vshrl.u32 %v4428, 16
        %v4659 = vshll.u32 %v4428, 16
        %v4661 = vrot.slane %v4659, 1
        %v4662 = vor.u32 %v4657, %v4661
        %v4664 = vshll.u32 %v4508, 16
        %v4666 = vrot.slane %v4664, 1
        %v4667 = vsel %vm1190, %v4662, %v4666
        %v4669 = vshrl.u32 %v4429, 16
        %v4671 = vshll.u32 %v4429, 16
        %v4673 = vrot.slane %v4671, 1
        %v4674 = vor.u32 %v4669, %v4673
        %v4676 = vshll.u32 %v4509, 16
        %v4678 = vrot.slane %v4676, 1
        %v4679 = vsel %vm1190, %v4674, %v4678
        %v4681 = vshrl.u32 %v4430, 16
        %v4683 = vshll.u32 %v4430, 16
        %v4685 = vrot.slane %v4683, 1
        %v4686 = vor.u32 %v4681, %v4685
        %v4688 = vshll.u32 %v4510, 16
        %v4690 = vrot.slane %v4688, 1
        %v4691 = vsel %vm1190, %v4686, %v4690
        %v4693 = vshrl.u32 %v4431, 16
        %v4695 = vshll.u32 %v4431, 16
        %v4697 = vrot.slane %v4695, 1
        %v4698 = vor.u32 %v4693, %v4697
        %v4700 = vshll.u32 %v4511, 16
        %v4702 = vrot.slane %v4700, 1
        %v4703 = vsel %vm1190, %v4698, %v4702
        %4704 = vrot.lane.b32.xlu0 %v4523, 16
        %v4705 = vpop.permute.xlu0 %4704
        %4706 = vrot.lane.b32.xlu0 %v4535, 16
        %v4707 = vpop.permute.xlu0 %4706
        %4708 = vrot.lane.b32.xlu0 %v4547, 16
        %v4709 = vpop.permute.xlu0 %4708
        %4710 = vrot.lane.b32.xlu0 %v4559, 16
        %v4711 = vpop.permute.xlu0 %4710
        %4712 = vrot.lane.b32.xlu0 %v4571, 16
        %v4713 = vpop.permute.xlu0 %4712
        %4714 = vrot.lane.b32.xlu0 %v4583, 16
        %v4715 = vpop.permute.xlu0 %4714
        %4716 = vrot.lane.b32.xlu0 %v4595, 16
        %v4717 = vpop.permute.xlu0 %4716
        %4718 = vrot.lane.b32.xlu0 %v4607, 16
        %v4719 = vpop.permute.xlu0 %4718
        %4720 = vrot.lane.b32.xlu0 %v4619, 16
        %v4721 = vpop.permute.xlu0 %4720
        %4722 = vrot.lane.b32.xlu0 %v4631, 16
        %v4723 = vpop.permute.xlu0 %4722
        %4724 = vrot.lane.b32.xlu0 %v4643, 16
        %v4725 = vpop.permute.xlu0 %4724
        %4726 = vrot.lane.b32.xlu0 %v4655, 16
        %v4727 = vpop.permute.xlu0 %4726
        %4728 = vrot.lane.b32.xlu0 %v4667, 16
        %v4729 = vpop.permute.xlu0 %4728
        %4730 = vrot.lane.b32.xlu0 %v4679, 16
        %v4731 = vpop.permute.xlu0 %4730
        %4732 = vrot.lane.b32.xlu0 %v4691, 16
        %v4733 = vpop.permute.xlu0 %4732
        %4734 = vrot.lane.b32.xlu0 %v4703, 16
        %v4735 = vpop.permute.xlu0 %4734
        %v4752 = vunpack.c.l.b16 %v3792
        %v4753 = vunpack.c.l.b16 %v3793
        %v4754 = vunpack.c.l.b16 %v3794
        %v4755 = vunpack.c.l.b16 %v3795
        %v4756 = vunpack.c.l.b16 %v3796
        %v4757 = vunpack.c.l.b16 %v3797
        %v4758 = vunpack.c.l.b16 %v3798
        %v4759 = vunpack.c.l.b16 %v3799
        %v4760 = vunpack.c.l.b16 %v3800
        %v4761 = vunpack.c.l.b16 %v3801
        %v4762 = vunpack.c.l.b16 %v3802
        %v4763 = vunpack.c.l.b16 %v3803
        %v4764 = vunpack.c.l.b16 %v3804
        %v4765 = vunpack.c.l.b16 %v3805
        %v4766 = vunpack.c.l.b16 %v3806
        %v4767 = vunpack.c.l.b16 %v3807
        %v4768 = vpack.c.b16 %v4385, %v4752
        %v4769 = vpack.c.b16 %v4387, %v4753
        %v4770 = vpack.c.b16 %v4389, %v4754
        %v4771 = vpack.c.b16 %v4391, %v4755
        %v4772 = vpack.c.b16 %v4393, %v4756
        %v4773 = vpack.c.b16 %v4395, %v4757
        %v4774 = vpack.c.b16 %v4397, %v4758
        %v4775 = vpack.c.b16 %v4399, %v4759
        %v4776 = vpack.c.b16 %v4401, %v4760
        %v4777 = vpack.c.b16 %v4403, %v4761
        %v4778 = vpack.c.b16 %v4405, %v4762
        %v4779 = vpack.c.b16 %v4407, %v4763
        %v4780 = vpack.c.b16 %v4409, %v4764
        %v4781 = vpack.c.b16 %v4411, %v4765
        %v4782 = vpack.c.b16 %v4413, %v4766
        %v4783 = vpack.c.b16 %v4415, %v4767
        %v4784 = vrot.slane %v4768, 1
        %v4785 = vrot.slane %v4496, 1
        %v4786 = vsel %vm1463, %v4784, %v4785
        %v4787 = vrot.slane %v4769, 1
        %v4788 = vrot.slane %v4497, 1
        %v4789 = vsel %vm1463, %v4787, %v4788
        %v4790 = vrot.slane %v4770, 1
        %v4791 = vrot.slane %v4498, 1
        %v4792 = vsel %vm1463, %v4790, %v4791
        %v4793 = vrot.slane %v4771, 1
        %v4794 = vrot.slane %v4499, 1
        %v4795 = vsel %vm1463, %v4793, %v4794
        %v4796 = vrot.slane %v4772, 1
        %v4797 = vrot.slane %v4500, 1
        %v4798 = vsel %vm1463, %v4796, %v4797
        %v4799 = vrot.slane %v4773, 1
        %v4800 = vrot.slane %v4501, 1
        %v4801 = vsel %vm1463, %v4799, %v4800
        %v4802 = vrot.slane %v4774, 1
        %v4803 = vrot.slane %v4502, 1
        %v4804 = vsel %vm1463, %v4802, %v4803
        %v4805 = vrot.slane %v4775, 1
        %v4806 = vrot.slane %v4503, 1
        %v4807 = vsel %vm1463, %v4805, %v4806
        %v4808 = vrot.slane %v4776, 1
        %v4809 = vrot.slane %v4504, 1
        %v4810 = vsel %vm1463, %v4808, %v4809
        %v4811 = vrot.slane %v4777, 1
        %v4812 = vrot.slane %v4505, 1
        %v4813 = vsel %vm1463, %v4811, %v4812
        %v4814 = vrot.slane %v4778, 1
        %v4815 = vrot.slane %v4506, 1
        %v4816 = vsel %vm1463, %v4814, %v4815
        %v4817 = vrot.slane %v4779, 1
        %v4818 = vrot.slane %v4507, 1
        %v4819 = vsel %vm1463, %v4817, %v4818
        %v4820 = vrot.slane %v4780, 1
        %v4821 = vrot.slane %v4508, 1
        %v4822 = vsel %vm1463, %v4820, %v4821
        %v4823 = vrot.slane %v4781, 1
        %v4824 = vrot.slane %v4509, 1
        %v4825 = vsel %vm1463, %v4823, %v4824
        %v4826 = vrot.slane %v4782, 1
        %v4827 = vrot.slane %v4510, 1
        %v4828 = vsel %vm1463, %v4826, %v4827
        %v4829 = vrot.slane %v4783, 1
        %v4830 = vrot.slane %v4511, 1
        %v4831 = vsel %vm1463, %v4829, %v4830
        %4832 = vrot.lane.b32.xlu0 %v4786, 20
        %v4833 = vpop.permute.xlu0 %4832
        %4834 = vrot.lane.b32.xlu0 %v4789, 20
        %v4835 = vpop.permute.xlu0 %4834
        %4836 = vrot.lane.b32.xlu0 %v4792, 20
        %v4837 = vpop.permute.xlu0 %4836
        %4838 = vrot.lane.b32.xlu0 %v4795, 20
        %v4839 = vpop.permute.xlu0 %4838
        %4840 = vrot.lane.b32.xlu0 %v4798, 20
        %v4841 = vpop.permute.xlu0 %4840
        %4842 = vrot.lane.b32.xlu0 %v4801, 20
        %v4843 = vpop.permute.xlu0 %4842
        %4844 = vrot.lane.b32.xlu0 %v4804, 20
        %v4845 = vpop.permute.xlu0 %4844
        %4846 = vrot.lane.b32.xlu0 %v4807, 20
        %v4847 = vpop.permute.xlu0 %4846
        %4848 = vrot.lane.b32.xlu0 %v4810, 20
        %v4849 = vpop.permute.xlu0 %4848
        %4850 = vrot.lane.b32.xlu0 %v4813, 20
        %v4851 = vpop.permute.xlu0 %4850
        %4852 = vrot.lane.b32.xlu0 %v4816, 20
        %v4853 = vpop.permute.xlu0 %4852
        %4854 = vrot.lane.b32.xlu0 %v4819, 20
        %v4855 = vpop.permute.xlu0 %4854
        %4856 = vrot.lane.b32.xlu0 %v4822, 20
        %v4857 = vpop.permute.xlu0 %4856
        %4858 = vrot.lane.b32.xlu0 %v4825, 20
        %v4859 = vpop.permute.xlu0 %4858
        %4860 = vrot.lane.b32.xlu0 %v4828, 20
        %v4861 = vpop.permute.xlu0 %4860
        %4862 = vrot.lane.b32.xlu0 %v4831, 20
        %v4863 = vpop.permute.xlu0 %4862
        %v4896 = vunpack.c.l.b16 %v3808
        %v4897 = vunpack.c.l.b16 %v3809
        %v4898 = vunpack.c.l.b16 %v3810
        %v4899 = vunpack.c.l.b16 %v3811
        %v4900 = vunpack.c.l.b16 %v3812
        %v4901 = vunpack.c.l.b16 %v3813
        %v4902 = vunpack.c.l.b16 %v3814
        %v4903 = vunpack.c.l.b16 %v3815
        %v4904 = vunpack.c.l.b16 %v3816
        %v4905 = vunpack.c.l.b16 %v3817
        %v4906 = vunpack.c.l.b16 %v3818
        %v4907 = vunpack.c.l.b16 %v3819
        %v4908 = vunpack.c.l.b16 %v3820
        %v4909 = vunpack.c.l.b16 %v3821
        %v4910 = vunpack.c.l.b16 %v3822
        %v4911 = vunpack.c.l.b16 %v3823
        %v4912 = vunpack.c.l.b16 %v3824
        %v4913 = vunpack.c.l.b16 %v3825
        %v4914 = vunpack.c.l.b16 %v3826
        %v4915 = vunpack.c.l.b16 %v3827
        %v4916 = vunpack.c.l.b16 %v3828
        %v4917 = vunpack.c.l.b16 %v3829
        %v4918 = vunpack.c.l.b16 %v3830
        %v4919 = vunpack.c.l.b16 %v3831
        %v4920 = vunpack.c.l.b16 %v3832
        %v4921 = vunpack.c.l.b16 %v3833
        %v4922 = vunpack.c.l.b16 %v3834
        %v4923 = vunpack.c.l.b16 %v3835
        %v4924 = vunpack.c.l.b16 %v3836
        %v4925 = vunpack.c.l.b16 %v3837
        %v4926 = vunpack.c.l.b16 %v3838
        %v4927 = vunpack.c.l.b16 %v3839
        %v4928 = vpack.c.b16 %v4897, %v4896
        %v4929 = vpack.c.b16 %v4899, %v4898
        %v4930 = vpack.c.b16 %v4901, %v4900
        %v4931 = vpack.c.b16 %v4903, %v4902
        %v4932 = vpack.c.b16 %v4905, %v4904
        %v4933 = vpack.c.b16 %v4907, %v4906
        %v4934 = vpack.c.b16 %v4909, %v4908
        %v4935 = vpack.c.b16 %v4911, %v4910
        %v4936 = vpack.c.b16 %v4913, %v4912
        %v4937 = vpack.c.b16 %v4915, %v4914
        %v4938 = vpack.c.b16 %v4917, %v4916
        %v4939 = vpack.c.b16 %v4919, %v4918
        %v4940 = vpack.c.b16 %v4921, %v4920
        %v4941 = vpack.c.b16 %v4923, %v4922
        %v4942 = vpack.c.b16 %v4925, %v4924
        %v4943 = vpack.c.b16 %v4927, %v4926
        %4944 = vrot.lane.b32.xlu0 %v4928, 24
        %v4945 = vpop.permute.xlu0 %4944
        %4946 = vrot.lane.b32.xlu0 %v4929, 24
        %v4947 = vpop.permute.xlu0 %4946
        %4948 = vrot.lane.b32.xlu0 %v4930, 24
        %v4949 = vpop.permute.xlu0 %4948
        %4950 = vrot.lane.b32.xlu0 %v4931, 24
        %v4951 = vpop.permute.xlu0 %4950
        %4952 = vrot.lane.b32.xlu0 %v4932, 24
        %v4953 = vpop.permute.xlu0 %4952
        %4954 = vrot.lane.b32.xlu0 %v4933, 24
        %v4955 = vpop.permute.xlu0 %4954
        %4956 = vrot.lane.b32.xlu0 %v4934, 24
        %v4957 = vpop.permute.xlu0 %4956
        %4958 = vrot.lane.b32.xlu0 %v4935, 24
        %v4959 = vpop.permute.xlu0 %4958
        %4960 = vrot.lane.b32.xlu0 %v4936, 24
        %v4961 = vpop.permute.xlu0 %4960
        %4962 = vrot.lane.b32.xlu0 %v4937, 24
        %v4963 = vpop.permute.xlu0 %4962
        %4964 = vrot.lane.b32.xlu0 %v4938, 24
        %v4965 = vpop.permute.xlu0 %4964
        %4966 = vrot.lane.b32.xlu0 %v4939, 24
        %v4967 = vpop.permute.xlu0 %4966
        %4968 = vrot.lane.b32.xlu0 %v4940, 24
        %v4969 = vpop.permute.xlu0 %4968
        %4970 = vrot.lane.b32.xlu0 %v4941, 24
        %v4971 = vpop.permute.xlu0 %4970
        %4972 = vrot.lane.b32.xlu0 %v4942, 24
        %v4973 = vpop.permute.xlu0 %4972
        %4974 = vrot.lane.b32.xlu0 %v4943, 24
        %v4975 = vpop.permute.xlu0 %4974
        %v4992 = vunpack.c.l.b16 %v3840
        %v4993 = vunpack.c.l.b16 %v3841
        %v4994 = vunpack.c.l.b16 %v3842
        %v4995 = vunpack.c.l.b16 %v3843
        %v4996 = vunpack.c.l.b16 %v3844
        %v4997 = vunpack.c.l.b16 %v3845
        %v4998 = vunpack.c.l.b16 %v3846
        %v4999 = vunpack.c.l.b16 %v3847
        %v5000 = vunpack.c.l.b16 %v3848
        %v5001 = vunpack.c.l.b16 %v3849
        %v5002 = vunpack.c.l.b16 %v3850
        %v5003 = vunpack.c.l.b16 %v3851
        %v5004 = vunpack.c.l.b16 %v3852
        %v5005 = vunpack.c.l.b16 %v3853
        %v5006 = vunpack.c.l.b16 %v3854
        %v5007 = vunpack.c.l.b16 %v3855
        %v5008 = vpack.c.b16 %v4992, %v4992
        %v5009 = vpack.c.b16 %v4993, %v4993
        %v5010 = vpack.c.b16 %v4994, %v4994
        %v5011 = vpack.c.b16 %v4995, %v4995
        %v5012 = vpack.c.b16 %v4996, %v4996
        %v5013 = vpack.c.b16 %v4997, %v4997
        %v5014 = vpack.c.b16 %v4998, %v4998
        %v5015 = vpack.c.b16 %v4999, %v4999
        %v5016 = vpack.c.b16 %v5000, %v5000
        %v5017 = vpack.c.b16 %v5001, %v5001
        %v5018 = vpack.c.b16 %v5002, %v5002
        %v5019 = vpack.c.b16 %v5003, %v5003
        %v5020 = vpack.c.b16 %v5004, %v5004
        %v5021 = vpack.c.b16 %v5005, %v5005
        %v5022 = vpack.c.b16 %v5006, %v5006
        %v5023 = vpack.c.b16 %v5007, %v5007
        %v5025 = vshrl.u32 %v4928, 16
        %v5027 = vshll.u32 %v4928, 16
        %v5029 = vrot.slane %v5027, 1
        %v5030 = vor.u32 %v5025, %v5029
        %v5032 = vshll.u32 %v5008, 16
        %v5034 = vrot.slane %v5032, 1
        %v5035 = vsel %vm1190, %v5030, %v5034
        %v5037 = vshrl.u32 %v4929, 16
        %v5039 = vshll.u32 %v4929, 16
        %v5041 = vrot.slane %v5039, 1
        %v5042 = vor.u32 %v5037, %v5041
        %v5044 = vshll.u32 %v5009, 16
        %v5046 = vrot.slane %v5044, 1
        %v5047 = vsel %vm1190, %v5042, %v5046
        %v5049 = vshrl.u32 %v4930, 16
        %v5051 = vshll.u32 %v4930, 16
        %v5053 = vrot.slane %v5051, 1
        %v5054 = vor.u32 %v5049, %v5053
        %v5056 = vshll.u32 %v5010, 16
        %v5058 = vrot.slane %v5056, 1
        %v5059 = vsel %vm1190, %v5054, %v5058
        %v5061 = vshrl.u32 %v4931, 16
        %v5063 = vshll.u32 %v4931, 16
        %v5065 = vrot.slane %v5063, 1
        %v5066 = vor.u32 %v5061, %v5065
        %v5068 = vshll.u32 %v5011, 16
        %v5070 = vrot.slane %v5068, 1
        %v5071 = vsel %vm1190, %v5066, %v5070
        %v5073 = vshrl.u32 %v4932, 16
        %v5075 = vshll.u32 %v4932, 16
        %v5077 = vrot.slane %v5075, 1
        %v5078 = vor.u32 %v5073, %v5077
        %v5080 = vshll.u32 %v5012, 16
        %v5082 = vrot.slane %v5080, 1
        %v5083 = vsel %vm1190, %v5078, %v5082
        %v5085 = vshrl.u32 %v4933, 16
        %v5087 = vshll.u32 %v4933, 16
        %v5089 = vrot.slane %v5087, 1
        %v5090 = vor.u32 %v5085, %v5089
        %v5092 = vshll.u32 %v5013, 16
        %v5094 = vrot.slane %v5092, 1
        %v5095 = vsel %vm1190, %v5090, %v5094
        %v5097 = vshrl.u32 %v4934, 16
        %v5099 = vshll.u32 %v4934, 16
        %v5101 = vrot.slane %v5099, 1
        %v5102 = vor.u32 %v5097, %v5101
        %v5104 = vshll.u32 %v5014, 16
        %v5106 = vrot.slane %v5104, 1
        %v5107 = vsel %vm1190, %v5102, %v5106
        %v5109 = vshrl.u32 %v4935, 16
        %v5111 = vshll.u32 %v4935, 16
        %v5113 = vrot.slane %v5111, 1
        %v5114 = vor.u32 %v5109, %v5113
        %v5116 = vshll.u32 %v5015, 16
        %v5118 = vrot.slane %v5116, 1
        %v5119 = vsel %vm1190, %v5114, %v5118
        %v5121 = vshrl.u32 %v4936, 16
        %v5123 = vshll.u32 %v4936, 16
        %v5125 = vrot.slane %v5123, 1
        %v5126 = vor.u32 %v5121, %v5125
        %v5128 = vshll.u32 %v5016, 16
        %v5130 = vrot.slane %v5128, 1
        %v5131 = vsel %vm1190, %v5126, %v5130
        %v5133 = vshrl.u32 %v4937, 16
        %v5135 = vshll.u32 %v4937, 16
        %v5137 = vrot.slane %v5135, 1
        %v5138 = vor.u32 %v5133, %v5137
        %v5140 = vshll.u32 %v5017, 16
        %v5142 = vrot.slane %v5140, 1
        %v5143 = vsel %vm1190, %v5138, %v5142
        %v5145 = vshrl.u32 %v4938, 16
        %v5147 = vshll.u32 %v4938, 16
        %v5149 = vrot.slane %v5147, 1
        %v5150 = vor.u32 %v5145, %v5149
        %v5152 = vshll.u32 %v5018, 16
        %v5154 = vrot.slane %v5152, 1
        %v5155 = vsel %vm1190, %v5150, %v5154
        %v5157 = vshrl.u32 %v4939, 16
        %v5159 = vshll.u32 %v4939, 16
        %v5161 = vrot.slane %v5159, 1
        %v5162 = vor.u32 %v5157, %v5161
        %v5164 = vshll.u32 %v5019, 16
        %v5166 = vrot.slane %v5164, 1
        %v5167 = vsel %vm1190, %v5162, %v5166
        %v5169 = vshrl.u32 %v4940, 16
        %v5171 = vshll.u32 %v4940, 16
        %v5173 = vrot.slane %v5171, 1
        %v5174 = vor.u32 %v5169, %v5173
        %v5176 = vshll.u32 %v5020, 16
        %v5178 = vrot.slane %v5176, 1
        %v5179 = vsel %vm1190, %v5174, %v5178
        %v5181 = vshrl.u32 %v4941, 16
        %v5183 = vshll.u32 %v4941, 16
        %v5185 = vrot.slane %v5183, 1
        %v5186 = vor.u32 %v5181, %v5185
        %v5188 = vshll.u32 %v5021, 16
        %v5190 = vrot.slane %v5188, 1
        %v5191 = vsel %vm1190, %v5186, %v5190
        %v5193 = vshrl.u32 %v4942, 16
        %v5195 = vshll.u32 %v4942, 16
        %v5197 = vrot.slane %v5195, 1
        %v5198 = vor.u32 %v5193, %v5197
        %v5200 = vshll.u32 %v5022, 16
        %v5202 = vrot.slane %v5200, 1
        %v5203 = vsel %vm1190, %v5198, %v5202
        %v5205 = vshrl.u32 %v4943, 16
        %v5207 = vshll.u32 %v4943, 16
        %v5209 = vrot.slane %v5207, 1
        %v5210 = vor.u32 %v5205, %v5209
        %v5212 = vshll.u32 %v5023, 16
        %v5214 = vrot.slane %v5212, 1
        %v5215 = vsel %vm1190, %v5210, %v5214
        %5216 = vrot.lane.b32.xlu0 %v5035, 28
        %v5217 = vpop.permute.xlu0 %5216
        %5218 = vrot.lane.b32.xlu0 %v5047, 28
        %v5219 = vpop.permute.xlu0 %5218
        %5220 = vrot.lane.b32.xlu0 %v5059, 28
        %v5221 = vpop.permute.xlu0 %5220
        %5222 = vrot.lane.b32.xlu0 %v5071, 28
        %v5223 = vpop.permute.xlu0 %5222
        %5224 = vrot.lane.b32.xlu0 %v5083, 28
        %v5225 = vpop.permute.xlu0 %5224
        %5226 = vrot.lane.b32.xlu0 %v5095, 28
        %v5227 = vpop.permute.xlu0 %5226
        %5228 = vrot.lane.b32.xlu0 %v5107, 28
        %v5229 = vpop.permute.xlu0 %5228
        %5230 = vrot.lane.b32.xlu0 %v5119, 28
        %v5231 = vpop.permute.xlu0 %5230
        %5232 = vrot.lane.b32.xlu0 %v5131, 28
        %v5233 = vpop.permute.xlu0 %5232
        %5234 = vrot.lane.b32.xlu0 %v5143, 28
        %v5235 = vpop.permute.xlu0 %5234
        %5236 = vrot.lane.b32.xlu0 %v5155, 28
        %v5237 = vpop.permute.xlu0 %5236
        %5238 = vrot.lane.b32.xlu0 %v5167, 28
        %v5239 = vpop.permute.xlu0 %5238
        %5240 = vrot.lane.b32.xlu0 %v5179, 28
        %v5241 = vpop.permute.xlu0 %5240
        %5242 = vrot.lane.b32.xlu0 %v5191, 28
        %v5243 = vpop.permute.xlu0 %5242
        %5244 = vrot.lane.b32.xlu0 %v5203, 28
        %v5245 = vpop.permute.xlu0 %5244
        %5246 = vrot.lane.b32.xlu0 %v5215, 28
        %v5247 = vpop.permute.xlu0 %5246
        %v5264 = vunpack.c.l.b16 %v3856
        %v5265 = vunpack.c.l.b16 %v3857
        %v5266 = vunpack.c.l.b16 %v3858
        %v5267 = vunpack.c.l.b16 %v3859
        %v5268 = vunpack.c.l.b16 %v3860
        %v5269 = vunpack.c.l.b16 %v3861
        %v5270 = vunpack.c.l.b16 %v3862
        %v5271 = vunpack.c.l.b16 %v3863
        %v5272 = vunpack.c.l.b16 %v3864
        %v5273 = vunpack.c.l.b16 %v3865
        %v5274 = vunpack.c.l.b16 %v3866
        %v5275 = vunpack.c.l.b16 %v3867
        %v5276 = vunpack.c.l.b16 %v3868
        %v5277 = vunpack.c.l.b16 %v3869
        %v5278 = vunpack.c.l.b16 %v3870
        %v5279 = vunpack.c.l.b16 %v3871
        %v5280 = vpack.c.b16 %v4897, %v5264
        %v5281 = vpack.c.b16 %v4899, %v5265
        %v5282 = vpack.c.b16 %v4901, %v5266
        %v5283 = vpack.c.b16 %v4903, %v5267
        %v5284 = vpack.c.b16 %v4905, %v5268
        %v5285 = vpack.c.b16 %v4907, %v5269
        %v5286 = vpack.c.b16 %v4909, %v5270
        %v5287 = vpack.c.b16 %v4911, %v5271
        %v5288 = vpack.c.b16 %v4913, %v5272
        %v5289 = vpack.c.b16 %v4915, %v5273
        %v5290 = vpack.c.b16 %v4917, %v5274
        %v5291 = vpack.c.b16 %v4919, %v5275
        %v5292 = vpack.c.b16 %v4921, %v5276
        %v5293 = vpack.c.b16 %v4923, %v5277
        %v5294 = vpack.c.b16 %v4925, %v5278
        %v5295 = vpack.c.b16 %v4927, %v5279
        %v5296 = vrot.slane %v5280, 1
        %v5297 = vrot.slane %v5008, 1
        %v5298 = vsel %vm1463, %v5296, %v5297
        %v5299 = vrot.slane %v5281, 1
        %v5300 = vrot.slane %v5009, 1
        %v5301 = vsel %vm1463, %v5299, %v5300
        %v5302 = vrot.slane %v5282, 1
        %v5303 = vrot.slane %v5010, 1
        %v5304 = vsel %vm1463, %v5302, %v5303
        %v5305 = vrot.slane %v5283, 1
        %v5306 = vrot.slane %v5011, 1
        %v5307 = vsel %vm1463, %v5305, %v5306
        %v5308 = vrot.slane %v5284, 1
        %v5309 = vrot.slane %v5012, 1
        %v5310 = vsel %vm1463, %v5308, %v5309
        %v5311 = vrot.slane %v5285, 1
        %v5312 = vrot.slane %v5013, 1
        %v5313 = vsel %vm1463, %v5311, %v5312
        %v5314 = vrot.slane %v5286, 1
        %v5315 = vrot.slane %v5014, 1
        %v5316 = vsel %vm1463, %v5314, %v5315
        %v5317 = vrot.slane %v5287, 1
        %v5318 = vrot.slane %v5015, 1
        %v5319 = vsel %vm1463, %v5317, %v5318
        %v5320 = vrot.slane %v5288, 1
        %v5321 = vrot.slane %v5016, 1
        %v5322 = vsel %vm1463, %v5320, %v5321
        %v5323 = vrot.slane %v5289, 1
        %v5324 = vrot.slane %v5017, 1
        %v5325 = vsel %vm1463, %v5323, %v5324
        %v5326 = vrot.slane %v5290, 1
        %v5327 = vrot.slane %v5018, 1
        %v5328 = vsel %vm1463, %v5326, %v5327
        %v5329 = vrot.slane %v5291, 1
        %v5330 = vrot.slane %v5019, 1
        %v5331 = vsel %vm1463, %v5329, %v5330
        %v5332 = vrot.slane %v5292, 1
        %v5333 = vrot.slane %v5020, 1
        %v5334 = vsel %vm1463, %v5332, %v5333
        %v5335 = vrot.slane %v5293, 1
        %v5336 = vrot.slane %v5021, 1
        %v5337 = vsel %vm1463, %v5335, %v5336
        %v5338 = vrot.slane %v5294, 1
        %v5339 = vrot.slane %v5022, 1
        %v5340 = vsel %vm1463, %v5338, %v5339
        %v5341 = vrot.slane %v5295, 1
        %v5342 = vrot.slane %v5023, 1
        %v5343 = vsel %vm1463, %v5341, %v5342
        %5344 = vrot.lane.b32.xlu0 %v5298, 32
        %v5345 = vpop.permute.xlu0 %5344
        %5346 = vrot.lane.b32.xlu0 %v5301, 32
        %v5347 = vpop.permute.xlu0 %5346
        %5348 = vrot.lane.b32.xlu0 %v5304, 32
        %v5349 = vpop.permute.xlu0 %5348
        %5350 = vrot.lane.b32.xlu0 %v5307, 32
        %v5351 = vpop.permute.xlu0 %5350
        %5352 = vrot.lane.b32.xlu0 %v5310, 32
        %v5353 = vpop.permute.xlu0 %5352
        %5354 = vrot.lane.b32.xlu0 %v5313, 32
        %v5355 = vpop.permute.xlu0 %5354
        %5356 = vrot.lane.b32.xlu0 %v5316, 32
        %v5357 = vpop.permute.xlu0 %5356
        %5358 = vrot.lane.b32.xlu0 %v5319, 32
        %v5359 = vpop.permute.xlu0 %5358
        %5360 = vrot.lane.b32.xlu0 %v5322, 32
        %v5361 = vpop.permute.xlu0 %5360
        %5362 = vrot.lane.b32.xlu0 %v5325, 32
        %v5363 = vpop.permute.xlu0 %5362
        %5364 = vrot.lane.b32.xlu0 %v5328, 32
        %v5365 = vpop.permute.xlu0 %5364
        %5366 = vrot.lane.b32.xlu0 %v5331, 32
        %v5367 = vpop.permute.xlu0 %5366
        %5368 = vrot.lane.b32.xlu0 %v5334, 32
        %v5369 = vpop.permute.xlu0 %5368
        %5370 = vrot.lane.b32.xlu0 %v5337, 32
        %v5371 = vpop.permute.xlu0 %5370
        %5372 = vrot.lane.b32.xlu0 %v5340, 32
        %v5373 = vpop.permute.xlu0 %5372
        %5374 = vrot.lane.b32.xlu0 %v5343, 32
        %v5375 = vpop.permute.xlu0 %5374
        %v5377 = vsel %vm2568, %v3936, %v4193
        %v5379 = vsel %vm2568, %v3937, %v4195
        %v5381 = vsel %vm2568, %v3938, %v4197
        %v5383 = vsel %vm2568, %v3939, %v4199
        %v5385 = vsel %vm2568, %v3940, %v4201
        %v5387 = vsel %vm2568, %v3941, %v4203
        %v5389 = vsel %vm2568, %v3942, %v4205
        %v5391 = vsel %vm2568, %v3943, %v4207
        %v5393 = vsel %vm2568, %v3944, %v4209
        %v5395 = vsel %vm2568, %v3945, %v4211
        %v5397 = vsel %vm2568, %v3946, %v4213
        %v5399 = vsel %vm2568, %v3947, %v4215
        %v5401 = vsel %vm2568, %v3948, %v4217
        %v5403 = vsel %vm2568, %v3949, %v4219
        %v5405 = vsel %vm2568, %v3950, %v4221
        %v5407 = vsel %vm2568, %v3951, %v4223
        %v5409 = vsel %vm2601, %v5377, %v4321
        %v5411 = vsel %vm2601, %v5379, %v4323
        %v5413 = vsel %vm2601, %v5381, %v4325
        %v5415 = vsel %vm2601, %v5383, %v4327
        %v5417 = vsel %vm2601, %v5385, %v4329
        %v5419 = vsel %vm2601, %v5387, %v4331
        %v5421 = vsel %vm2601, %v5389, %v4333
        %v5423 = vsel %vm2601, %v5391, %v4335
        %v5425 = vsel %vm2601, %v5393, %v4337
        %v5427 = vsel %vm2601, %v5395, %v4339
        %v5429 = vsel %vm2601, %v5397, %v4341
        %v5431 = vsel %vm2601, %v5399, %v4343
        %v5433 = vsel %vm2601, %v5401, %v4345
        %v5435 = vsel %vm2601, %v5403, %v4347
        %v5437 = vsel %vm2601, %v5405, %v4349
        %v5439 = vsel %vm2601, %v5407, %v4351
        %v5441 = vsel %vm2634, %v5409, %v4433
        %v5443 = vsel %vm2634, %v5411, %v4435
        %v5445 = vsel %vm2634, %v5413, %v4437
        %v5447 = vsel %vm2634, %v5415, %v4439
        %v5449 = vsel %vm2634, %v5417, %v4441
        %v5451 = vsel %vm2634, %v5419, %v4443
        %v5453 = vsel %vm2634, %v5421, %v4445
        %v5455 = vsel %vm2634, %v5423, %v4447
        %v5457 = vsel %vm2634, %v5425, %v4449
        %v5459 = vsel %vm2634, %v5427, %v4451
        %v5461 = vsel %vm2634, %v5429, %v4453
        %v5463 = vsel %vm2634, %v5431, %v4455
        %v5465 = vsel %vm2634, %v5433, %v4457
        %v5467 = vsel %vm2634, %v5435, %v4459
        %v5469 = vsel %vm2634, %v5437, %v4461
        %v5471 = vsel %vm2634, %v5439, %v4463
        %v5473 = vsel %vm2667, %v5441, %v4705
        %v5475 = vsel %vm2667, %v5443, %v4707
        %v5477 = vsel %vm2667, %v5445, %v4709
        %v5479 = vsel %vm2667, %v5447, %v4711
        %v5481 = vsel %vm2667, %v5449, %v4713
        %v5483 = vsel %vm2667, %v5451, %v4715
        %v5485 = vsel %vm2667, %v5453, %v4717
        %v5487 = vsel %vm2667, %v5455, %v4719
        %v5489 = vsel %vm2667, %v5457, %v4721
        %v5491 = vsel %vm2667, %v5459, %v4723
        %v5493 = vsel %vm2667, %v5461, %v4725
        %v5495 = vsel %vm2667, %v5463, %v4727
        %v5497 = vsel %vm2667, %v5465, %v4729
        %v5499 = vsel %vm2667, %v5467, %v4731
        %v5501 = vsel %vm2667, %v5469, %v4733
        %v5503 = vsel %vm2667, %v5471, %v4735
        %v5505 = vsel %vm2700, %v5473, %v4833
        %v5507 = vsel %vm2700, %v5475, %v4835
        %v5509 = vsel %vm2700, %v5477, %v4837
        %v5511 = vsel %vm2700, %v5479, %v4839
        %v5513 = vsel %vm2700, %v5481, %v4841
        %v5515 = vsel %vm2700, %v5483, %v4843
        %v5517 = vsel %vm2700, %v5485, %v4845
        %v5519 = vsel %vm2700, %v5487, %v4847
        %v5521 = vsel %vm2700, %v5489, %v4849
        %v5523 = vsel %vm2700, %v5491, %v4851
        %v5525 = vsel %vm2700, %v5493, %v4853
        %v5527 = vsel %vm2700, %v5495, %v4855
        %v5529 = vsel %vm2700, %v5497, %v4857
        %v5531 = vsel %vm2700, %v5499, %v4859
        %v5533 = vsel %vm2700, %v5501, %v4861
        %v5535 = vsel %vm2700, %v5503, %v4863
        %v5537 = vsel %vm2733, %v5505, %v4945
        %v5539 = vsel %vm2733, %v5507, %v4947
        %v5541 = vsel %vm2733, %v5509, %v4949
        %v5543 = vsel %vm2733, %v5511, %v4951
        %v5545 = vsel %vm2733, %v5513, %v4953
        %v5547 = vsel %vm2733, %v5515, %v4955
        %v5549 = vsel %vm2733, %v5517, %v4957
        %v5551 = vsel %vm2733, %v5519, %v4959
        %v5553 = vsel %vm2733, %v5521, %v4961
        %v5555 = vsel %vm2733, %v5523, %v4963
        %v5557 = vsel %vm2733, %v5525, %v4965
        %v5559 = vsel %vm2733, %v5527, %v4967
        %v5561 = vsel %vm2733, %v5529, %v4969
        %v5563 = vsel %vm2733, %v5531, %v4971
        %v5565 = vsel %vm2733, %v5533, %v4973
        %v5567 = vsel %vm2733, %v5535, %v4975
        %v5569 = vsel %vm2766, %v5537, %v5217
        %v5571 = vsel %vm2766, %v5539, %v5219
        %v5573 = vsel %vm2766, %v5541, %v5221
        %v5575 = vsel %vm2766, %v5543, %v5223
        %v5577 = vsel %vm2766, %v5545, %v5225
        %v5579 = vsel %vm2766, %v5547, %v5227
        %v5581 = vsel %vm2766, %v5549, %v5229
        %v5583 = vsel %vm2766, %v5551, %v5231
        %v5585 = vsel %vm2766, %v5553, %v5233
        %v5587 = vsel %vm2766, %v5555, %v5235
        %v5589 = vsel %vm2766, %v5557, %v5237
        %v5591 = vsel %vm2766, %v5559, %v5239
        %v5593 = vsel %vm2766, %v5561, %v5241
        %v5595 = vsel %vm2766, %v5563, %v5243
        %v5597 = vsel %vm2766, %v5565, %v5245
        %v5599 = vsel %vm2766, %v5567, %v5247
        %v5601 = vsel %vm2799, %v5569, %v5345
        %v5603 = vsel %vm2799, %v5571, %v5347
        %v5605 = vsel %vm2799, %v5573, %v5349
        %v5607 = vsel %vm2799, %v5575, %v5351
        %v5609 = vsel %vm2799, %v5577, %v5353
        %v5611 = vsel %vm2799, %v5579, %v5355
        %v5613 = vsel %vm2799, %v5581, %v5357
        %v5615 = vsel %vm2799, %v5583, %v5359
        %v5617 = vsel %vm2799, %v5585, %v5361
        %v5619 = vsel %vm2799, %v5587, %v5363
        %v5621 = vsel %vm2799, %v5589, %v5365
        %v5623 = vsel %vm2799, %v5591, %v5367
        %v5625 = vsel %vm2799, %v5593, %v5369
        %v5627 = vsel %vm2799, %v5595, %v5371
        %v5629 = vsel %vm2799, %v5597, %v5373
        %v5631 = vsel %vm2799, %v5599, %v5375
        %v5632 = vld [vmem:[%s3] sm:$0xf]
        %v5633 = vld [vmem:[%s3 + $0x4] sm:$0xf]
        %v5634 = vld [vmem:[%s3 + $0x8] sm:$0xf]
        %v5635 = vld [vmem:[%s3 + $0xc] sm:$0xf]
        %v5636 = vld [vmem:[%s3 + $0x10] sm:$0x3]
        %v5637 = vld [vmem:[%s4] sm:$0x1]
        %v5639 = vlaneseq
        %v5640 = vshrl.u32 %v5639, 7
        %v5641 = vsub.s32 0, %v5640
        %v5642 = vrot.slane %v5637, %v5641
        %v5649 = vunpack.c.l.b16 %v5632
        %v5650 = vunpack.c.l.b16 %v5633
        %v5651 = vunpack.c.l.b16 %v5634
        %v5652 = vunpack.c.l.b16 %v5635
        %v5653 = vunpack.c.l.b16 %v5636
        %v5654 = vpack.c.b16 %v5650, %v5649
        %v5655 = vpack.c.b16 %v5652, %v5651
        %v5656 = vpack.c.b16 %v5653, %v5653
        %v5659 = vsel %vm2859, %v5601, 0
        %v5661 = vsel %vm2859, %v5603, 0
        %v5663 = vsel %vm2859, %v5605, 0
        %v5665 = vsel %vm2859, %v5607, 0
        %v5667 = vsel %vm2859, %v5609, 0
        %v5669 = vsel %vm2859, %v5611, 0
        %v5671 = vsel %vm2859, %v5613, 0
        %v5673 = vsel %vm2859, %v5615, 0
        %v5675 = vsel %vm2859, %v5617, 0
        %v5677 = vsel %vm2859, %v5619, 0
        %v5679 = vsel %vm2859, %v5621, 0
        %v5681 = vsel %vm2859, %v5623, 0
        %v5683 = vsel %vm2859, %v5625, 0
        %v5685 = vsel %vm2859, %v5627, 0
        %v5687 = vsel %vm2859, %v5629, 0
        %v5689 = vsel %vm2859, %v5631, 0
        %v5692 = vsel %vm2892, %v5656, 0
        %5694 = vmatprep.subr.bf16.mxu0 0
        %5695 = vmatpush1.bf16.msra.mxu0 0
        %5696 = vmatprep.subr.bf16.mxu0 0
        %5697 = vmatpush1.bf16.msra.mxu0 0
        %5698 = vmatprep.subr.bf16.mxu0 0
        %5699 = vmatpush1.bf16.msra.mxu0 0
        %5700 = vmatprep.subr.bf16.mxu0 0
        %5701 = vmatpush1.bf16.msra.mxu0 0
        %5702 = vmatprep.subr.bf16.mxu0 0
        %5703 = vmatpush1.bf16.msra.mxu0 0
        %5704 = vmatprep.subr.bf16.mxu0 0
        %5705 = vmatpush1.bf16.msra.mxu0 %v5692
        %5706 = vmatprep.subr.bf16.mxu0 0
        %5707 = vmatpush1.bf16.msra.mxu0 %v5655
        %5708 = vmatprep.subr.bf16.mxu0 0
        %5709 = vmatpush1.bf16.msra.mxu0 %v5654
        %5710 = vmatprep.subr.bf16.mxu0 0
        %5711 = vmatpush2.bf16.msra.mxu0 0
        %5712 = vmatprep.subr.bf16.mxu0 0
        %5713 = vmatpush2.bf16.msra.mxu0 0
        %5714 = vmatprep.subr.bf16.mxu0 0
        %5715 = vmatpush2.bf16.msra.mxu0 0
        %5716 = vmatprep.subr.bf16.mxu0 0
        %5717 = vmatpush2.bf16.msra.mxu0 0
        %5718 = vmatprep.subr.bf16.mxu0 0
        %5719 = vmatpush2.bf16.msra.mxu0 0
        %5720 = vmatprep.subr.bf16.mxu0 0
        %5721 = vmatpush2.bf16.msra.mxu0 0
        %5722 = vmatprep.subr.bf16.mxu0 0
        %5723 = vmatpush2.bf16.msra.mxu0 0
        %5724 = vmatprep.subr.bf16.mxu0 0
        %5725 = vmatpush2.bf16.msra.mxu0 0
        %5726 = vmatprep.mubr.bf16.mxu0 0
        %5727 = vmatmul.mubr.bf16.gmra.mxu0 %v5659
        %v5728 = vpop.f32.mrf.mxu0
        %v5729 = vadd.f32 %v5642, %v5728
        %v5730 = vpop.f32.mrf.mxu0
        %v5731 = vpop.f32.mrf.mxu0
        %v5732 = vadd.f32 %v5642, %v5731
        %v5733 = vpop.f32.mrf.mxu0
        %5734 = vmatprep.mubr.bf16.mxu0 0
        %5735 = vmatmul.mubr.bf16.gmra.mxu0 %v5661
        %v5736 = vpop.f32.mrf.mxu0
        %v5737 = vadd.f32 %v5642, %v5736
        %v5738 = vpop.f32.mrf.mxu0
        %v5739 = vpop.f32.mrf.mxu0
        %v5740 = vadd.f32 %v5642, %v5739
        %v5741 = vpop.f32.mrf.mxu0
        %5742 = vmatprep.mubr.bf16.mxu0 0
        %5743 = vmatmul.mubr.bf16.gmra.mxu0 %v5663
        %v5744 = vpop.f32.mrf.mxu0
        %v5745 = vadd.f32 %v5642, %v5744
        %v5746 = vpop.f32.mrf.mxu0
        %v5747 = vpop.f32.mrf.mxu0
        %v5748 = vadd.f32 %v5642, %v5747
        %v5749 = vpop.f32.mrf.mxu0
        %5750 = vmatprep.mubr.bf16.mxu0 0
        %5751 = vmatmul.mubr.bf16.gmra.mxu0 %v5665
        %v5752 = vpop.f32.mrf.mxu0
        %v5753 = vadd.f32 %v5642, %v5752
        %v5754 = vpop.f32.mrf.mxu0
        %v5755 = vpop.f32.mrf.mxu0
        %v5756 = vadd.f32 %v5642, %v5755
        %v5757 = vpop.f32.mrf.mxu0
        %5758 = vmatprep.mubr.bf16.mxu0 0
        %5759 = vmatmul.mubr.bf16.gmra.mxu0 %v5667
        %v5760 = vpop.f32.mrf.mxu0
        %v5761 = vadd.f32 %v5642, %v5760
        %v5762 = vpop.f32.mrf.mxu0
        %v5763 = vpop.f32.mrf.mxu0
        %v5764 = vadd.f32 %v5642, %v5763
        %v5765 = vpop.f32.mrf.mxu0
        %5766 = vmatprep.mubr.bf16.mxu0 0
        %5767 = vmatmul.mubr.bf16.gmra.mxu0 %v5669
        %v5768 = vpop.f32.mrf.mxu0
        %v5769 = vadd.f32 %v5642, %v5768
        %v5770 = vpop.f32.mrf.mxu0
        %v5771 = vpop.f32.mrf.mxu0
        %v5772 = vadd.f32 %v5642, %v5771
        %v5773 = vpop.f32.mrf.mxu0
        %5774 = vmatprep.mubr.bf16.mxu0 0
        %5775 = vmatmul.mubr.bf16.gmra.mxu0 %v5671
        %v5776 = vpop.f32.mrf.mxu0
        %v5777 = vadd.f32 %v5642, %v5776
        %v5778 = vpop.f32.mrf.mxu0
        %v5779 = vpop.f32.mrf.mxu0
        %v5780 = vadd.f32 %v5642, %v5779
        %v5781 = vpop.f32.mrf.mxu0
        %5782 = vmatprep.mubr.bf16.mxu0 0
        %5783 = vmatmul.mubr.bf16.gmra.mxu0 %v5673
        %v5784 = vpop.f32.mrf.mxu0
        %v5785 = vadd.f32 %v5642, %v5784
        %v5786 = vpop.f32.mrf.mxu0
        %v5787 = vpop.f32.mrf.mxu0
        %v5788 = vadd.f32 %v5642, %v5787
        %v5789 = vpop.f32.mrf.mxu0
        %5790 = vmatprep.mubr.bf16.mxu0 0
        %5791 = vmatmul.mubr.bf16.gmra.mxu0 %v5675
        %v5792 = vpop.f32.mrf.mxu0
        %v5793 = vadd.f32 %v5642, %v5792
        %v5794 = vpop.f32.mrf.mxu0
        %v5795 = vpop.f32.mrf.mxu0
        %v5796 = vadd.f32 %v5642, %v5795
        %v5797 = vpop.f32.mrf.mxu0
        %5798 = vmatprep.mubr.bf16.mxu0 0
        %5799 = vmatmul.mubr.bf16.gmra.mxu0 %v5677
        %v5800 = vpop.f32.mrf.mxu0
        %v5801 = vadd.f32 %v5642, %v5800
        %v5802 = vpop.f32.mrf.mxu0
        %v5803 = vpop.f32.mrf.mxu0
        %v5804 = vadd.f32 %v5642, %v5803
        %v5805 = vpop.f32.mrf.mxu0
        %5806 = vmatprep.mubr.bf16.mxu0 0
        %5807 = vmatmul.mubr.bf16.gmra.mxu0 %v5679
        %v5808 = vpop.f32.mrf.mxu0
        %v5809 = vadd.f32 %v5642, %v5808
        %v5810 = vpop.f32.mrf.mxu0
        %v5811 = vpop.f32.mrf.mxu0
        %v5812 = vadd.f32 %v5642, %v5811
        %v5813 = vpop.f32.mrf.mxu0
        %5814 = vmatprep.mubr.bf16.mxu0 0
        %5815 = vmatmul.mubr.bf16.gmra.mxu0 %v5681
        %v5816 = vpop.f32.mrf.mxu0
        %v5817 = vadd.f32 %v5642, %v5816
        %v5818 = vpop.f32.mrf.mxu0
        %v5819 = vpop.f32.mrf.mxu0
        %v5820 = vadd.f32 %v5642, %v5819
        %v5821 = vpop.f32.mrf.mxu0
        %5822 = vmatprep.mubr.bf16.mxu0 0
        %5823 = vmatmul.mubr.bf16.gmra.mxu0 %v5683
        %v5824 = vpop.f32.mrf.mxu0
        %v5825 = vadd.f32 %v5642, %v5824
        %v5826 = vpop.f32.mrf.mxu0
        %v5827 = vpop.f32.mrf.mxu0
        %v5828 = vadd.f32 %v5642, %v5827
        %v5829 = vpop.f32.mrf.mxu0
        %5830 = vmatprep.mubr.bf16.mxu0 0
        %5831 = vmatmul.mubr.bf16.gmra.mxu0 %v5685
        %v5832 = vpop.f32.mrf.mxu0
        %v5833 = vadd.f32 %v5642, %v5832
        %v5834 = vpop.f32.mrf.mxu0
        %v5835 = vpop.f32.mrf.mxu0
        %v5836 = vadd.f32 %v5642, %v5835
        %v5837 = vpop.f32.mrf.mxu0
        %5838 = vmatprep.mubr.bf16.mxu0 0
        %5839 = vmatmul.mubr.bf16.gmra.mxu0 %v5687
        %v5840 = vpop.f32.mrf.mxu0
        %v5841 = vadd.f32 %v5642, %v5840
        %v5842 = vpop.f32.mrf.mxu0
        %v5843 = vpop.f32.mrf.mxu0
        %v5844 = vadd.f32 %v5642, %v5843
        %v5845 = vpop.f32.mrf.mxu0
        %5846 = vmatprep.mubr.bf16.mxu0 0
        %5847 = vmatmul.mubr.bf16.gmra.mxu0 %v5689
        %v5848 = vpop.f32.mrf.mxu0
        %v5849 = vadd.f32 %v5642, %v5848
        %v5850 = vpop.f32.mrf.mxu0
        %v5851 = vpop.f32.mrf.mxu0
        %v5852 = vadd.f32 %v5642, %v5851
        %v5853 = vpop.f32.mrf.mxu0
        %5854 = vdwg.mxu0
        %vm5855 = vcmp.ge.f32.partialorder %v5729, 0.0
        %vm5856 = vcmp.ge.f32.partialorder %v5732, 0.0
        %vm5857 = vcmp.ge.f32.partialorder %v5737, 0.0
        %vm5858 = vcmp.ge.f32.partialorder %v5740, 0.0
        %vm5859 = vcmp.ge.f32.partialorder %v5745, 0.0
        %vm5860 = vcmp.ge.f32.partialorder %v5748, 0.0
        %vm5861 = vcmp.ge.f32.partialorder %v5753, 0.0
        %vm5862 = vcmp.ge.f32.partialorder %v5756, 0.0
        %vm5863 = vcmp.ge.f32.partialorder %v5761, 0.0
        %vm5864 = vcmp.ge.f32.partialorder %v5764, 0.0
        %vm5865 = vcmp.ge.f32.partialorder %v5769, 0.0
        %vm5866 = vcmp.ge.f32.partialorder %v5772, 0.0
        %vm5867 = vcmp.ge.f32.partialorder %v5777, 0.0
        %vm5868 = vcmp.ge.f32.partialorder %v5780, 0.0
        %vm5869 = vcmp.ge.f32.partialorder %v5785, 0.0
        %vm5870 = vcmp.ge.f32.partialorder %v5788, 0.0
        %vm5871 = vcmp.ge.f32.partialorder %v5793, 0.0
        %vm5872 = vcmp.ge.f32.partialorder %v5796, 0.0
        %vm5873 = vcmp.ge.f32.partialorder %v5801, 0.0
        %vm5874 = vcmp.ge.f32.partialorder %v5804, 0.0
        %vm5875 = vcmp.ge.f32.partialorder %v5809, 0.0
        %vm5876 = vcmp.ge.f32.partialorder %v5812, 0.0
        %vm5877 = vcmp.ge.f32.partialorder %v5817, 0.0
        %vm5878 = vcmp.ge.f32.partialorder %v5820, 0.0
        %vm5879 = vcmp.ge.f32.partialorder %v5825, 0.0
        %vm5880 = vcmp.ge.f32.partialorder %v5828, 0.0
        %vm5881 = vcmp.ge.f32.partialorder %v5833, 0.0
        %vm5882 = vcmp.ge.f32.partialorder %v5836, 0.0
        %vm5883 = vcmp.ge.f32.partialorder %v5841, 0.0
        %vm5884 = vcmp.ge.f32.partialorder %v5844, 0.0
        %vm5885 = vcmp.ge.f32.partialorder %v5849, 0.0
        %vm5886 = vcmp.ge.f32.partialorder %v5852, 0.0
        %v5887 = vmul.f32 %v5729, 0.2
        %v5888 = vmul.f32 %v5732, 0.2
        %v5889 = vmul.f32 %v5737, 0.2
        %v5890 = vmul.f32 %v5740, 0.2
        %v5891 = vmul.f32 %v5745, 0.2
        %v5892 = vmul.f32 %v5748, 0.2
        %v5893 = vmul.f32 %v5753, 0.2
        %v5894 = vmul.f32 %v5756, 0.2
        %v5895 = vmul.f32 %v5761, 0.2
        %v5896 = vmul.f32 %v5764, 0.2
        %v5897 = vmul.f32 %v5769, 0.2
        %v5898 = vmul.f32 %v5772, 0.2
        %v5899 = vmul.f32 %v5777, 0.2
        %v5900 = vmul.f32 %v5780, 0.2
        %v5901 = vmul.f32 %v5785, 0.2
        %v5902 = vmul.f32 %v5788, 0.2
        %v5903 = vmul.f32 %v5793, 0.2
        %v5904 = vmul.f32 %v5796, 0.2
        %v5905 = vmul.f32 %v5801, 0.2
        %v5906 = vmul.f32 %v5804, 0.2
        %v5907 = vmul.f32 %v5809, 0.2
        %v5908 = vmul.f32 %v5812, 0.2
        %v5909 = vmul.f32 %v5817, 0.2
        %v5910 = vmul.f32 %v5820, 0.2
        %v5911 = vmul.f32 %v5825, 0.2
        %v5912 = vmul.f32 %v5828, 0.2
        %v5913 = vmul.f32 %v5833, 0.2
        %v5914 = vmul.f32 %v5836, 0.2
        %v5915 = vmul.f32 %v5841, 0.2
        %v5916 = vmul.f32 %v5844, 0.2
        %v5917 = vmul.f32 %v5849, 0.2
        %v5918 = vmul.f32 %v5852, 0.2
        %v5919 = vsel %vm5855, %v5729, %v5887
        %v5920 = vsel %vm5856, %v5732, %v5888
        %v5921 = vsel %vm5857, %v5737, %v5889
        %v5922 = vsel %vm5858, %v5740, %v5890
        %v5923 = vsel %vm5859, %v5745, %v5891
        %v5924 = vsel %vm5860, %v5748, %v5892
        %v5925 = vsel %vm5861, %v5753, %v5893
        %v5926 = vsel %vm5862, %v5756, %v5894
        %v5927 = vsel %vm5863, %v5761, %v5895
        %v5928 = vsel %vm5864, %v5764, %v5896
        %v5929 = vsel %vm5865, %v5769, %v5897
        %v5930 = vsel %vm5866, %v5772, %v5898
        %v5931 = vsel %vm5867, %v5777, %v5899
        %v5932 = vsel %vm5868, %v5780, %v5900
        %v5933 = vsel %vm5869, %v5785, %v5901
        %v5934 = vsel %vm5870, %v5788, %v5902
        %v5935 = vsel %vm5871, %v5793, %v5903
        %v5936 = vsel %vm5872, %v5796, %v5904
        %v5937 = vsel %vm5873, %v5801, %v5905
        %v5938 = vsel %vm5874, %v5804, %v5906
        %v5939 = vsel %vm5875, %v5809, %v5907
        %v5940 = vsel %vm5876, %v5812, %v5908
        %v5941 = vsel %vm5877, %v5817, %v5909
        %v5942 = vsel %vm5878, %v5820, %v5910
        %v5943 = vsel %vm5879, %v5825, %v5911
        %v5944 = vsel %vm5880, %v5828, %v5912
        %v5945 = vsel %vm5881, %v5833, %v5913
        %v5946 = vsel %vm5882, %v5836, %v5914
        %v5947 = vsel %vm5883, %v5841, %v5915
        %v5948 = vsel %vm5884, %v5844, %v5916
        %v5949 = vsel %vm5885, %v5849, %v5917
        %v5950 = vsel %vm5886, %v5852, %v5918
        %v5951 = vmul.f32 %v5919, 3.0
        %v5952 = vmul.f32 %v5920, 3.0
        %v5953 = vmul.f32 %v5923, 3.0
        %v5954 = vmul.f32 %v5924, 3.0
        %v5955 = vmul.f32 %v5927, 3.0
        %v5956 = vmul.f32 %v5928, 3.0
        %v5957 = vmul.f32 %v5931, 3.0
        %v5958 = vmul.f32 %v5932, 3.0
        %v5959 = vmul.f32 %v5935, 3.0
        %v5960 = vmul.f32 %v5936, 3.0
        %v5961 = vmul.f32 %v5939, 3.0
        %v5962 = vmul.f32 %v5940, 3.0
        %v5963 = vmul.f32 %v5943, 3.0
        %v5964 = vmul.f32 %v5944, 3.0
        %v5965 = vmul.f32 %v5947, 3.0
        %v5966 = vmul.f32 %v5948, 3.0
        %v5967 = vadd.f32 %v5921, %v5951
        %v5968 = vadd.f32 %v5922, %v5952
        %v5969 = vadd.f32 %v5921, %v5953
        %v5970 = vadd.f32 %v5922, %v5954
        %v5971 = vadd.f32 %v5925, %v5955
        %v5972 = vadd.f32 %v5926, %v5956
        %v5973 = vadd.f32 %v5929, %v5957
        %v5974 = vadd.f32 %v5930, %v5958
        %v5975 = vadd.f32 %v5933, %v5959
        %v5976 = vadd.f32 %v5934, %v5960
        %v5977 = vadd.f32 %v5937, %v5961
        %v5978 = vadd.f32 %v5938, %v5962
        %v5979 = vadd.f32 %v5941, %v5963
        %v5980 = vadd.f32 %v5942, %v5964
        %v5981 = vadd.f32 %v5945, %v5965
        %v5982 = vadd.f32 %v5946, %v5966
        %v5983 = vmul.f32 %v5921, 3.0
        %v5984 = vmul.f32 %v5922, 3.0
        %v5985 = vmul.f32 %v5925, 3.0
        %v5986 = vmul.f32 %v5926, 3.0
        %v5987 = vmul.f32 %v5929, 3.0
        %v5988 = vmul.f32 %v5930, 3.0
        %v5989 = vmul.f32 %v5933, 3.0
        %v5990 = vmul.f32 %v5934, 3.0
        %v5991 = vmul.f32 %v5937, 3.0
        %v5992 = vmul.f32 %v5938, 3.0
        %v5993 = vmul.f32 %v5941, 3.0
        %v5994 = vmul.f32 %v5942, 3.0
        %v5995 = vmul.f32 %v5945, 3.0
        %v5996 = vmul.f32 %v5946, 3.0
        %v5997 = vmul.f32 %v5949, 3.0
        %v5998 = vmul.f32 %v5950, 3.0
        %v5999 = vadd.f32 %v5967, %v5983
        %v6000 = vadd.f32 %v5968, %v5984
        %v6001 = vadd.f32 %v5969, %v5985
        %v6002 = vadd.f32 %v5970, %v5986
        %v6003 = vadd.f32 %v5971, %v5987
        %v6004 = vadd.f32 %v5972, %v5988
        %v6005 = vadd.f32 %v5973, %v5989
        %v6006 = vadd.f32 %v5974, %v5990
        %v6007 = vadd.f32 %v5975, %v5991
        %v6008 = vadd.f32 %v5976, %v5992
        %v6009 = vadd.f32 %v5977, %v5993
        %v6010 = vadd.f32 %v5978, %v5994
        %v6011 = vadd.f32 %v5979, %v5995
        %v6012 = vadd.f32 %v5980, %v5996
        %v6013 = vadd.f32 %v5981, %v5997
        %v6014 = vadd.f32 %v5982, %v5998
        %v6015 = vadd.f32 %v5999, %v5923
        %v6016 = vadd.f32 %v6000, %v5924
        %v6017 = vadd.f32 %v6001, %v5927
        %v6018 = vadd.f32 %v6002, %v5928
        %v6019 = vadd.f32 %v6003, %v5931
        %v6020 = vadd.f32 %v6004, %v5932
        %v6021 = vadd.f32 %v6005, %v5935
        %v6022 = vadd.f32 %v6006, %v5936
        %v6023 = vadd.f32 %v6007, %v5939
        %v6024 = vadd.f32 %v6008, %v5940
        %v6025 = vadd.f32 %v6009, %v5943
        %v6026 = vadd.f32 %v6010, %v5944
        %v6027 = vadd.f32 %v6011, %v5947
        %v6028 = vadd.f32 %v6012, %v5948
        %v6029 = vadd.f32 %v6013, %v5947
        %v6030 = vadd.f32 %v6014, %v5948
        %6031 = vst.msk [vmem:[#allocation3 + $0x1] sm:$0xff] %vm2601, %v6015
        %6032 = vst.msk [vmem:[#allocation3 + $0x9] sm:$0xff] %vm2601, %v6016
        %6033 = vst.msk [vmem:[#allocation3 + $0x19] sm:$0xff] %vm2601, %v6017
        %6034 = vst.msk [vmem:[#allocation3 + $0x21] sm:$0xff] %vm2601, %v6018
        %6035 = vst.msk [vmem:[#allocation3 + $0x31] sm:$0xff] %vm2601, %v6019
        %6036 = vst.msk [vmem:[#allocation3 + $0x39] sm:$0xff] %vm2601, %v6020
        %6037 = vst.msk [vmem:[#allocation3 + $0x49] sm:$0xff] %vm2601, %v6021
        %6038 = vst.msk [vmem:[#allocation3 + $0x51] sm:$0xff] %vm2601, %v6022
        %6039 = vst.msk [vmem:[#allocation3 + $0x61] sm:$0xff] %vm2601, %v6023
        %6040 = vst.msk [vmem:[#allocation3 + $0x69] sm:$0xff] %vm2601, %v6024
        %6041 = vst.msk [vmem:[#allocation3 + $0x79] sm:$0xff] %vm2601, %v6025
        %6042 = vst.msk [vmem:[#allocation3 + $0x81] sm:$0xff] %vm2601, %v6026
        %6043 = vst.msk [vmem:[#allocation3 + $0x91] sm:$0xff] %vm2601, %v6027
        %6044 = vst.msk [vmem:[#allocation3 + $0x99] sm:$0xff] %vm2601, %v6028
        %6045 = vst.msk [vmem:[#allocation3 + $0xa9] sm:$0xff] %vm2601, %v6029
        %6046 = vst.msk [vmem:[#allocation3 + $0xb1] sm:$0xff] %vm2601, %v6030
        %vm6047 = vcmask 58369
        %6048 = vst.msk [vmem:[#allocation3 - $0x1] sm:$0x2] %vm6047, %v6015
        %6049 = vst.msk [vmem:[#allocation3 + $0x17] sm:$0x2] %vm6047, %v6017
        %6050 = vst.msk [vmem:[#allocation3 + $0x2f] sm:$0x2] %vm6047, %v6019
        %6051 = vst.msk [vmem:[#allocation3 + $0x47] sm:$0x2] %vm6047, %v6021
        %6052 = vst.msk [vmem:[#allocation3 + $0x5f] sm:$0x2] %vm6047, %v6023
        %6053 = vst.msk [vmem:[#allocation3 + $0x77] sm:$0x2] %vm6047, %v6025
        %6054 = vst.msk [vmem:[#allocation3 + $0x8f] sm:$0x2] %vm6047, %v6027
        %6055 = vst.msk [vmem:[#allocation3 + $0xa7] sm:$0x2] %vm6047, %v6029
        %vm6056 = vcmask 63494
        %6057 = vst.msk [vmem:[#allocation3 + $0xb] sm:$0x40] %vm6056, %v6016
        %6058 = vst.msk [vmem:[#allocation3 + $0x23] sm:$0x40] %vm6056, %v6018
        %6059 = vst.msk [vmem:[#allocation3 + $0x3b] sm:$0x40] %vm6056, %v6020
        %6060 = vst.msk [vmem:[#allocation3 + $0x53] sm:$0x40] %vm6056, %v6022
        %6061 = vst.msk [vmem:[#allocation3 + $0x6b] sm:$0x40] %vm6056, %v6024
        %6062 = vst.msk [vmem:[#allocation3 + $0x83] sm:$0x40] %vm6056, %v6026
        %6063 = vst.msk [vmem:[#allocation3 + $0x9b] sm:$0x40] %vm6056, %v6028
        %6064 = vst.msk [vmem:[#allocation3 + $0xb3] sm:$0x40] %vm6056, %v6030
        %v6065 = vld [vmem:[#allocation3] ss:$2 sm:$0xff]
        %s6066 = scalar_lea.vmem [#allocation3], 24
        %v6067 = vld [vmem:[%s6066] ss:$2 sm:$0xff]
        %s6068 = scalar_lea.vmem [#allocation3], 48
        %v6069 = vld [vmem:[%s6068] ss:$2 sm:$0xff]
        %s6070 = scalar_lea.vmem [#allocation3], 72
        %v6071 = vld [vmem:[%s6070] ss:$2 sm:$0xff]
        %s6072 = scalar_lea.vmem [#allocation3], 96
        %v6073 = vld [vmem:[%s6072] ss:$2 sm:$0xff]
        %s6074 = scalar_lea.vmem [#allocation3], 120
        %v6075 = vld [vmem:[%s6074] ss:$2 sm:$0xff]
        %s6076 = scalar_lea.vmem [#allocation3], 144
        %v6077 = vld [vmem:[%s6076] ss:$2 sm:$0xff]
        %s6078 = scalar_lea.vmem [#allocation3], 168
        %v6079 = vld [vmem:[%s6078] ss:$2 sm:$0xff]
        %s6080 = scalar_lea.vmem [#allocation3], 1
        %v6081 = vld [vmem:[%s6080] ss:$2 sm:$0xff]
        %s6082 = scalar_lea.vmem [#allocation3], 25
        %v6083 = vld [vmem:[%s6082] ss:$2 sm:$0xff]
        %s6084 = scalar_lea.vmem [#allocation3], 49
        %v6085 = vld [vmem:[%s6084] ss:$2 sm:$0xff]
        %s6086 = scalar_lea.vmem [#allocation3], 73
        %v6087 = vld [vmem:[%s6086] ss:$2 sm:$0xff]
        %s6088 = scalar_lea.vmem [#allocation3], 97
        %v6089 = vld [vmem:[%s6088] ss:$2 sm:$0xff]
        %s6090 = scalar_lea.vmem [#allocation3], 121
        %v6091 = vld [vmem:[%s6090] ss:$2 sm:$0xff]
        %s6092 = scalar_lea.vmem [#allocation3], 145
        %v6093 = vld [vmem:[%s6092] ss:$2 sm:$0xff]
        %s6094 = scalar_lea.vmem [#allocation3], 169
        %v6095 = vld [vmem:[%s6094] ss:$2 sm:$0xff]
        %s6096 = scalar_lea.vmem [#allocation3], 2
        %v6097 = vld [vmem:[%s6096] ss:$2 sm:$0xff]
        %s6098 = scalar_lea.vmem [#allocation3], 26
        %v6099 = vld [vmem:[%s6098] ss:$2 sm:$0xff]
        %s6100 = scalar_lea.vmem [#allocation3], 50
        %v6101 = vld [vmem:[%s6100] ss:$2 sm:$0xff]
        %s6102 = scalar_lea.vmem [#allocation3], 74
        %v6103 = vld [vmem:[%s6102] ss:$2 sm:$0xff]
        %s6104 = scalar_lea.vmem [#allocation3], 98
        %v6105 = vld [vmem:[%s6104] ss:$2 sm:$0xff]
        %s6106 = scalar_lea.vmem [#allocation3], 122
        %v6107 = vld [vmem:[%s6106] ss:$2 sm:$0xff]
        %s6108 = scalar_lea.vmem [#allocation3], 146
        %v6109 = vld [vmem:[%s6108] ss:$2 sm:$0xff]
        %s6110 = scalar_lea.vmem [#allocation3], 170
        %v6111 = vld [vmem:[%s6110] ss:$2 sm:$0xff]
        %s6112 = scalar_lea.vmem [#allocation3], 3
        %v6113 = vld [vmem:[%s6112] ss:$2 sm:$0xff]
        %s6114 = scalar_lea.vmem [#allocation3], 27
        %v6115 = vld [vmem:[%s6114] ss:$2 sm:$0xff]
        %s6116 = scalar_lea.vmem [#allocation3], 51
        %v6117 = vld [vmem:[%s6116] ss:$2 sm:$0xff]
        %s6118 = scalar_lea.vmem [#allocation3], 75
        %v6119 = vld [vmem:[%s6118] ss:$2 sm:$0xff]
        %s6120 = scalar_lea.vmem [#allocation3], 99
        %v6121 = vld [vmem:[%s6120] ss:$2 sm:$0xff]
        %s6122 = scalar_lea.vmem [#allocation3], 123
        %v6123 = vld [vmem:[%s6122] ss:$2 sm:$0xff]
        %s6124 = scalar_lea.vmem [#allocation3], 147
        %v6125 = vld [vmem:[%s6124] ss:$2 sm:$0xff]
        %s6126 = scalar_lea.vmem [#allocation3], 171
        %v6127 = vld [vmem:[%s6126] ss:$2 sm:$0xff]
        %v6128 = vmul.f32 %v6081, 3.0
        %v6129 = vmul.f32 %v6083, 3.0
        %v6130 = vmul.f32 %v6085, 3.0
        %v6131 = vmul.f32 %v6087, 3.0
        %v6132 = vmul.f32 %v6089, 3.0
        %v6133 = vmul.f32 %v6091, 3.0
        %v6134 = vmul.f32 %v6093, 3.0
        %v6135 = vmul.f32 %v6095, 3.0
        %v6136 = vadd.f32 %v6065, %v6128
        %v6137 = vadd.f32 %v6067, %v6129
        %v6138 = vadd.f32 %v6069, %v6130
        %v6139 = vadd.f32 %v6071, %v6131
        %v6140 = vadd.f32 %v6073, %v6132
        %v6141 = vadd.f32 %v6075, %v6133
        %v6142 = vadd.f32 %v6077, %v6134
        %v6143 = vadd.f32 %v6079, %v6135
        %v6144 = vmul.f32 %v6097, 3.0
        %v6145 = vmul.f32 %v6099, 3.0
        %v6146 = vmul.f32 %v6101, 3.0
        %v6147 = vmul.f32 %v6103, 3.0
        %v6148 = vmul.f32 %v6105, 3.0
        %v6149 = vmul.f32 %v6107, 3.0
        %v6150 = vmul.f32 %v6109, 3.0
        %v6151 = vmul.f32 %v6111, 3.0
        %v6152 = vadd.f32 %v6136, %v6144
        %v6153 = vadd.f32 %v6137, %v6145
        %v6154 = vadd.f32 %v6138, %v6146
        %v6155 = vadd.f32 %v6139, %v6147
        %v6156 = vadd.f32 %v6140, %v6148
        %v6157 = vadd.f32 %v6141, %v6149
        %v6158 = vadd.f32 %v6142, %v6150
        %v6159 = vadd.f32 %v6143, %v6151
        %v6160 = vadd.f32 %v6152, %v6113
        %v6161 = vadd.f32 %v6153, %v6115
        %v6162 = vadd.f32 %v6154, %v6117
        %v6163 = vadd.f32 %v6155, %v6119
        %v6164 = vadd.f32 %v6156, %v6121
        %v6165 = vadd.f32 %v6157, %v6123
        %v6166 = vadd.f32 %v6158, %v6125
        %v6167 = vadd.f32 %v6159, %v6127
        %v6168 = vmul.f32 %v6160, 0.015625
        %v6169 = vmul.f32 %v6161, 0.015625
        %v6170 = vmul.f32 %v6162, 0.015625
        %v6171 = vmul.f32 %v6163, 0.015625
        %v6172 = vmul.f32 %v6164, 0.015625
        %v6173 = vmul.f32 %v6165, 0.015625
        %v6174 = vmul.f32 %v6166, 0.015625
        %v6175 = vmul.f32 %v6167, 0.015625
        %v6176 = vld [vmem:[%s5] sm:$0x3]
        %v6177 = vld [vmem:[%s6] sm:$0x1]
        %v6179 = vlaneseq
        %v6180 = vshrl.u32 %v6179, 7
        %v6181 = vsub.s32 0, %v6180
        %v6182 = vrot.slane %v6177, %v6181
        %v6216 = vunpack.c.l.b16 %v400
        %v6217 = vunpack.c.l.b16 %v401
        %v6218 = vunpack.c.l.b16 %v402
        %v6219 = vunpack.c.l.b16 %v403
        %v6220 = vunpack.c.l.b16 %v404
        %v6221 = vunpack.c.l.b16 %v405
        %v6222 = vunpack.c.l.b16 %v406
        %v6223 = vunpack.c.l.b16 %v407
        %v6224 = vunpack.c.l.b16 %v408
        %v6225 = vunpack.c.l.b16 %v409
        %v6226 = vunpack.c.l.b16 %v410
        %v6227 = vunpack.c.l.b16 %v411
        %v6228 = vunpack.c.l.b16 %v412
        %v6229 = vunpack.c.l.b16 %v413
        %v6230 = vunpack.c.l.b16 %v414
        %v6231 = vunpack.c.l.b16 %v415
        %v6232 = vunpack.c.l.b16 %v416
        %v6233 = vunpack.c.l.b16 %v417
        %v6234 = vunpack.c.l.b16 %v418
        %v6235 = vunpack.c.l.b16 %v419
        %v6236 = vunpack.c.l.b16 %v420
        %v6237 = vunpack.c.l.b16 %v421
        %v6238 = vunpack.c.l.b16 %v422
        %v6239 = vunpack.c.l.b16 %v423
        %v6240 = vunpack.c.l.b16 %v424
        %v6241 = vunpack.c.l.b16 %v425
        %v6242 = vunpack.c.l.b16 %v426
        %v6243 = vunpack.c.l.b16 %v427
        %v6244 = vunpack.c.l.b16 %v428
        %v6245 = vunpack.c.l.b16 %v429
        %v6246 = vunpack.c.l.b16 %v430
        %v6247 = vunpack.c.l.b16 %v431
        %v6248 = vpack.c.b16 %v6217, %v6216
        %v6249 = vpack.c.b16 %v6219, %v6218
        %v6250 = vpack.c.b16 %v6221, %v6220
        %v6251 = vpack.c.b16 %v6223, %v6222
        %v6252 = vpack.c.b16 %v6225, %v6224
        %v6253 = vpack.c.b16 %v6227, %v6226
        %v6254 = vpack.c.b16 %v6229, %v6228
        %v6255 = vpack.c.b16 %v6231, %v6230
        %v6256 = vpack.c.b16 %v6233, %v6232
        %v6257 = vpack.c.b16 %v6235, %v6234
        %v6258 = vpack.c.b16 %v6237, %v6236
        %v6259 = vpack.c.b16 %v6239, %v6238
        %v6260 = vpack.c.b16 %v6241, %v6240
        %v6261 = vpack.c.b16 %v6243, %v6242
        %v6262 = vpack.c.b16 %v6245, %v6244
        %v6263 = vpack.c.b16 %v6247, %v6246
        %v6265 = vsel %vm2568, %v6248, 0
        %v6268 = vsel %vm2568, %v6249, 0
        %v6271 = vsel %vm2568, %v6250, 0
        %v6274 = vsel %vm2568, %v6251, 0
        %v6277 = vsel %vm2568, %v6252, 0
        %v6280 = vsel %vm2568, %v6253, 0
        %v6283 = vsel %vm2568, %v6254, 0
        %v6286 = vsel %vm2568, %v6255, 0
        %v6289 = vsel %vm2568, %v6256, 0
        %v6292 = vsel %vm2568, %v6257, 0
        %v6295 = vsel %vm2568, %v6258, 0
        %v6298 = vsel %vm2568, %v6259, 0
        %v6301 = vsel %vm2568, %v6260, 0
        %v6304 = vsel %vm2568, %v6261, 0
        %v6307 = vsel %vm2568, %v6262, 0
        %v6310 = vsel %vm2568, %v6263, 0
        %v6313 = vsel %vm2892, %v6176, 0
        %6315 = vmatprep.subr.bf16.mxu0 0
        %6316 = vmatpush1.bf16.msra.mxu0 0
        %6317 = vmatprep.subr.bf16.mxu0 0
        %6318 = vmatpush1.bf16.msra.mxu0 0
        %6319 = vmatprep.subr.bf16.mxu0 0
        %6320 = vmatpush1.bf16.msra.mxu0 0
        %6321 = vmatprep.subr.bf16.mxu0 0
        %6322 = vmatpush1.bf16.msra.mxu0 0
        %6323 = vmatprep.subr.bf16.mxu0 0
        %6324 = vmatpush1.bf16.msra.mxu0 0
        %6325 = vmatprep.subr.bf16.mxu0 0
        %6326 = vmatpush1.bf16.msra.mxu0 0
        %6327 = vmatprep.subr.bf16.mxu0 0
        %6328 = vmatpush1.bf16.msra.mxu0 0
        %6329 = vmatprep.subr.bf16.mxu0 0
        %6330 = vmatpush1.bf16.msra.mxu0 %v6313
        %6331 = vmatprep.subr.bf16.mxu0 0
        %6332 = vmatpush2.bf16.msra.mxu0 0
        %6333 = vmatprep.subr.bf16.mxu0 0
        %6334 = vmatpush2.bf16.msra.mxu0 0
        %6335 = vmatprep.subr.bf16.mxu0 0
        %6336 = vmatpush2.bf16.msra.mxu0 0
        %6337 = vmatprep.subr.bf16.mxu0 0
        %6338 = vmatpush2.bf16.msra.mxu0 0
        %6339 = vmatprep.subr.bf16.mxu0 0
        %6340 = vmatpush2.bf16.msra.mxu0 0
        %6341 = vmatprep.subr.bf16.mxu0 0
        %6342 = vmatpush2.bf16.msra.mxu0 0
        %6343 = vmatprep.subr.bf16.mxu0 0
        %6344 = vmatpush2.bf16.msra.mxu0 0
        %6345 = vmatprep.subr.bf16.mxu0 0
        %6346 = vmatpush2.bf16.msra.mxu0 0
        %6347 = vmatprep.mubr.bf16.mxu0 0
        %6348 = vmatmul.mubr.bf16.gmra.mxu0 %v6265
        %v6349 = vpop.f32.mrf.mxu0
        %v6350 = vadd.f32 %v6182, %v6349
        %v6351 = vpop.f32.mrf.mxu0
        %v6352 = vpop.f32.mrf.mxu0
        %v6353 = vadd.f32 %v6182, %v6352
        %v6354 = vpop.f32.mrf.mxu0
        %6355 = vmatprep.mubr.bf16.mxu0 0
        %6356 = vmatmul.mubr.bf16.gmra.mxu0 %v6268
        %v6357 = vpop.f32.mrf.mxu0
        %v6358 = vadd.f32 %v6182, %v6357
        %v6359 = vpop.f32.mrf.mxu0
        %v6360 = vpop.f32.mrf.mxu0
        %v6361 = vadd.f32 %v6182, %v6360
        %v6362 = vpop.f32.mrf.mxu0
        %6363 = vmatprep.mubr.bf16.mxu0 0
        %6364 = vmatmul.mubr.bf16.gmra.mxu0 %v6271
        %v6365 = vpop.f32.mrf.mxu0
        %v6366 = vadd.f32 %v6182, %v6365
        %v6367 = vpop.f32.mrf.mxu0
        %v6368 = vpop.f32.mrf.mxu0
        %v6369 = vadd.f32 %v6182, %v6368
        %v6370 = vpop.f32.mrf.mxu0
        %6371 = vmatprep.mubr.bf16.mxu0 0
        %6372 = vmatmul.mubr.bf16.gmra.mxu0 %v6274
        %v6373 = vpop.f32.mrf.mxu0
        %v6374 = vadd.f32 %v6182, %v6373
        %v6375 = vpop.f32.mrf.mxu0
        %v6376 = vpop.f32.mrf.mxu0
        %v6377 = vadd.f32 %v6182, %v6376
        %v6378 = vpop.f32.mrf.mxu0
        %6379 = vmatprep.mubr.bf16.mxu0 0
        %6380 = vmatmul.mubr.bf16.gmra.mxu0 %v6277
        %v6381 = vpop.f32.mrf.mxu0
        %v6382 = vadd.f32 %v6182, %v6381
        %v6383 = vpop.f32.mrf.mxu0
        %v6384 = vpop.f32.mrf.mxu0
        %v6385 = vadd.f32 %v6182, %v6384
        %v6386 = vpop.f32.mrf.mxu0
        %6387 = vmatprep.mubr.bf16.mxu0 0
        %6388 = vmatmul.mubr.bf16.gmra.mxu0 %v6280
        %v6389 = vpop.f32.mrf.mxu0
        %v6390 = vadd.f32 %v6182, %v6389
        %v6391 = vpop.f32.mrf.mxu0
        %v6392 = vpop.f32.mrf.mxu0
        %v6393 = vadd.f32 %v6182, %v6392
        %v6394 = vpop.f32.mrf.mxu0
        %6395 = vmatprep.mubr.bf16.mxu0 0
        %6396 = vmatmul.mubr.bf16.gmra.mxu0 %v6283
        %v6397 = vpop.f32.mrf.mxu0
        %v6398 = vadd.f32 %v6182, %v6397
        %v6399 = vpop.f32.mrf.mxu0
        %v6400 = vpop.f32.mrf.mxu0
        %v6401 = vadd.f32 %v6182, %v6400
        %v6402 = vpop.f32.mrf.mxu0
        %6403 = vmatprep.mubr.bf16.mxu0 0
        %6404 = vmatmul.mubr.bf16.gmra.mxu0 %v6286
        %v6405 = vpop.f32.mrf.mxu0
        %v6406 = vadd.f32 %v6182, %v6405
        %v6407 = vpop.f32.mrf.mxu0
        %v6408 = vpop.f32.mrf.mxu0
        %v6409 = vadd.f32 %v6182, %v6408
        %v6410 = vpop.f32.mrf.mxu0
        %6411 = vmatprep.mubr.bf16.mxu0 0
        %6412 = vmatmul.mubr.bf16.gmra.mxu0 %v6289
        %v6413 = vpop.f32.mrf.mxu0
        %v6414 = vadd.f32 %v6182, %v6413
        %v6415 = vpop.f32.mrf.mxu0
        %v6416 = vpop.f32.mrf.mxu0
        %v6417 = vadd.f32 %v6182, %v6416
        %v6418 = vpop.f32.mrf.mxu0
        %6419 = vmatprep.mubr.bf16.mxu0 0
        %6420 = vmatmul.mubr.bf16.gmra.mxu0 %v6292
        %v6421 = vpop.f32.mrf.mxu0
        %v6422 = vadd.f32 %v6182, %v6421
        %v6423 = vpop.f32.mrf.mxu0
        %v6424 = vpop.f32.mrf.mxu0
        %v6425 = vadd.f32 %v6182, %v6424
        %v6426 = vpop.f32.mrf.mxu0
        %6427 = vmatprep.mubr.bf16.mxu0 0
        %6428 = vmatmul.mubr.bf16.gmra.mxu0 %v6295
        %v6429 = vpop.f32.mrf.mxu0
        %v6430 = vadd.f32 %v6182, %v6429
        %v6431 = vpop.f32.mrf.mxu0
        %v6432 = vpop.f32.mrf.mxu0
        %v6433 = vadd.f32 %v6182, %v6432
        %v6434 = vpop.f32.mrf.mxu0
        %6435 = vmatprep.mubr.bf16.mxu0 0
        %6436 = vmatmul.mubr.bf16.gmra.mxu0 %v6298
        %v6437 = vpop.f32.mrf.mxu0
        %v6438 = vadd.f32 %v6182, %v6437
        %v6439 = vpop.f32.mrf.mxu0
        %v6440 = vpop.f32.mrf.mxu0
        %v6441 = vadd.f32 %v6182, %v6440
        %v6442 = vpop.f32.mrf.mxu0
        %6443 = vmatprep.mubr.bf16.mxu0 0
        %6444 = vmatmul.mubr.bf16.gmra.mxu0 %v6301
        %v6445 = vpop.f32.mrf.mxu0
        %v6446 = vadd.f32 %v6182, %v6445
        %v6447 = vpop.f32.mrf.mxu0
        %v6448 = vpop.f32.mrf.mxu0
        %v6449 = vadd.f32 %v6182, %v6448
        %v6450 = vpop.f32.mrf.mxu0
        %6451 = vmatprep.mubr.bf16.mxu0 0
        %6452 = vmatmul.mubr.bf16.gmra.mxu0 %v6304
        %v6453 = vpop.f32.mrf.mxu0
        %v6454 = vadd.f32 %v6182, %v6453
        %v6455 = vpop.f32.mrf.mxu0
        %v6456 = vpop.f32.mrf.mxu0
        %v6457 = vadd.f32 %v6182, %v6456
        %v6458 = vpop.f32.mrf.mxu0
        %6459 = vmatprep.mubr.bf16.mxu0 0
        %6460 = vmatmul.mubr.bf16.gmra.mxu0 %v6307
        %v6461 = vpop.f32.mrf.mxu0
        %v6462 = vadd.f32 %v6182, %v6461
        %v6463 = vpop.f32.mrf.mxu0
        %v6464 = vpop.f32.mrf.mxu0
        %v6465 = vadd.f32 %v6182, %v6464
        %v6466 = vpop.f32.mrf.mxu0
        %6467 = vmatprep.mubr.bf16.mxu0 0
        %6468 = vmatmul.mubr.bf16.gmra.mxu0 %v6310
        %v6469 = vpop.f32.mrf.mxu0
        %v6470 = vadd.f32 %v6182, %v6469
        %v6471 = vpop.f32.mrf.mxu0
        %v6472 = vpop.f32.mrf.mxu0
        %v6473 = vadd.f32 %v6182, %v6472
        %v6474 = vpop.f32.mrf.mxu0
        %6475 = vdwg.mxu0
        %v6476 = vmul.f32 %v6350, 3.0
        %v6477 = vmul.f32 %v6353, 3.0
        %v6478 = vmul.f32 %v6366, 3.0
        %v6479 = vmul.f32 %v6369, 3.0
        %v6480 = vmul.f32 %v6382, 3.0
        %v6481 = vmul.f32 %v6385, 3.0
        %v6482 = vmul.f32 %v6398, 3.0
        %v6483 = vmul.f32 %v6401, 3.0
        %v6484 = vmul.f32 %v6414, 3.0
        %v6485 = vmul.f32 %v6417, 3.0
        %v6486 = vmul.f32 %v6430, 3.0
        %v6487 = vmul.f32 %v6433, 3.0
        %v6488 = vmul.f32 %v6446, 3.0
        %v6489 = vmul.f32 %v6449, 3.0
        %v6490 = vmul.f32 %v6462, 3.0
        %v6491 = vmul.f32 %v6465, 3.0
        %v6492 = vadd.f32 %v6358, %v6476
        %v6493 = vadd.f32 %v6361, %v6477
        %v6494 = vadd.f32 %v6358, %v6478
        %v6495 = vadd.f32 %v6361, %v6479
        %v6496 = vadd.f32 %v6374, %v6480
        %v6497 = vadd.f32 %v6377, %v6481
        %v6498 = vadd.f32 %v6390, %v6482
        %v6499 = vadd.f32 %v6393, %v6483
        %v6500 = vadd.f32 %v6406, %v6484
        %v6501 = vadd.f32 %v6409, %v6485
        %v6502 = vadd.f32 %v6422, %v6486
        %v6503 = vadd.f32 %v6425, %v6487
        %v6504 = vadd.f32 %v6438, %v6488
        %v6505 = vadd.f32 %v6441, %v6489
        %v6506 = vadd.f32 %v6454, %v6490
        %v6507 = vadd.f32 %v6457, %v6491
        %v6508 = vmul.f32 %v6358, 3.0
        %v6509 = vmul.f32 %v6361, 3.0
        %v6510 = vmul.f32 %v6374, 3.0
        %v6511 = vmul.f32 %v6377, 3.0
        %v6512 = vmul.f32 %v6390, 3.0
        %v6513 = vmul.f32 %v6393, 3.0
        %v6514 = vmul.f32 %v6406, 3.0
        %v6515 = vmul.f32 %v6409, 3.0
        %v6516 = vmul.f32 %v6422, 3.0
        %v6517 = vmul.f32 %v6425, 3.0
        %v6518 = vmul.f32 %v6438, 3.0
        %v6519 = vmul.f32 %v6441, 3.0
        %v6520 = vmul.f32 %v6454, 3.0
        %v6521 = vmul.f32 %v6457, 3.0
        %v6522 = vmul.f32 %v6470, 3.0
        %v6523 = vmul.f32 %v6473, 3.0
        %v6524 = vadd.f32 %v6492, %v6508
        %v6525 = vadd.f32 %v6493, %v6509
        %v6526 = vadd.f32 %v6494, %v6510
        %v6527 = vadd.f32 %v6495, %v6511
        %v6528 = vadd.f32 %v6496, %v6512
        %v6529 = vadd.f32 %v6497, %v6513
        %v6530 = vadd.f32 %v6498, %v6514
        %v6531 = vadd.f32 %v6499, %v6515
        %v6532 = vadd.f32 %v6500, %v6516
        %v6533 = vadd.f32 %v6501, %v6517
        %v6534 = vadd.f32 %v6502, %v6518
        %v6535 = vadd.f32 %v6503, %v6519
        %v6536 = vadd.f32 %v6504, %v6520
        %v6537 = vadd.f32 %v6505, %v6521
        %v6538 = vadd.f32 %v6506, %v6522
        %v6539 = vadd.f32 %v6507, %v6523
        %v6540 = vadd.f32 %v6524, %v6366
        %v6541 = vadd.f32 %v6525, %v6369
        %v6542 = vadd.f32 %v6526, %v6382
        %v6543 = vadd.f32 %v6527, %v6385
        %v6544 = vadd.f32 %v6528, %v6398
        %v6545 = vadd.f32 %v6529, %v6401
        %v6546 = vadd.f32 %v6530, %v6414
        %v6547 = vadd.f32 %v6531, %v6417
        %v6548 = vadd.f32 %v6532, %v6430
        %v6549 = vadd.f32 %v6533, %v6433
        %v6550 = vadd.f32 %v6534, %v6446
        %v6551 = vadd.f32 %v6535, %v6449
        %v6552 = vadd.f32 %v6536, %v6462
        %v6553 = vadd.f32 %v6537, %v6465
        %v6554 = vadd.f32 %v6538, %v6462
        %v6555 = vadd.f32 %v6539, %v6465
        %6556 = vst.msk [vmem:[#allocation3 + $0x1] sm:$0xff] %vm2601, %v6540
        %6557 = vst.msk [vmem:[#allocation3 + $0x9] sm:$0xff] %vm2601, %v6541
        %6558 = vst.msk [vmem:[#allocation3 + $0x19] sm:$0xff] %vm2601, %v6542
        %6559 = vst.msk [vmem:[#allocation3 + $0x21] sm:$0xff] %vm2601, %v6543
        %6560 = vst.msk [vmem:[#allocation3 + $0x31] sm:$0xff] %vm2601, %v6544
        %6561 = vst.msk [vmem:[#allocation3 + $0x39] sm:$0xff] %vm2601, %v6545
        %6562 = vst.msk [vmem:[#allocation3 + $0x49] sm:$0xff] %vm2601, %v6546
        %6563 = vst.msk [vmem:[#allocation3 + $0x51] sm:$0xff] %vm2601, %v6547
        %6564 = vst.msk [vmem:[#allocation3 + $0x61] sm:$0xff] %vm2601, %v6548
        %6565 = vst.msk [vmem:[#allocation3 + $0x69] sm:$0xff] %vm2601, %v6549
        %6566 = vst.msk [vmem:[#allocation3 + $0x79] sm:$0xff] %vm2601, %v6550
        %6567 = vst.msk [vmem:[#allocation3 + $0x81] sm:$0xff] %vm2601, %v6551
        %6568 = vst.msk [vmem:[#allocation3 + $0x91] sm:$0xff] %vm2601, %v6552
        %6569 = vst.msk [vmem:[#allocation3 + $0x99] sm:$0xff] %vm2601, %v6553
        %6570 = vst.msk [vmem:[#allocation3 + $0xa9] sm:$0xff] %vm2601, %v6554
        %6571 = vst.msk [vmem:[#allocation3 + $0xb1] sm:$0xff] %vm2601, %v6555
        %6572 = vst.msk [vmem:[#allocation3 - $0x1] sm:$0x2] %vm6047, %v6540
        %6573 = vst.msk [vmem:[#allocation3 + $0x17] sm:$0x2] %vm6047, %v6542
        %6574 = vst.msk [vmem:[#allocation3 + $0x2f] sm:$0x2] %vm6047, %v6544
        %6575 = vst.msk [vmem:[#allocation3 + $0x47] sm:$0x2] %vm6047, %v6546
        %6576 = vst.msk [vmem:[#allocation3 + $0x5f] sm:$0x2] %vm6047, %v6548
        %6577 = vst.msk [vmem:[#allocation3 + $0x77] sm:$0x2] %vm6047, %v6550
        %6578 = vst.msk [vmem:[#allocation3 + $0x8f] sm:$0x2] %vm6047, %v6552
        %6579 = vst.msk [vmem:[#allocation3 + $0xa7] sm:$0x2] %vm6047, %v6554
        %6580 = vst.msk [vmem:[#allocation3 + $0xb] sm:$0x40] %vm6056, %v6541
        %6581 = vst.msk [vmem:[#allocation3 + $0x23] sm:$0x40] %vm6056, %v6543
        %6582 = vst.msk [vmem:[#allocation3 + $0x3b] sm:$0x40] %vm6056, %v6545
        %6583 = vst.msk [vmem:[#allocation3 + $0x53] sm:$0x40] %vm6056, %v6547
        %6584 = vst.msk [vmem:[#allocation3 + $0x6b] sm:$0x40] %vm6056, %v6549
        %6585 = vst.msk [vmem:[#allocation3 + $0x83] sm:$0x40] %vm6056, %v6551
        %6586 = vst.msk [vmem:[#allocation3 + $0x9b] sm:$0x40] %vm6056, %v6553
        %6587 = vst.msk [vmem:[#allocation3 + $0xb3] sm:$0x40] %vm6056, %v6555
        %v6588 = vld [vmem:[#allocation3] ss:$2 sm:$0xff]
        %v6589 = vld [vmem:[%s6066] ss:$2 sm:$0xff]
        %v6590 = vld [vmem:[%s6068] ss:$2 sm:$0xff]
        %v6591 = vld [vmem:[%s6070] ss:$2 sm:$0xff]
        %v6592 = vld [vmem:[%s6072] ss:$2 sm:$0xff]
        %v6593 = vld [vmem:[%s6074] ss:$2 sm:$0xff]
        %v6594 = vld [vmem:[%s6076] ss:$2 sm:$0xff]
        %v6595 = vld [vmem:[%s6078] ss:$2 sm:$0xff]
        %v6596 = vld [vmem:[%s6080] ss:$2 sm:$0xff]
        %v6597 = vld [vmem:[%s6082] ss:$2 sm:$0xff]
        %v6598 = vld [vmem:[%s6084] ss:$2 sm:$0xff]
        %v6599 = vld [vmem:[%s6086] ss:$2 sm:$0xff]
        %v6600 = vld [vmem:[%s6088] ss:$2 sm:$0xff]
        %v6601 = vld [vmem:[%s6090] ss:$2 sm:$0xff]
        %v6602 = vld [vmem:[%s6092] ss:$2 sm:$0xff]
        %v6603 = vld [vmem:[%s6094] ss:$2 sm:$0xff]
        %v6604 = vld [vmem:[%s6096] ss:$2 sm:$0xff]
        %v6605 = vld [vmem:[%s6098] ss:$2 sm:$0xff]
        %v6606 = vld [vmem:[%s6100] ss:$2 sm:$0xff]
        %v6607 = vld [vmem:[%s6102] ss:$2 sm:$0xff]
        %v6608 = vld [vmem:[%s6104] ss:$2 sm:$0xff]
        %v6609 = vld [vmem:[%s6106] ss:$2 sm:$0xff]
        %v6610 = vld [vmem:[%s6108] ss:$2 sm:$0xff]
        %v6611 = vld [vmem:[%s6110] ss:$2 sm:$0xff]
        %v6612 = vld [vmem:[%s6112] ss:$2 sm:$0xff]
        %v6613 = vld [vmem:[%s6114] ss:$2 sm:$0xff]
        %v6614 = vld [vmem:[%s6116] ss:$2 sm:$0xff]
        %v6615 = vld [vmem:[%s6118] ss:$2 sm:$0xff]
        %v6616 = vld [vmem:[%s6120] ss:$2 sm:$0xff]
        %v6617 = vld [vmem:[%s6122] ss:$2 sm:$0xff]
        %v6618 = vld [vmem:[%s6124] ss:$2 sm:$0xff]
        %v6619 = vld [vmem:[%s6126] ss:$2 sm:$0xff]
        %v6620 = vmul.f32 %v6596, 3.0
        %v6621 = vmul.f32 %v6597, 3.0
        %v6622 = vmul.f32 %v6598, 3.0
        %v6623 = vmul.f32 %v6599, 3.0
        %v6624 = vmul.f32 %v6600, 3.0
        %v6625 = vmul.f32 %v6601, 3.0
        %v6626 = vmul.f32 %v6602, 3.0
        %v6627 = vmul.f32 %v6603, 3.0
        %v6628 = vadd.f32 %v6588, %v6620
        %v6629 = vadd.f32 %v6589, %v6621
        %v6630 = vadd.f32 %v6590, %v6622
        %v6631 = vadd.f32 %v6591, %v6623
        %v6632 = vadd.f32 %v6592, %v6624
        %v6633 = vadd.f32 %v6593, %v6625
        %v6634 = vadd.f32 %v6594, %v6626
        %v6635 = vadd.f32 %v6595, %v6627
        %v6636 = vmul.f32 %v6604, 3.0
        %v6637 = vmul.f32 %v6605, 3.0
        %v6638 = vmul.f32 %v6606, 3.0
        %v6639 = vmul.f32 %v6607, 3.0
        %v6640 = vmul.f32 %v6608, 3.0
        %v6641 = vmul.f32 %v6609, 3.0
        %v6642 = vmul.f32 %v6610, 3.0
        %v6643 = vmul.f32 %v6611, 3.0
        %v6644 = vadd.f32 %v6628, %v6636
        %v6645 = vadd.f32 %v6629, %v6637
        %v6646 = vadd.f32 %v6630, %v6638
        %v6647 = vadd.f32 %v6631, %v6639
        %v6648 = vadd.f32 %v6632, %v6640
        %v6649 = vadd.f32 %v6633, %v6641
        %v6650 = vadd.f32 %v6634, %v6642
        %v6651 = vadd.f32 %v6635, %v6643
        %v6652 = vadd.f32 %v6644, %v6612
        %v6653 = vadd.f32 %v6645, %v6613
        %v6654 = vadd.f32 %v6646, %v6614
        %v6655 = vadd.f32 %v6647, %v6615
        %v6656 = vadd.f32 %v6648, %v6616
        %v6657 = vadd.f32 %v6649, %v6617
        %v6658 = vadd.f32 %v6650, %v6618
        %v6659 = vadd.f32 %v6651, %v6619
        %v6660 = vmul.f32 %v6652, 0.015625
        %v6661 = vmul.f32 %v6653, 0.015625
        %v6662 = vmul.f32 %v6654, 0.015625
        %v6663 = vmul.f32 %v6655, 0.015625
        %v6664 = vmul.f32 %v6656, 0.015625
        %v6665 = vmul.f32 %v6657, 0.015625
        %v6666 = vmul.f32 %v6658, 0.015625
        %v6667 = vmul.f32 %v6659, 0.015625
        %v6668 = vadd.f32 %v6168, %v6660
        %v6669 = vadd.f32 %v6169, %v6661
        %v6670 = vadd.f32 %v6170, %v6662
        %v6671 = vadd.f32 %v6171, %v6663
        %v6672 = vadd.f32 %v6172, %v6664
        %v6673 = vadd.f32 %v6173, %v6665
        %v6674 = vadd.f32 %v6174, %v6666
        %v6675 = vadd.f32 %v6175, %v6667
        %v6676 = vmul.f32 %v6668, 0.70710677
        %v6677 = vmul.f32 %v6669, 0.70710677
        %v6678 = vmul.f32 %v6670, 0.70710677
        %v6679 = vmul.f32 %v6671, 0.70710677
        %v6680 = vmul.f32 %v6672, 0.70710677
        %v6681 = vmul.f32 %v6673, 0.70710677
        %v6682 = vmul.f32 %v6674, 0.70710677
        %v6683 = vmul.f32 %v6675, 0.70710677
        %6684 = vst.msk [vmem:[%s271] sm:$0xff] %vm2601, %v6676
        %6685 = vst.msk [vmem:[%s271 + $0x8] sm:$0xff] %vm2601, %v6677
        %6686 = vst.msk [vmem:[%s271 + $0x10] sm:$0xff] %vm2601, %v6678
        %6687 = vst.msk [vmem:[%s271 + $0x18] sm:$0xff] %vm2601, %v6679
        %6688 = vst.msk [vmem:[%s271 + $0x20] sm:$0xff] %vm2601, %v6680
        %6689 = vst.msk [vmem:[%s271 + $0x28] sm:$0xff] %vm2601, %v6681
        %6690 = vst.msk [vmem:[%s271 + $0x30] sm:$0xff] %vm2601, %v6682
        %6691 = vst.msk [vmem:[%s271 + $0x38] sm:$0xff] %vm2601, %v6683
        %s6692 = sand.u32 %s181, 1
        %s6693 = scalar_lea.sflag [#allocation5], %s6692
        %s6694 = sand.u32 %s181, 1
        %s6695 = smul.addr %s6694, 64
        %s6696 = scalar_lea.vmem [#allocation4], %s6695
        // Predicated region
        $region49: #{tpu_custom_call.1} parent=47 // pred_check
          %p6697 = pneg %p191
        $region50: #{tpu_custom_call.1} parent=47 // pred_check_branch
          %6699 = sbr.rel (%p6697) target = $region52
        $region51: #{tpu_custom_call.1} parent=47 // pred_region
          %s6701 = ssub.s32 1024, 1024
          %6702 = vsyncadd %s6693, %s6701
          %s6703 = smul.addr %s21, 8
          %s6704 = smul.addr %s6703, 128
          %s6705 = scalar_lea.hbm %s7, %s6704
          %s6706 = sshll.u32 %s6696, 4
          %s6707 = int_to_ptr.vmem [resolvable:$true] %s6706
          %6712 = dma.vmem_to_hbm [thread:$0]  %s6707, 1024, %s6705, %s6693, 128, 128, 8
        $region52: #{tpu_custom_call.1} parent=47 // pred_fallthru
          _
      $region48: #{tpu_custom_call.1} parent=5 // pred_fallthru
        _
      %p6713 = scmp.le.s32.totalorder 2, %s16
      // Predicated region
      $region53: #{tpu_custom_call.1} parent=5 // pred_check
        %p6714 = pneg %p6713
      $region54: #{tpu_custom_call.1} parent=5 // pred_check_branch
        %6716 = sbr.rel (%p6714) target = $region56
      $region55: #{tpu_custom_call.1} parent=5 // pred_region
        %s6717 = ssub.s32 %s16, 2
        // Predicated region
        $region57: #{tpu_custom_call.1} parent=55 // pred_check
          %p6718 = pneg %p197
        $region58: #{tpu_custom_call.1} parent=55 // pred_check_branch
          %6720 = sbr.rel (%p6718) target = $region60
        $region59: #{tpu_custom_call.1} parent=55 // pred_region
          %s6721 = sand.u32 %s182, 1
          %s6722 = scalar_lea.sflag [#allocation5], %s6721
          %s6723 = sand.u32 %s182, 1
          %s6724 = smul.addr %s6723, 64
          %s6725 = scalar_lea.vmem [#allocation4], %s6724
          %6726 = dma.done %s6722, 1024
        $region60: #{tpu_custom_call.1} parent=55 // pred_fallthru
          _
      $region56: #{tpu_custom_call.1} parent=5 // pred_fallthru
        _
    $region6: #{tpu_custom_call.1} parent=1 // loop_footer
      %s20 = sadd.s32 1, %s16
    $region7: #{tpu_custom_call.1} parent=1 // loop_footer_branch
      %15 = sbr.rel target = $region3
    $region8: #{tpu_custom_call.1} parent=1 // loop_exit
      _
    %6727 = vsyncpa [#allocation5], 1
    %s6728 = scalar_lea.sflag [#allocation5], 1
    %6729 = vsyncpa %s6728, 1

</llo_original>
